<compile_context>
chip_gen: v6e
topology: v6e:2x2x1
jax: 0.10.0
libtpu: 0.0.40
codegen_flags: <defaults>
</compile_context>

<pallas_src>
import math
import numpy as np
import jax
import jax.numpy as jnp
from jax.experimental import pallas as pl
from jax.experimental.pallas import tpu as pltpu

# ----------------------------- small config consistent with the module --------
B = 2
Q_SHAPE = 8                       # query spatial side  -> L = 64
L = Q_SHAPE * Q_SHAPE
Q_CHANNEL = 32                    # == embed_dim (required by the module's views)
EMBED_DIM = 32
FFN_DIM = 64
HEAD_NUM = 4
HEAD_DIM = EMBED_DIM // HEAD_NUM
KV_CHANNELS = (16, 24)
KV_SHAPE = (4, 16)                # one FPN level smaller than q_shape, one larger


# ----------------------------- attn_idx (mirrors SMART.get_attn_idx) ----------
def make_attn_idx(q_shape, fpn_shape):
    spatial = [s * s for s in fpn_shape]
    level_start = np.concatenate([[0], np.cumsum(spatial)[:-1]]).astype(np.int64)
    tables = []
    for i, s in enumerate(fpn_shape):
        if s <= q_shape:
            # F.interpolate(mode='area') == adaptive_avg_pool2d, then .int() trunc
            base = np.arange(s * s, dtype=np.float32).reshape(s, s)
            out = np.zeros((q_shape, q_shape), dtype=np.float32)
            for oi in range(q_shape):
                i0 = (oi * s) // q_shape
                i1 = -((-(oi + 1) * s) // q_shape)
                for oj in range(q_shape):
                    j0 = (oj * s) // q_shape
                    j1 = -((-(oj + 1) * s) // q_shape)
                    out[oi, oj] = base[i0:i1, j0:j1].mean()
            tables.append(out.astype(np.int64)[..., None] + level_start[i])
        else:
            radio = s // q_shape
            K = radio * radio
            t = np.zeros((q_shape, q_shape, K), dtype=np.int64)
            for qi in range(q_shape):
                for qj in range(q_shape):
                    for m in range(K):
                        r2, r1 = m // radio, m % radio
                        t[qi, qj, m] = (qi * radio + r2) * s + (qj * radio + r1)
            tables.append(t + level_start[i])
    return np.concatenate(tables, axis=-1).reshape(q_shape * q_shape, -1).astype(np.int32)


def make_attn_mask(attn_idx, total_len):
    """Static (L, S) count matrix: mask[l, s] = #times s appears in attn_idx[l].
    ((q@k^T) * mask) @ v is exactly the gather-and-sum of the reference."""
    Lq, K = attn_idx.shape
    m = np.zeros((Lq, total_len), dtype=np.float32)
    np.add.at(m, (np.repeat(np.arange(Lq), K), attn_idx.reshape(-1)), 1.0)
    return m


def _parse_beta(beta):
    if beta is None:
        return 1.0, 1.0
    if isinstance(beta, (tuple, list)):
        assert len(beta) == 2, "value number should no more than two"
        return float(beta[0]), float(beta[1])
    return float(beta), float(beta)


# ----------------------------- fused SMART forward kernel ---------------------
def smart_forward_pallas(tgt, features, params, attn_mask, beta=None):
    """Single fused Pallas kernel.  tgt:(B,L,C)  features[i]:(B,l_i,C_i)
    attn_mask:(L,S) static float mask (S = sum_i l_i)."""
    beta1, beta2 = _parse_beta(beta)
    Bq, Lq, C = tgt.shape
    H, d = HEAD_NUM, C // HEAD_NUM
    n_lvl = len(features)
    lvl_lens = [int(f.shape[1]) for f in features]
    S = int(attn_mask.shape[1])
    Ff = int(params["W1"].shape[0])

    def kernel(*refs):
        idx = 0
        tgt_ref = refs[idx]; idx += 1
        f_refs = refs[idx:idx + n_lvl]; idx += n_lvl
        mask_ref = refs[idx]; idx += 1
        wq_ref, bq_ref = refs[idx], refs[idx + 1]; idx += 2
        wkv_refs = []
        for _ in range(n_lvl):
            wkv_refs.append((refs[idx], refs[idx + 1])); idx += 2
        wp_ref, bp_ref = refs[idx], refs[idx + 1]; idx += 2
        w1_ref, b1_ref = refs[idx], refs[idx + 1]; idx += 2
        w2_ref, b2_ref = refs[idx], refs[idx + 1]; idx += 2
        o_ref = refs[idx]

        x = tgt_ref[...]                                               # (L, C)

        # ---- query projection --------------------------------------------
        q = jnp.dot(x, wq_ref[...], preferred_element_type=jnp.float32) + bq_ref[...]

        # ---- per-level kv projections (k/v stay in VMEM) -------------------
        k_parts, v_parts = [], []
        for i in range(n_lvl):
            kv = (jnp.dot(f_refs[i][...], wkv_refs[i][0][...],
                          preferred_element_type=jnp.float32)
                  + wkv_refs[i][1][...])                               # (l_i, 2C)
            k_parts.append(kv[:, :C])
            v_parts.append(kv[:, C:])
        k_all = jnp.concatenate(k_parts, axis=0)                       # (S, C)
        v_all = jnp.concatenate(v_parts, axis=0)                       # (S, C)

        # ---- masked dense attention == static-index gather attention ------
        m = mask_ref[...]                                              # (L, S)
        head_outs = []
        for h in range(H):
            qh = q[:, h * d:(h + 1) * d]                               # (L, d)
            kh = k_all[:, h * d:(h + 1) * d]                           # (S, d)
            vh = v_all[:, h * d:(h + 1) * d]                           # (S, d)
            s = jax.lax.dot_general(qh, kh, (((1,), (1,)), ((), ())),
                                    preferred_element_type=jnp.float32)  # (L, S)
            head_outs.append(jnp.dot(s * m, vh,
                                     preferred_element_type=jnp.float32))  # (L, d)
        attn_out = jnp.concatenate(head_outs, axis=-1) * beta1         # (L, C)

        # ---- proj + residual (dropout1 is identity) ------------------------
        y = x + jnp.dot(attn_out, wp_ref[...],
                        preferred_element_type=jnp.float32) + bp_ref[...]

        # ---- FFN + residual (dropout2/3 identity, relu activation) ---------
        h1 = jnp.maximum(
            jnp.dot(y, w1_ref[...], preferred_element_type=jnp.float32) + b1_ref[...],
            0.0)
        y2 = jnp.dot(h1, w2_ref[...], preferred_element_type=jnp.float32) + b2_ref[...]
        o_ref[...] = y + beta2 * y2

    # ------------------------ inputs & specs -----------------------------
    inputs = [tgt] + list(features) + [attn_mask,
                                       params["Wq"].T, params["bq"].reshape(1, C)]
    for i in range(n_lvl):
        inputs += [params["Wkv"][i].T, params["bkv"][i].reshape(1, 2 * C)]
    inputs += [params["Wp"].T, params["bp"].reshape(1, C),
               params["W1"].T, params["b1"].reshape(1, Ff),
               params["W2"].T, params["b2"].reshape(1, C)]

    in_specs = [pl.BlockSpec((None, Lq, C), lambda b: (b, 0, 0))]
    for l_i, c_i in zip(lvl_lens, [f.shape[2] for f in features]):
        in_specs.append(pl.BlockSpec((None, int(l_i), int(c_i)), lambda b: (b, 0, 0)))
    in_specs.append(pl.BlockSpec((Lq, S), lambda b: (0, 0)))
    for a in inputs[2 + n_lvl:]:   # all remaining weights / biases: full 2-D blocks
        in_specs.append(pl.BlockSpec(tuple(int(t) for t in a.shape),
                                     lambda b: (0, 0)))

    out = pl.pallas_call(
        kernel,
        out_shape=jax.ShapeDtypeStruct((Bq, Lq, C), jnp.float32),
        grid=(Bq,),
        in_specs=in_specs,
        out_specs=pl.BlockSpec((None, Lq, C), lambda b: (b, 0, 0)),
        compiler_params=pltpu.CompilerParams(dimension_semantics=("parallel",)),
    )(*inputs)
    return out


# ----------------------------- pure-JAX reference for verification ------------
def smart_forward_ref(tgt, features, params, attn_idx, beta=None):
    beta1, beta2 = _parse_beta(beta)
    Bq, Lq, C = tgt.shape
    H, d = HEAD_NUM, C // HEAD_NUM
    hp = jax.lax.Precision.HIGHEST
    shortcut = tgt
    q = (jnp.dot(tgt, params["Wq"].T, precision=hp) + params["bq"]
         ).reshape(Bq, Lq, H, d).transpose(0, 2, 1, 3)
    ks, vs = [], []
    for i, f in enumerate(features):
        l = f.shape[1]
        kv = jnp.dot(f, params["Wkv"][i].T, precision=hp) + params["bkv"][i]
        _k, _v = jnp.split(kv, 2, axis=-1)
        ks.append(_k.reshape(Bq, l, H, d).transpose(0, 2, 1, 3))
        vs.append(_v.reshape(Bq, l, H, d).transpose(0, 2, 1, 3))
    k = jnp.concatenate(ks, axis=2)
    v = jnp.concatenate(vs, axis=2) * beta1
    kg = k[:, :, attn_idx, :]
    vg = v[:, :, attn_idx, :]
    attn = jnp.einsum("bhld,bhlkd->bhlk", q, kg, precision=hp)
    x = jnp.einsum("bhlk,bhlkd->bhld", attn, vg, precision=hp)
    x = x.transpose(0, 2, 1, 3).reshape(Bq, Lq, C)
    x = shortcut + (jnp.dot(x, params["Wp"].T, precision=hp) + params["bp"])
    h = jax.nn.relu(jnp.dot(x, params["W1"].T, precision=hp) + params["b1"])
    y = jnp.dot(h, params["W2"].T, precision=hp) + params["b2"]
    return x + beta2 * y


# ----------------------------- deterministic parameter init -------------------
def init_params(key):
    def lin(k, fan_in, fan_out):
        k1, k2 = jax.random.split(k)
        bound = 1.0 / math.sqrt(fan_in)
        w = jax.random.uniform(k1, (fan_out, fan_in), jnp.float32, -bound, bound)
        b = jax.random.uniform(k2, (fan_out,), jnp.float32, -bound, bound)
        return w, b

    keys = jax.random.split(key, 4 + len(KV_CHANNELS))
    p = {"Wkv": [], "bkv": []}
    p["Wq"], p["bq"] = lin(keys[0], Q_CHANNEL, EMBED_DIM)
    for i, c in enumerate(KV_CHANNELS):
        w, b = lin(keys[1 + i], c, 2 * EMBED_DIM)
        p["Wkv"].append(w)
        p["bkv"].append(b)
    p["Wp"], p["bp"] = lin(keys[1 + len(KV_CHANNELS)], EMBED_DIM, EMBED_DIM)
    p["W1"], p["b1"] = lin(keys[2 + len(KV_CHANNELS)], EMBED_DIM, FFN_DIM)
    p["W2"], p["b2"] = lin(keys[3 + len(KV_CHANNELS)], FFN_DIM, Q_CHANNEL)
    return p


if __name__ == "__main__":
    key = jax.random.PRNGKey(0)
    kp, kt, kf0, kf1 = jax.random.split(key, 4)
    params = init_params(kp)

    tgt = jax.random.normal(kt, (B, L, Q_CHANNEL), jnp.float32)
    features = [
        jax.random.normal(kf0, (B, KV_SHAPE[0] ** 2, KV_CHANNELS[0]), jnp.float32),
        jax.random.normal(kf1, (B, KV_SHAPE[1] ** 2, KV_CHANNELS[1]), jnp.float32),
    ]
    attn_idx_np = make_attn_idx(Q_SHAPE, KV_SHAPE)                 # (L, K) int32
    total_len = sum(s * s for s in KV_SHAPE)
    attn_mask = jnp.asarray(make_attn_mask(attn_idx_np, total_len))  # (L, S) f32
    attn_idx = jnp.asarray(attn_idx_np)

    out = smart_forward_pallas(tgt, features, params, attn_mask, beta=(0.9, 1.1))
    out = jax.block_until_ready(out)

    ref = smart_forward_ref(tgt, features, params, attn_idx, beta=(0.9, 1.1))
    np.testing.assert_allclose(np.asarray(out), np.asarray(ref), rtol=2e-3, atol=2e-3)
    print("KERNEL_OK")
</pallas_src>

<mosaic_0001>
module attributes {stable_mosaic.version = 11 : i64} {
  func.func @kernel(%arg0: i32, %arg1: memref<1x64x32xf32, #tpu.memory_space<vmem>>, %arg2: memref<1x16x16xf32, #tpu.memory_space<vmem>>, %arg3: memref<1x256x24xf32, #tpu.memory_space<vmem>>, %arg4: memref<64x272xf32, #tpu.memory_space<vmem>>, %arg5: memref<32x32xf32, #tpu.memory_space<vmem>>, %arg6: memref<1x32xf32, #tpu.memory_space<vmem>>, %arg7: memref<16x64xf32, #tpu.memory_space<vmem>>, %arg8: memref<1x64xf32, #tpu.memory_space<vmem>>, %arg9: memref<24x64xf32, #tpu.memory_space<vmem>>, %arg10: memref<1x64xf32, #tpu.memory_space<vmem>>, %arg11: memref<32x32xf32, #tpu.memory_space<vmem>>, %arg12: memref<1x32xf32, #tpu.memory_space<vmem>>, %arg13: memref<32x64xf32, #tpu.memory_space<vmem>>, %arg14: memref<1x64xf32, #tpu.memory_space<vmem>>, %arg15: memref<64x32xf32, #tpu.memory_space<vmem>>, %arg16: memref<1x32xf32, #tpu.memory_space<vmem>>, %arg17: memref<1x64x32xf32, #tpu.memory_space<vmem>>) attributes {dimension_semantics = [#tpu.dimension_semantics<parallel>], iteration_bounds = array<i64: 2>, scalar_prefetch = 0 : i64, scratch_operands = 0 : i64, tpu.core_type = #tpu.core_type<tc>, window_params = [{transform_indices = @transform_0, window_bounds = array<i64: 1, 64, 32>}, {transform_indices = @transform_1, window_bounds = array<i64: 1, 16, 16>}, {transform_indices = @transform_2, window_bounds = array<i64: 1, 256, 24>}, {pipeline_mode = #tpu.pipeline_mode<synchronous>, transform_indices = @transform_3, window_bounds = array<i64: 64, 272>}, {pipeline_mode = #tpu.pipeline_mode<synchronous>, transform_indices = @transform_4, window_bounds = array<i64: 32, 32>}, {pipeline_mode = #tpu.pipeline_mode<synchronous>, transform_indices = @transform_5, window_bounds = array<i64: 1, 32>}, {pipeline_mode = #tpu.pipeline_mode<synchronous>, transform_indices = @transform_6, window_bounds = array<i64: 16, 64>}, {pipeline_mode = #tpu.pipeline_mode<synchronous>, transform_indices = @transform_7, window_bounds = array<i64: 1, 64>}, {pipeline_mode = #tpu.pipeline_mode<synchronous>, transform_indices = @transform_8, window_bounds = array<i64: 24, 64>}, {pipeline_mode = #tpu.pipeline_mode<synchronous>, transform_indices = @transform_9, window_bounds = array<i64: 1, 64>}, {pipeline_mode = #tpu.pipeline_mode<synchronous>, transform_indices = @transform_10, window_bounds = array<i64: 32, 32>}, {pipeline_mode = #tpu.pipeline_mode<synchronous>, transform_indices = @transform_11, window_bounds = array<i64: 1, 32>}, {pipeline_mode = #tpu.pipeline_mode<synchronous>, transform_indices = @transform_12, window_bounds = array<i64: 32, 64>}, {pipeline_mode = #tpu.pipeline_mode<synchronous>, transform_indices = @transform_13, window_bounds = array<i64: 1, 64>}, {pipeline_mode = #tpu.pipeline_mode<synchronous>, transform_indices = @transform_14, window_bounds = array<i64: 64, 32>}, {pipeline_mode = #tpu.pipeline_mode<synchronous>, transform_indices = @transform_15, window_bounds = array<i64: 1, 32>}, {transform_indices = @transform_16, window_bounds = array<i64: 1, 64, 32>}]} {
    %c0 = arith.constant 0 : index
    %c0_0 = arith.constant 0 : index
    %c0_1 = arith.constant 0 : index
    %0 = vector.load %arg1[%c0, %c0_0, %c0_1] : memref<1x64x32xf32, #tpu.memory_space<vmem>>, vector<1x64x32xf32>
    %1 = vector.shape_cast %0 : vector<1x64x32xf32> to vector<64x32xf32>
    %c0_2 = arith.constant 0 : index
    %c0_3 = arith.constant 0 : index
    %2 = vector.load %arg5[%c0_2, %c0_3] : memref<32x32xf32, #tpu.memory_space<vmem>>, vector<32x32xf32>
    %cst = arith.constant dense<0.000000e+00> : vector<64x32xf32>
    %3 = tpu.matmul %1, %2, %cst {dimension_numbers = #tpu.dot_dimension_numbers<[1], [0], [0], [1], [0, 0, 1, 1], [], []>} : vector<64x32xf32>, vector<32x32xf32>, vector<64x32xf32> -> vector<64x32xf32>
    %c0_4 = arith.constant 0 : index
    %c0_5 = arith.constant 0 : index
    %4 = vector.load %arg6[%c0_4, %c0_5] : memref<1x32xf32, #tpu.memory_space<vmem>>, vector<1x32xf32>
    %5 = vector.broadcast %4 : vector<1x32xf32> to vector<64x32xf32>
    %6 = arith.addf %3, %5 : vector<64x32xf32>
    %c0_6 = arith.constant 0 : index
    %c0_7 = arith.constant 0 : index
    %c0_8 = arith.constant 0 : index
    %7 = vector.load %arg2[%c0_6, %c0_7, %c0_8] : memref<1x16x16xf32, #tpu.memory_space<vmem>>, vector<1x16x16xf32>
    %8 = vector.shape_cast %7 : vector<1x16x16xf32> to vector<16x16xf32>
    %c0_9 = arith.constant 0 : index
    %c0_10 = arith.constant 0 : index
    %9 = vector.load %arg7[%c0_9, %c0_10] : memref<16x64xf32, #tpu.memory_space<vmem>>, vector<16x64xf32>
    %cst_11 = arith.constant dense<0.000000e+00> : vector<16x64xf32>
    %10 = tpu.matmul %8, %9, %cst_11 {dimension_numbers = #tpu.dot_dimension_numbers<[1], [0], [0], [1], [0, 0, 1, 1], [], []>} : vector<16x16xf32>, vector<16x64xf32>, vector<16x64xf32> -> vector<16x64xf32>
    %c0_12 = arith.constant 0 : index
    %c0_13 = arith.constant 0 : index
    %11 = vector.load %arg8[%c0_12, %c0_13] : memref<1x64xf32, #tpu.memory_space<vmem>>, vector<1x64xf32>
    %12 = vector.broadcast %11 : vector<1x64xf32> to vector<16x64xf32>
    %13 = arith.addf %10, %12 : vector<16x64xf32>
    %14 = vector.extract_strided_slice %13 {offsets = [0, 0], sizes = [16, 32], strides = [1, 1]} : vector<16x64xf32> to vector<16x32xf32>
    %15 = vector.extract_strided_slice %13 {offsets = [0, 32], sizes = [16, 32], strides = [1, 1]} : vector<16x64xf32> to vector<16x32xf32>
    %c0_14 = arith.constant 0 : index
    %c0_15 = arith.constant 0 : index
    %c0_16 = arith.constant 0 : index
    %16 = vector.load %arg3[%c0_14, %c0_15, %c0_16] : memref<1x256x24xf32, #tpu.memory_space<vmem>>, vector<1x256x24xf32>
    %17 = vector.shape_cast %16 : vector<1x256x24xf32> to vector<256x24xf32>
    %c0_17 = arith.constant 0 : index
    %c0_18 = arith.constant 0 : index
    %18 = vector.load %arg9[%c0_17, %c0_18] : memref<24x64xf32, #tpu.memory_space<vmem>>, vector<24x64xf32>
    %cst_19 = arith.constant dense<0.000000e+00> : vector<256x64xf32>
    %19 = tpu.matmul %17, %18, %cst_19 {dimension_numbers = #tpu.dot_dimension_numbers<[1], [0], [0], [1], [0, 0, 1, 1], [], []>} : vector<256x24xf32>, vector<24x64xf32>, vector<256x64xf32> -> vector<256x64xf32>
    %c0_20 = arith.constant 0 : index
    %c0_21 = arith.constant 0 : index
    %20 = vector.load %arg10[%c0_20, %c0_21] : memref<1x64xf32, #tpu.memory_space<vmem>>, vector<1x64xf32>
    %21 = vector.broadcast %20 : vector<1x64xf32> to vector<256x64xf32>
    %22 = arith.addf %19, %21 : vector<256x64xf32>
    %23 = vector.extract_strided_slice %22 {offsets = [0, 0], sizes = [256, 32], strides = [1, 1]} : vector<256x64xf32> to vector<256x32xf32>
    %24 = vector.extract_strided_slice %22 {offsets = [0, 32], sizes = [256, 32], strides = [1, 1]} : vector<256x64xf32> to vector<256x32xf32>
    %25 = tpu.concatenate %14, %23 in 0 : vector<16x32xf32>, vector<256x32xf32> -> vector<272x32xf32>
    %26 = tpu.concatenate %15, %24 in 0 : vector<16x32xf32>, vector<256x32xf32> -> vector<272x32xf32>
    %c0_22 = arith.constant 0 : index
    %c0_23 = arith.constant 0 : index
    %27 = vector.load %arg4[%c0_22, %c0_23] : memref<64x272xf32, #tpu.memory_space<vmem>>, vector<64x272xf32>
    %28 = vector.extract_strided_slice %6 {offsets = [0, 0], sizes = [64, 8], strides = [1, 1]} : vector<64x32xf32> to vector<64x8xf32>
    %29 = vector.extract_strided_slice %25 {offsets = [0, 0], sizes = [272, 8], strides = [1, 1]} : vector<272x32xf32> to vector<272x8xf32>
    %30 = vector.extract_strided_slice %26 {offsets = [0, 0], sizes = [272, 8], strides = [1, 1]} : vector<272x32xf32> to vector<272x8xf32>
    %cst_24 = arith.constant dense<0.000000e+00> : vector<64x272xf32>
    %31 = tpu.matmul %28, %29, %cst_24 {dimension_numbers = #tpu.dot_dimension_numbers<[1], [1], [0], [0], [0, 0, 1, 0], [], []>} : vector<64x8xf32>, vector<272x8xf32>, vector<64x272xf32> -> vector<64x272xf32>
    %32 = arith.mulf %31, %27 : vector<64x272xf32>
    %cst_25 = arith.constant dense<0.000000e+00> : vector<64x8xf32>
    %33 = tpu.matmul %32, %30, %cst_25 {dimension_numbers = #tpu.dot_dimension_numbers<[1], [0], [0], [1], [0, 0, 1, 1], [], []>} : vector<64x272xf32>, vector<272x8xf32>, vector<64x8xf32> -> vector<64x8xf32>
    %34 = vector.extract_strided_slice %6 {offsets = [0, 8], sizes = [64, 8], strides = [1, 1]} : vector<64x32xf32> to vector<64x8xf32>
    %35 = vector.extract_strided_slice %25 {offsets = [0, 8], sizes = [272, 8], strides = [1, 1]} : vector<272x32xf32> to vector<272x8xf32>
    %36 = vector.extract_strided_slice %26 {offsets = [0, 8], sizes = [272, 8], strides = [1, 1]} : vector<272x32xf32> to vector<272x8xf32>
    %cst_26 = arith.constant dense<0.000000e+00> : vector<64x272xf32>
    %37 = tpu.matmul %34, %35, %cst_26 {dimension_numbers = #tpu.dot_dimension_numbers<[1], [1], [0], [0], [0, 0, 1, 0], [], []>} : vector<64x8xf32>, vector<272x8xf32>, vector<64x272xf32> -> vector<64x272xf32>
    %38 = arith.mulf %37, %27 : vector<64x272xf32>
    %cst_27 = arith.constant dense<0.000000e+00> : vector<64x8xf32>
    %39 = tpu.matmul %38, %36, %cst_27 {dimension_numbers = #tpu.dot_dimension_numbers<[1], [0], [0], [1], [0, 0, 1, 1], [], []>} : vector<64x272xf32>, vector<272x8xf32>, vector<64x8xf32> -> vector<64x8xf32>
    %40 = vector.extract_strided_slice %6 {offsets = [0, 16], sizes = [64, 8], strides = [1, 1]} : vector<64x32xf32> to vector<64x8xf32>
    %41 = vector.extract_strided_slice %25 {offsets = [0, 16], sizes = [272, 8], strides = [1, 1]} : vector<272x32xf32> to vector<272x8xf32>
    %42 = vector.extract_strided_slice %26 {offsets = [0, 16], sizes = [272, 8], strides = [1, 1]} : vector<272x32xf32> to vector<272x8xf32>
    %cst_28 = arith.constant dense<0.000000e+00> : vector<64x272xf32>
    %43 = tpu.matmul %40, %41, %cst_28 {dimension_numbers = #tpu.dot_dimension_numbers<[1], [1], [0], [0], [0, 0, 1, 0], [], []>} : vector<64x8xf32>, vector<272x8xf32>, vector<64x272xf32> -> vector<64x272xf32>
    %44 = arith.mulf %43, %27 : vector<64x272xf32>
    %cst_29 = arith.constant dense<0.000000e+00> : vector<64x8xf32>
    %45 = tpu.matmul %44, %42, %cst_29 {dimension_numbers = #tpu.dot_dimension_numbers<[1], [0], [0], [1], [0, 0, 1, 1], [], []>} : vector<64x272xf32>, vector<272x8xf32>, vector<64x8xf32> -> vector<64x8xf32>
    %46 = vector.extract_strided_slice %6 {offsets = [0, 24], sizes = [64, 8], strides = [1, 1]} : vector<64x32xf32> to vector<64x8xf32>
    %47 = vector.extract_strided_slice %25 {offsets = [0, 24], sizes = [272, 8], strides = [1, 1]} : vector<272x32xf32> to vector<272x8xf32>
    %48 = vector.extract_strided_slice %26 {offsets = [0, 24], sizes = [272, 8], strides = [1, 1]} : vector<272x32xf32> to vector<272x8xf32>
    %cst_30 = arith.constant dense<0.000000e+00> : vector<64x272xf32>
    %49 = tpu.matmul %46, %47, %cst_30 {dimension_numbers = #tpu.dot_dimension_numbers<[1], [1], [0], [0], [0, 0, 1, 0], [], []>} : vector<64x8xf32>, vector<272x8xf32>, vector<64x272xf32> -> vector<64x272xf32>
    %50 = arith.mulf %49, %27 : vector<64x272xf32>
    %cst_31 = arith.constant dense<0.000000e+00> : vector<64x8xf32>
    %51 = tpu.matmul %50, %48, %cst_31 {dimension_numbers = #tpu.dot_dimension_numbers<[1], [0], [0], [1], [0, 0, 1, 1], [], []>} : vector<64x272xf32>, vector<272x8xf32>, vector<64x8xf32> -> vector<64x8xf32>
    %52 = tpu.concatenate %33, %39, %45, %51 in 1 : vector<64x8xf32>, vector<64x8xf32>, vector<64x8xf32>, vector<64x8xf32> -> vector<64x32xf32>
    %cst_32 = arith.constant 0.899999976 : f32
    %53 = vector.broadcast %cst_32 : f32 to vector<64x32xf32>
    %54 = arith.mulf %52, %53 : vector<64x32xf32>
    %c0_33 = arith.constant 0 : index
    %c0_34 = arith.constant 0 : index
    %55 = vector.load %arg11[%c0_33, %c0_34] : memref<32x32xf32, #tpu.memory_space<vmem>>, vector<32x32xf32>
    %cst_35 = arith.constant dense<0.000000e+00> : vector<64x32xf32>
    %56 = tpu.matmul %54, %55, %cst_35 {dimension_numbers = #tpu.dot_dimension_numbers<[1], [0], [0], [1], [0, 0, 1, 1], [], []>} : vector<64x32xf32>, vector<32x32xf32>, vector<64x32xf32> -> vector<64x32xf32>
    %57 = arith.addf %1, %56 : vector<64x32xf32>
    %c0_36 = arith.constant 0 : index
    %c0_37 = arith.constant 0 : index
    %58 = vector.load %arg12[%c0_36, %c0_37] : memref<1x32xf32, #tpu.memory_space<vmem>>, vector<1x32xf32>
    %59 = vector.broadcast %58 : vector<1x32xf32> to vector<64x32xf32>
    %60 = arith.addf %57, %59 : vector<64x32xf32>
    %c0_38 = arith.constant 0 : index
    %c0_39 = arith.constant 0 : index
    %61 = vector.load %arg13[%c0_38, %c0_39] : memref<32x64xf32, #tpu.memory_space<vmem>>, vector<32x64xf32>
    %cst_40 = arith.constant dense<0.000000e+00> : vector<64x64xf32>
    %62 = tpu.matmul %60, %61, %cst_40 {dimension_numbers = #tpu.dot_dimension_numbers<[1], [0], [0], [1], [0, 0, 1, 1], [], []>} : vector<64x32xf32>, vector<32x64xf32>, vector<64x64xf32> -> vector<64x64xf32>
    %c0_41 = arith.constant 0 : index
    %c0_42 = arith.constant 0 : index
    %63 = vector.load %arg14[%c0_41, %c0_42] : memref<1x64xf32, #tpu.memory_space<vmem>>, vector<1x64xf32>
    %64 = vector.broadcast %63 : vector<1x64xf32> to vector<64x64xf32>
    %65 = arith.addf %62, %64 : vector<64x64xf32>
    %cst_43 = arith.constant 0.000000e+00 : f32
    %66 = vector.broadcast %cst_43 : f32 to vector<64x64xf32>
    %67 = arith.maximumf %65, %66 : vector<64x64xf32>
    %c0_44 = arith.constant 0 : index
    %c0_45 = arith.constant 0 : index
    %68 = vector.load %arg15[%c0_44, %c0_45] : memref<64x32xf32, #tpu.memory_space<vmem>>, vector<64x32xf32>
    %cst_46 = arith.constant dense<0.000000e+00> : vector<64x32xf32>
    %69 = tpu.matmul %67, %68, %cst_46 {dimension_numbers = #tpu.dot_dimension_numbers<[1], [0], [0], [1], [0, 0, 1, 1], [], []>} : vector<64x64xf32>, vector<64x32xf32>, vector<64x32xf32> -> vector<64x32xf32>
    %c0_47 = arith.constant 0 : index
    %c0_48 = arith.constant 0 : index
    %70 = vector.load %arg16[%c0_47, %c0_48] : memref<1x32xf32, #tpu.memory_space<vmem>>, vector<1x32xf32>
    %71 = vector.broadcast %70 : vector<1x32xf32> to vector<64x32xf32>
    %72 = arith.addf %69, %71 : vector<64x32xf32>
    %cst_49 = arith.constant 1.100000e+00 : f32
    %73 = vector.broadcast %cst_49 : f32 to vector<64x32xf32>
    %74 = arith.mulf %73, %72 : vector<64x32xf32>
    %75 = arith.addf %60, %74 : vector<64x32xf32>
    %c0_50 = arith.constant 0 : index
    %c0_51 = arith.constant 0 : index
    %c0_52 = arith.constant 0 : index
    %76 = vector.load %arg17[%c0_50, %c0_51, %c0_52] : memref<1x64x32xf32, #tpu.memory_space<vmem>>, vector<1x64x32xf32>
    %77 = vector.shape_cast %76 : vector<1x64x32xf32> to vector<64x32xf32>
    %78 = vector.shape_cast %75 : vector<64x32xf32> to vector<1x64x32xf32>
    tpu.vector_store %arg17[%c0_50, %c0_51, %c0_52], %78 {strides = array<i32>} : memref<1x64x32xf32, #tpu.memory_space<vmem>>, vector<1x64x32xf32>,
    return
  }
  func.func @transform_0(%arg0: i32) -> (i32, i32, i32) {
    %c0_i32 = arith.constant 0 : i32
    %c0_i32_0 = arith.constant 0 : i32
    %c0_i32_1 = arith.constant 0 : i32
    return %arg0, %c0_i32, %c0_i32_0 : i32, i32, i32
  }
  func.func @transform_1(%arg0: i32) -> (i32, i32, i32) {
    %c0_i32 = arith.constant 0 : i32
    %c0_i32_0 = arith.constant 0 : i32
    %c0_i32_1 = arith.constant 0 : i32
    return %arg0, %c0_i32, %c0_i32_0 : i32, i32, i32
  }
  func.func @transform_2(%arg0: i32) -> (i32, i32, i32) {
    %c0_i32 = arith.constant 0 : i32
    %c0_i32_0 = arith.constant 0 : i32
    %c0_i32_1 = arith.constant 0 : i32
    return %arg0, %c0_i32, %c0_i32_0 : i32, i32, i32
  }
  func.func @transform_3(%arg0: i32) -> (i32, i32) {
    %c0_i32 = arith.constant 0 : i32
    %c0_i32_0 = arith.constant 0 : i32
    %c0_i32_1 = arith.constant 0 : i32
    return %c0_i32, %c0_i32_0 : i32, i32
  }
  func.func @transform_4(%arg0: i32) -> (i32, i32) {
    %c0_i32 = arith.constant 0 : i32
    %c0_i32_0 = arith.constant 0 : i32
    %c0_i32_1 = arith.constant 0 : i32
    return %c0_i32, %c0_i32_0 : i32, i32
  }
  func.func @transform_5(%arg0: i32) -> (i32, i32) {
    %c0_i32 = arith.constant 0 : i32
    %c0_i32_0 = arith.constant 0 : i32
    %c0_i32_1 = arith.constant 0 : i32
    return %c0_i32, %c0_i32_0 : i32, i32
  }
  func.func @transform_6(%arg0: i32) -> (i32, i32) {
    %c0_i32 = arith.constant 0 : i32
    %c0_i32_0 = arith.constant 0 : i32
    %c0_i32_1 = arith.constant 0 : i32
    return %c0_i32, %c0_i32_0 : i32, i32
  }
  func.func @transform_7(%arg0: i32) -> (i32, i32) {
    %c0_i32 = arith.constant 0 : i32
    %c0_i32_0 = arith.constant 0 : i32
    %c0_i32_1 = arith.constant 0 : i32
    return %c0_i32, %c0_i32_0 : i32, i32
  }
  func.func @transform_8(%arg0: i32) -> (i32, i32) {
    %c0_i32 = arith.constant 0 : i32
    %c0_i32_0 = arith.constant 0 : i32
    %c0_i32_1 = arith.constant 0 : i32
    return %c0_i32, %c0_i32_0 : i32, i32
  }
  func.func @transform_9(%arg0: i32) -> (i32, i32) {
    %c0_i32 = arith.constant 0 : i32
    %c0_i32_0 = arith.constant 0 : i32
    %c0_i32_1 = arith.constant 0 : i32
    return %c0_i32, %c0_i32_0 : i32, i32
  }
  func.func @transform_10(%arg0: i32) -> (i32, i32) {
    %c0_i32 = arith.constant 0 : i32
    %c0_i32_0 = arith.constant 0 : i32
    %c0_i32_1 = arith.constant 0 : i32
    return %c0_i32, %c0_i32_0 : i32, i32
  }
  func.func @transform_11(%arg0: i32) -> (i32, i32) {
    %c0_i32 = arith.constant 0 : i32
    %c0_i32_0 = arith.constant 0 : i32
    %c0_i32_1 = arith.constant 0 : i32
    return %c0_i32, %c0_i32_0 : i32, i32
  }
  func.func @transform_12(%arg0: i32) -> (i32, i32) {
    %c0_i32 = arith.constant 0 : i32
    %c0_i32_0 = arith.constant 0 : i32
    %c0_i32_1 = arith.constant 0 : i32
    return %c0_i32, %c0_i32_0 : i32, i32
  }
  func.func @transform_13(%arg0: i32) -> (i32, i32) {
    %c0_i32 = arith.constant 0 : i32
    %c0_i32_0 = arith.constant 0 : i32
    %c0_i32_1 = arith.constant 0 : i32
    return %c0_i32, %c0_i32_0 : i32, i32
  }
  func.func @transform_14(%arg0: i32) -> (i32, i32) {
    %c0_i32 = arith.constant 0 : i32
    %c0_i32_0 = arith.constant 0 : i32
    %c0_i32_1 = arith.constant 0 : i32
    return %c0_i32, %c0_i32_0 : i32, i32
  }
  func.func @transform_15(%arg0: i32) -> (i32, i32) {
    %c0_i32 = arith.constant 0 : i32
    %c0_i32_0 = arith.constant 0 : i32
    %c0_i32_1 = arith.constant 0 : i32
    return %c0_i32, %c0_i32_0 : i32, i32
  }
  func.func @transform_16(%arg0: i32) -> (i32, i32, i32) {
    %c0_i32 = arith.constant 0 : i32
    %c0_i32_0 = arith.constant 0 : i32
    %c0_i32_1 = arith.constant 0 : i32
    return %arg0, %c0_i32, %c0_i32_0 : i32, i32, i32
  }
}

</mosaic_0001>

<llo_original>
// kernel: tpu_custom_call.1
$region0: #{tpu_custom_call.1}
  #allocation0 [shape = 'u32[]', space=smem, size = 0x4, offset = 0x4, fixed_abs, tag = 'smem constant byte address 0x4 - core index']
  #allocation1 [shape = 'u32[144,128]{1,0:T(1,128)}', space=vmem, size = 0x12000, scoped, tag = 'internal scratch']
  %s0 = inlined_call_operand.vmem [shape: f32[2,64,32], index: 0, kind: input, shape index: {}]
  %s1 = inlined_call_operand.vmem [shape: f32[2,16,16], index: 1, kind: input, shape index: {}]
  %s2 = inlined_call_operand.vmem [shape: f32[2,256,24], index: 2, kind: input, shape index: {}]
  %s3 = inlined_call_operand.vmem [shape: f32[64,272], index: 3, kind: input, shape index: {}]
  %s4 = inlined_call_operand.vmem [shape: f32[32,32], index: 4, kind: input, shape index: {}]
  %s5 = inlined_call_operand.vmem [shape: f32[1,32], index: 5, kind: input, shape index: {}]
  %s6 = inlined_call_operand.vmem [shape: f32[16,64], index: 6, kind: input, shape index: {}]
  %s7 = inlined_call_operand.vmem [shape: f32[1,64], index: 7, kind: input, shape index: {}]
  %s8 = inlined_call_operand.vmem [shape: f32[24,64], index: 8, kind: input, shape index: {}]
  %s9 = inlined_call_operand.vmem [shape: f32[1,64], index: 9, kind: input, shape index: {}]
  %s10 = inlined_call_operand.vmem [shape: f32[32,32], index: 10, kind: input, shape index: {}]
  %s11 = inlined_call_operand.vmem [shape: f32[1,32], index: 11, kind: input, shape index: {}]
  %s12 = inlined_call_operand.vmem [shape: f32[32,64], index: 12, kind: input, shape index: {}]
  %s13 = inlined_call_operand.vmem [shape: f32[1,64], index: 13, kind: input, shape index: {}]
  %s14 = inlined_call_operand.vmem [shape: f32[64,32], index: 14, kind: input, shape index: {}]
  %s15 = inlined_call_operand.vmem [shape: f32[1,32], index: 15, kind: input, shape index: {}]
  %s16 = inlined_call_operand.vmem [shape: f32[2,64,32], index: 16, kind: output, shape index: {}]
  %s17 = sld [smem:[#allocation0]]
  $region97: #{tpu_custom_call.1} parent=0
    _
  %s19 = ssub.s32 1, %s17
  %s20 = scalar_select 0, %s19, %s17
  loop: start=0, step=1, limit=4
  $region2: #{tpu_custom_call.1} parent=0 // loop_pre_header
    _
  $region3: #{tpu_custom_call.1} parent=0 // loop_header
    %s22 = sphi 0, %s26
    %p23 = scmp.ge.s32.totalorder %s22, 4
    %s32 = sphi 0, %s34
    %s35 = sphi 0, %s32
    %s36 = sphi 0, %s35
    %s52 = sphi 0, %s36
    %s58 = sphi 0, %s60
    %s61 = sphi 0, %s58
    %s62 = sphi 0, %s61
    %s78 = sphi 0, %s62
    %s84 = sphi 0, %s86
    %s87 = sphi 0, %s84
    %s88 = sphi 0, %s87
    %s104 = sphi 0, %s88
    %s108 = sphi 0, %s108
    %s110 = sphi 0, %s108
    %s111 = sphi 0, %s110
    %s125 = sphi 0, %s111
    %s129 = sphi 0, %s129
    %s131 = sphi 0, %s129
    %s132 = sphi 0, %s131
    %s146 = sphi 0, %s132
    %s150 = sphi 0, %s150
    %s152 = sphi 0, %s150
    %s153 = sphi 0, %s152
    %s167 = sphi 0, %s153
    %s171 = sphi 0, %s171
    %s173 = sphi 0, %s171
    %s174 = sphi 0, %s173
    %s188 = sphi 0, %s174
    %s192 = sphi 0, %s192
    %s194 = sphi 0, %s192
    %s195 = sphi 0, %s194
    %s209 = sphi 0, %s195
    %s213 = sphi 0, %s213
    %s215 = sphi 0, %s213
    %s216 = sphi 0, %s215
    %s230 = sphi 0, %s216
    %s234 = sphi 0, %s234
    %s236 = sphi 0, %s234
    %s237 = sphi 0, %s236
    %s251 = sphi 0, %s237
    %s255 = sphi 0, %s255
    %s257 = sphi 0, %s255
    %s258 = sphi 0, %s257
    %s272 = sphi 0, %s258
    %s276 = sphi 0, %s276
    %s278 = sphi 0, %s276
    %s279 = sphi 0, %s278
    %s293 = sphi 0, %s279
    %s297 = sphi 0, %s297
    %s299 = sphi 0, %s297
    %s300 = sphi 0, %s299
    %s314 = sphi 0, %s300
    %s318 = sphi 0, %s318
    %s320 = sphi 0, %s318
    %s321 = sphi 0, %s320
    %s335 = sphi 0, %s321
    %s339 = sphi 0, %s339
    %s341 = sphi 0, %s339
    %s342 = sphi 0, %s341
    %s356 = sphi 0, %s342
    %s360 = sphi 0, %s360
    %s362 = sphi 0, %s360
    %s363 = sphi 0, %s362
    %s377 = sphi 0, %s363
    %s383 = sphi 0, %s385
    %s386 = sphi 0, %s383
    %s387 = sphi 0, %s386
    %s403 = sphi 0, %s387
  $region4: #{tpu_custom_call.1} parent=0 // loop_header_branch
    %25 = sbr.rel (%p23) target = $region8
  $region5: #{tpu_custom_call.1} parent=0 // loop_body
    %s27 = ssub.s32 %s22, 1
    %s28 = ssub.s32 %s22, 2
    %s29 = sadd.s32 %s22, 1
    %s30 = ssub.s32 %s22, %s29
    %p31 = scmp.eq.s32.totalorder %s30, 0
    %s33 = sadd.s32 %s32, 1
    %s34 = scalar_select %p31, %s32, %s33
    %p37 = pneg %p31
    %p38 = scmp.eq.s32.totalorder %s22, 1
    %p39 = por %p37, %p38
    %p40 = scmp.ne.s32.totalorder %s32, %s35
    %p41 = scmp.eq.s32.totalorder %s22, 0
    %p42 = por %p40, %p41
    %p43 = scmp.ne.s32.totalorder %s32, %s35
    %p44 = scmp.eq.s32.totalorder %s27, 1
    %p45 = por %p43, %p44
    %p46 = scmp.ne.s32.totalorder %s35, %s36
    %p47 = scmp.eq.s32.totalorder %s27, 0
    %p48 = por %p46, %p47
    %p49 = scmp.ne.s32.totalorder %s35, %s36
    %p50 = scmp.eq.s32.totalorder %s28, 1
    %p51 = por %p49, %p50
    %p53 = scmp.ne.s32.totalorder %s36, %s52
    %p54 = scmp.eq.s32.totalorder %s28, 0
    %p55 = por %p53, %p54
    %s56 = ssub.s32 %s22, %s29
    %p57 = scmp.eq.s32.totalorder %s56, 0
    %s59 = sadd.s32 %s58, 1
    %s60 = scalar_select %p57, %s58, %s59
    %p63 = pneg %p57
    %p64 = scmp.eq.s32.totalorder %s22, 1
    %p65 = por %p63, %p64
    %p66 = scmp.ne.s32.totalorder %s58, %s61
    %p67 = scmp.eq.s32.totalorder %s22, 0
    %p68 = por %p66, %p67
    %p69 = scmp.ne.s32.totalorder %s58, %s61
    %p70 = scmp.eq.s32.totalorder %s27, 1
    %p71 = por %p69, %p70
    %p72 = scmp.ne.s32.totalorder %s61, %s62
    %p73 = scmp.eq.s32.totalorder %s27, 0
    %p74 = por %p72, %p73
    %p75 = scmp.ne.s32.totalorder %s61, %s62
    %p76 = scmp.eq.s32.totalorder %s28, 1
    %p77 = por %p75, %p76
    %p79 = scmp.ne.s32.totalorder %s62, %s78
    %p80 = scmp.eq.s32.totalorder %s28, 0
    %p81 = por %p79, %p80
    %s82 = ssub.s32 %s22, %s29
    %p83 = scmp.eq.s32.totalorder %s82, 0
    %s85 = sadd.s32 %s84, 1
    %s86 = scalar_select %p83, %s84, %s85
    %p89 = pneg %p83
    %p90 = scmp.eq.s32.totalorder %s22, 1
    %p91 = por %p89, %p90
    %p92 = scmp.ne.s32.totalorder %s84, %s87
    %p93 = scmp.eq.s32.totalorder %s22, 0
    %p94 = por %p92, %p93
    %p95 = scmp.ne.s32.totalorder %s84, %s87
    %p96 = scmp.eq.s32.totalorder %s27, 1
    %p97 = por %p95, %p96
    %p98 = scmp.ne.s32.totalorder %s87, %s88
    %p99 = scmp.eq.s32.totalorder %s27, 0
    %p100 = por %p98, %p99
    %p101 = scmp.ne.s32.totalorder %s87, %s88
    %p102 = scmp.eq.s32.totalorder %s28, 1
    %p103 = por %p101, %p102
    %p105 = scmp.ne.s32.totalorder %s88, %s104
    %p106 = scmp.eq.s32.totalorder %s28, 0
    %p107 = por %p105, %p106
    %s109 = sadd.s32 %s108, 1
    %p112 = scmp.eq.s32.totalorder %s22, 1
    %p113 = scmp.ne.s32.totalorder %s108, %s110
    %p114 = scmp.eq.s32.totalorder %s22, 0
    %p115 = por %p113, %p114
    %p116 = scmp.ne.s32.totalorder %s108, %s110
    %p117 = scmp.eq.s32.totalorder %s27, 1
    %p118 = por %p116, %p117
    %p119 = scmp.ne.s32.totalorder %s110, %s111
    %p120 = scmp.eq.s32.totalorder %s27, 0
    %p121 = por %p119, %p120
    %p122 = scmp.ne.s32.totalorder %s110, %s111
    %p123 = scmp.eq.s32.totalorder %s28, 1
    %p124 = por %p122, %p123
    %p126 = scmp.ne.s32.totalorder %s111, %s125
    %p127 = scmp.eq.s32.totalorder %s28, 0
    %p128 = por %p126, %p127
    %s130 = sadd.s32 %s129, 1
    %p133 = scmp.eq.s32.totalorder %s22, 1
    %p134 = scmp.ne.s32.totalorder %s129, %s131
    %p135 = scmp.eq.s32.totalorder %s22, 0
    %p136 = por %p134, %p135
    %p137 = scmp.ne.s32.totalorder %s129, %s131
    %p138 = scmp.eq.s32.totalorder %s27, 1
    %p139 = por %p137, %p138
    %p140 = scmp.ne.s32.totalorder %s131, %s132
    %p141 = scmp.eq.s32.totalorder %s27, 0
    %p142 = por %p140, %p141
    %p143 = scmp.ne.s32.totalorder %s131, %s132
    %p144 = scmp.eq.s32.totalorder %s28, 1
    %p145 = por %p143, %p144
    %p147 = scmp.ne.s32.totalorder %s132, %s146
    %p148 = scmp.eq.s32.totalorder %s28, 0
    %p149 = por %p147, %p148
    %s151 = sadd.s32 %s150, 1
    %p154 = scmp.eq.s32.totalorder %s22, 1
    %p155 = scmp.ne.s32.totalorder %s150, %s152
    %p156 = scmp.eq.s32.totalorder %s22, 0
    %p157 = por %p155, %p156
    %p158 = scmp.ne.s32.totalorder %s150, %s152
    %p159 = scmp.eq.s32.totalorder %s27, 1
    %p160 = por %p158, %p159
    %p161 = scmp.ne.s32.totalorder %s152, %s153
    %p162 = scmp.eq.s32.totalorder %s27, 0
    %p163 = por %p161, %p162
    %p164 = scmp.ne.s32.totalorder %s152, %s153
    %p165 = scmp.eq.s32.totalorder %s28, 1
    %p166 = por %p164, %p165
    %p168 = scmp.ne.s32.totalorder %s153, %s167
    %p169 = scmp.eq.s32.totalorder %s28, 0
    %p170 = por %p168, %p169
    %s172 = sadd.s32 %s171, 1
    %p175 = scmp.eq.s32.totalorder %s22, 1
    %p176 = scmp.ne.s32.totalorder %s171, %s173
    %p177 = scmp.eq.s32.totalorder %s22, 0
    %p178 = por %p176, %p177
    %p179 = scmp.ne.s32.totalorder %s171, %s173
    %p180 = scmp.eq.s32.totalorder %s27, 1
    %p181 = por %p179, %p180
    %p182 = scmp.ne.s32.totalorder %s173, %s174
    %p183 = scmp.eq.s32.totalorder %s27, 0
    %p184 = por %p182, %p183
    %p185 = scmp.ne.s32.totalorder %s173, %s174
    %p186 = scmp.eq.s32.totalorder %s28, 1
    %p187 = por %p185, %p186
    %p189 = scmp.ne.s32.totalorder %s174, %s188
    %p190 = scmp.eq.s32.totalorder %s28, 0
    %p191 = por %p189, %p190
    %s193 = sadd.s32 %s192, 1
    %p196 = scmp.eq.s32.totalorder %s22, 1
    %p197 = scmp.ne.s32.totalorder %s192, %s194
    %p198 = scmp.eq.s32.totalorder %s22, 0
    %p199 = por %p197, %p198
    %p200 = scmp.ne.s32.totalorder %s192, %s194
    %p201 = scmp.eq.s32.totalorder %s27, 1
    %p202 = por %p200, %p201
    %p203 = scmp.ne.s32.totalorder %s194, %s195
    %p204 = scmp.eq.s32.totalorder %s27, 0
    %p205 = por %p203, %p204
    %p206 = scmp.ne.s32.totalorder %s194, %s195
    %p207 = scmp.eq.s32.totalorder %s28, 1
    %p208 = por %p206, %p207
    %p210 = scmp.ne.s32.totalorder %s195, %s209
    %p211 = scmp.eq.s32.totalorder %s28, 0
    %p212 = por %p210, %p211
    %s214 = sadd.s32 %s213, 1
    %p217 = scmp.eq.s32.totalorder %s22, 1
    %p218 = scmp.ne.s32.totalorder %s213, %s215
    %p219 = scmp.eq.s32.totalorder %s22, 0
    %p220 = por %p218, %p219
    %p221 = scmp.ne.s32.totalorder %s213, %s215
    %p222 = scmp.eq.s32.totalorder %s27, 1
    %p223 = por %p221, %p222
    %p224 = scmp.ne.s32.totalorder %s215, %s216
    %p225 = scmp.eq.s32.totalorder %s27, 0
    %p226 = por %p224, %p225
    %p227 = scmp.ne.s32.totalorder %s215, %s216
    %p228 = scmp.eq.s32.totalorder %s28, 1
    %p229 = por %p227, %p228
    %p231 = scmp.ne.s32.totalorder %s216, %s230
    %p232 = scmp.eq.s32.totalorder %s28, 0
    %p233 = por %p231, %p232
    %s235 = sadd.s32 %s234, 1
    %p238 = scmp.eq.s32.totalorder %s22, 1
    %p239 = scmp.ne.s32.totalorder %s234, %s236
    %p240 = scmp.eq.s32.totalorder %s22, 0
    %p241 = por %p239, %p240
    %p242 = scmp.ne.s32.totalorder %s234, %s236
    %p243 = scmp.eq.s32.totalorder %s27, 1
    %p244 = por %p242, %p243
    %p245 = scmp.ne.s32.totalorder %s236, %s237
    %p246 = scmp.eq.s32.totalorder %s27, 0
    %p247 = por %p245, %p246
    %p248 = scmp.ne.s32.totalorder %s236, %s237
    %p249 = scmp.eq.s32.totalorder %s28, 1
    %p250 = por %p248, %p249
    %p252 = scmp.ne.s32.totalorder %s237, %s251
    %p253 = scmp.eq.s32.totalorder %s28, 0
    %p254 = por %p252, %p253
    %s256 = sadd.s32 %s255, 1
    %p259 = scmp.eq.s32.totalorder %s22, 1
    %p260 = scmp.ne.s32.totalorder %s255, %s257
    %p261 = scmp.eq.s32.totalorder %s22, 0
    %p262 = por %p260, %p261
    %p263 = scmp.ne.s32.totalorder %s255, %s257
    %p264 = scmp.eq.s32.totalorder %s27, 1
    %p265 = por %p263, %p264
    %p266 = scmp.ne.s32.totalorder %s257, %s258
    %p267 = scmp.eq.s32.totalorder %s27, 0
    %p268 = por %p266, %p267
    %p269 = scmp.ne.s32.totalorder %s257, %s258
    %p270 = scmp.eq.s32.totalorder %s28, 1
    %p271 = por %p269, %p270
    %p273 = scmp.ne.s32.totalorder %s258, %s272
    %p274 = scmp.eq.s32.totalorder %s28, 0
    %p275 = por %p273, %p274
    %s277 = sadd.s32 %s276, 1
    %p280 = scmp.eq.s32.totalorder %s22, 1
    %p281 = scmp.ne.s32.totalorder %s276, %s278
    %p282 = scmp.eq.s32.totalorder %s22, 0
    %p283 = por %p281, %p282
    %p284 = scmp.ne.s32.totalorder %s276, %s278
    %p285 = scmp.eq.s32.totalorder %s27, 1
    %p286 = por %p284, %p285
    %p287 = scmp.ne.s32.totalorder %s278, %s279
    %p288 = scmp.eq.s32.totalorder %s27, 0
    %p289 = por %p287, %p288
    %p290 = scmp.ne.s32.totalorder %s278, %s279
    %p291 = scmp.eq.s32.totalorder %s28, 1
    %p292 = por %p290, %p291
    %p294 = scmp.ne.s32.totalorder %s279, %s293
    %p295 = scmp.eq.s32.totalorder %s28, 0
    %p296 = por %p294, %p295
    %s298 = sadd.s32 %s297, 1
    %p301 = scmp.eq.s32.totalorder %s22, 1
    %p302 = scmp.ne.s32.totalorder %s297, %s299
    %p303 = scmp.eq.s32.totalorder %s22, 0
    %p304 = por %p302, %p303
    %p305 = scmp.ne.s32.totalorder %s297, %s299
    %p306 = scmp.eq.s32.totalorder %s27, 1
    %p307 = por %p305, %p306
    %p308 = scmp.ne.s32.totalorder %s299, %s300
    %p309 = scmp.eq.s32.totalorder %s27, 0
    %p310 = por %p308, %p309
    %p311 = scmp.ne.s32.totalorder %s299, %s300
    %p312 = scmp.eq.s32.totalorder %s28, 1
    %p313 = por %p311, %p312
    %p315 = scmp.ne.s32.totalorder %s300, %s314
    %p316 = scmp.eq.s32.totalorder %s28, 0
    %p317 = por %p315, %p316
    %s319 = sadd.s32 %s318, 1
    %p322 = scmp.eq.s32.totalorder %s22, 1
    %p323 = scmp.ne.s32.totalorder %s318, %s320
    %p324 = scmp.eq.s32.totalorder %s22, 0
    %p325 = por %p323, %p324
    %p326 = scmp.ne.s32.totalorder %s318, %s320
    %p327 = scmp.eq.s32.totalorder %s27, 1
    %p328 = por %p326, %p327
    %p329 = scmp.ne.s32.totalorder %s320, %s321
    %p330 = scmp.eq.s32.totalorder %s27, 0
    %p331 = por %p329, %p330
    %p332 = scmp.ne.s32.totalorder %s320, %s321
    %p333 = scmp.eq.s32.totalorder %s28, 1
    %p334 = por %p332, %p333
    %p336 = scmp.ne.s32.totalorder %s321, %s335
    %p337 = scmp.eq.s32.totalorder %s28, 0
    %p338 = por %p336, %p337
    %s340 = sadd.s32 %s339, 1
    %p343 = scmp.eq.s32.totalorder %s22, 1
    %p344 = scmp.ne.s32.totalorder %s339, %s341
    %p345 = scmp.eq.s32.totalorder %s22, 0
    %p346 = por %p344, %p345
    %p347 = scmp.ne.s32.totalorder %s339, %s341
    %p348 = scmp.eq.s32.totalorder %s27, 1
    %p349 = por %p347, %p348
    %p350 = scmp.ne.s32.totalorder %s341, %s342
    %p351 = scmp.eq.s32.totalorder %s27, 0
    %p352 = por %p350, %p351
    %p353 = scmp.ne.s32.totalorder %s341, %s342
    %p354 = scmp.eq.s32.totalorder %s28, 1
    %p355 = por %p353, %p354
    %p357 = scmp.ne.s32.totalorder %s342, %s356
    %p358 = scmp.eq.s32.totalorder %s28, 0
    %p359 = por %p357, %p358
    %s361 = sadd.s32 %s360, 1
    %p364 = scmp.eq.s32.totalorder %s22, 1
    %p365 = scmp.ne.s32.totalorder %s360, %s362
    %p366 = scmp.eq.s32.totalorder %s22, 0
    %p367 = por %p365, %p366
    %p368 = scmp.ne.s32.totalorder %s360, %s362
    %p369 = scmp.eq.s32.totalorder %s27, 1
    %p370 = por %p368, %p369
    %p371 = scmp.ne.s32.totalorder %s362, %s363
    %p372 = scmp.eq.s32.totalorder %s27, 0
    %p373 = por %p371, %p372
    %p374 = scmp.ne.s32.totalorder %s362, %s363
    %p375 = scmp.eq.s32.totalorder %s28, 1
    %p376 = por %p374, %p375
    %p378 = scmp.ne.s32.totalorder %s363, %s377
    %p379 = scmp.eq.s32.totalorder %s28, 0
    %p380 = por %p378, %p379
    %s381 = ssub.s32 %s22, %s29
    %p382 = scmp.eq.s32.totalorder %s381, 0
    %s384 = sadd.s32 %s383, 1
    %s385 = scalar_select %p382, %s383, %s384
    %p388 = pneg %p382
    %p389 = scmp.eq.s32.totalorder %s22, 1
    %p390 = por %p388, %p389
    %p391 = scmp.ne.s32.totalorder %s383, %s386
    %p392 = scmp.eq.s32.totalorder %s22, 0
    %p393 = por %p391, %p392
    %p394 = scmp.ne.s32.totalorder %s383, %s386
    %p395 = scmp.eq.s32.totalorder %s27, 1
    %p396 = por %p394, %p395
    %p397 = scmp.ne.s32.totalorder %s386, %s387
    %p398 = scmp.eq.s32.totalorder %s27, 0
    %p399 = por %p397, %p398
    %p400 = scmp.ne.s32.totalorder %s386, %s387
    %p401 = scmp.eq.s32.totalorder %s28, 1
    %p402 = por %p400, %p401
    %p404 = scmp.ne.s32.totalorder %s387, %s403
    %p405 = scmp.eq.s32.totalorder %s28, 0
    %p406 = por %p404, %p405
    %p407 = scmp.le.s32.totalorder 1, %s22
    %p408 = scmp.lt.s32.totalorder %s22, 3
    %p409 = pnand %p407, %p408
    %p410 = pneg %p409
    // Predicated region
    $region9: #{tpu_custom_call.1} parent=5 // pred_check
      _
    $region10: #{tpu_custom_call.1} parent=5 // pred_check_branch
      %412 = sbr.rel (%p409) target = $region12
    $region11: #{tpu_custom_call.1} parent=5 // pred_region
      %s413 = ssub.s32 %s22, 1
      // Predicated region
      $region13: #{tpu_custom_call.1} parent=11 // pred_check
        %p414 = pneg %p121
      $region14: #{tpu_custom_call.1} parent=11 // pred_check_branch
        %416 = sbr.rel (%p414) target = $region16
      $region15: #{tpu_custom_call.1} parent=11 // pred_region
        _
      $region16: #{tpu_custom_call.1} parent=11 // pred_fallthru
        _
      // Predicated region
      $region17: #{tpu_custom_call.1} parent=11 // pred_check
        %p417 = pneg %p142
      $region18: #{tpu_custom_call.1} parent=11 // pred_check_branch
        %419 = sbr.rel (%p417) target = $region20
      $region19: #{tpu_custom_call.1} parent=11 // pred_region
        _
      $region20: #{tpu_custom_call.1} parent=11 // pred_fallthru
        _
      // Predicated region
      $region21: #{tpu_custom_call.1} parent=11 // pred_check
        %p420 = pneg %p163
      $region22: #{tpu_custom_call.1} parent=11 // pred_check_branch
        %422 = sbr.rel (%p420) target = $region24
      $region23: #{tpu_custom_call.1} parent=11 // pred_region
        _
      $region24: #{tpu_custom_call.1} parent=11 // pred_fallthru
        _
      // Predicated region
      $region25: #{tpu_custom_call.1} parent=11 // pred_check
        %p423 = pneg %p184
      $region26: #{tpu_custom_call.1} parent=11 // pred_check_branch
        %425 = sbr.rel (%p423) target = $region28
      $region27: #{tpu_custom_call.1} parent=11 // pred_region
        _
      $region28: #{tpu_custom_call.1} parent=11 // pred_fallthru
        _
      // Predicated region
      $region29: #{tpu_custom_call.1} parent=11 // pred_check
        %p426 = pneg %p205
      $region30: #{tpu_custom_call.1} parent=11 // pred_check_branch
        %428 = sbr.rel (%p426) target = $region32
      $region31: #{tpu_custom_call.1} parent=11 // pred_region
        _
      $region32: #{tpu_custom_call.1} parent=11 // pred_fallthru
        _
      // Predicated region
      $region33: #{tpu_custom_call.1} parent=11 // pred_check
        %p429 = pneg %p226
      $region34: #{tpu_custom_call.1} parent=11 // pred_check_branch
        %431 = sbr.rel (%p429) target = $region36
      $region35: #{tpu_custom_call.1} parent=11 // pred_region
        _
      $region36: #{tpu_custom_call.1} parent=11 // pred_fallthru
        _
      // Predicated region
      $region37: #{tpu_custom_call.1} parent=11 // pred_check
        %p432 = pneg %p247
      $region38: #{tpu_custom_call.1} parent=11 // pred_check_branch
        %434 = sbr.rel (%p432) target = $region40
      $region39: #{tpu_custom_call.1} parent=11 // pred_region
        _
      $region40: #{tpu_custom_call.1} parent=11 // pred_fallthru
        _
      // Predicated region
      $region41: #{tpu_custom_call.1} parent=11 // pred_check
        %p435 = pneg %p268
      $region42: #{tpu_custom_call.1} parent=11 // pred_check_branch
        %437 = sbr.rel (%p435) target = $region44
      $region43: #{tpu_custom_call.1} parent=11 // pred_region
        _
      $region44: #{tpu_custom_call.1} parent=11 // pred_fallthru
        _
      // Predicated region
      $region45: #{tpu_custom_call.1} parent=11 // pred_check
        %p438 = pneg %p289
      $region46: #{tpu_custom_call.1} parent=11 // pred_check_branch
        %440 = sbr.rel (%p438) target = $region48
      $region47: #{tpu_custom_call.1} parent=11 // pred_region
        _
      $region48: #{tpu_custom_call.1} parent=11 // pred_fallthru
        _
      // Predicated region
      $region49: #{tpu_custom_call.1} parent=11 // pred_check
        %p441 = pneg %p310
      $region50: #{tpu_custom_call.1} parent=11 // pred_check_branch
        %443 = sbr.rel (%p441) target = $region52
      $region51: #{tpu_custom_call.1} parent=11 // pred_region
        _
      $region52: #{tpu_custom_call.1} parent=11 // pred_fallthru
        _
      // Predicated region
      $region53: #{tpu_custom_call.1} parent=11 // pred_check
        %p444 = pneg %p331
      $region54: #{tpu_custom_call.1} parent=11 // pred_check_branch
        %446 = sbr.rel (%p444) target = $region56
      $region55: #{tpu_custom_call.1} parent=11 // pred_region
        _
      $region56: #{tpu_custom_call.1} parent=11 // pred_fallthru
        _
      // Predicated region
      $region57: #{tpu_custom_call.1} parent=11 // pred_check
        %p447 = pneg %p352
      $region58: #{tpu_custom_call.1} parent=11 // pred_check_branch
        %449 = sbr.rel (%p447) target = $region60
      $region59: #{tpu_custom_call.1} parent=11 // pred_region
        _
      $region60: #{tpu_custom_call.1} parent=11 // pred_fallthru
        _
      // Predicated region
      $region61: #{tpu_custom_call.1} parent=11 // pred_check
        %p450 = pneg %p373
      $region62: #{tpu_custom_call.1} parent=11 // pred_check_branch
        %452 = sbr.rel (%p450) target = $region64
      $region63: #{tpu_custom_call.1} parent=11 // pred_region
        _
      $region64: #{tpu_custom_call.1} parent=11 // pred_fallthru
        _
    $region12: #{tpu_custom_call.1} parent=5 // pred_fallthru
      _
    %p453 = scmp.lt.s32.totalorder %s22, 2
    // Predicated region
    $region65: #{tpu_custom_call.1} parent=5 // pred_check
      %p454 = pneg %p453
    $region66: #{tpu_custom_call.1} parent=5 // pred_check_branch
      %456 = sbr.rel (%p454) target = $region68
    $region67: #{tpu_custom_call.1} parent=5 // pred_region
      // Predicated region
      $region69: #{tpu_custom_call.1} parent=67 // pred_check
        %p457 = pneg %p42
      $region70: #{tpu_custom_call.1} parent=67 // pred_check_branch
        %459 = sbr.rel (%p457) target = $region72
      $region71: #{tpu_custom_call.1} parent=67 // pred_region
        %p460 = scmp.lt.s32.totalorder %s22, 1
        %s461 = scalar_select %p460, %s22, 1
        %s462 = smul.addr %s461, 8
        %s463 = smul.addr %s462, 8
        %s464 = scalar_lea.vmem %s0, %s463
      $region72: #{tpu_custom_call.1} parent=67 // pred_fallthru
        _
      // Predicated region
      $region73: #{tpu_custom_call.1} parent=67 // pred_check
        %p465 = pneg %p68
      $region74: #{tpu_custom_call.1} parent=67 // pred_check_branch
        %467 = sbr.rel (%p465) target = $region76
      $region75: #{tpu_custom_call.1} parent=67 // pred_region
        %p468 = scmp.lt.s32.totalorder %s22, 1
        %s469 = scalar_select %p468, %s22, 1
        %s470 = smul.addr %s469, 2
        %s471 = smul.addr %s470, 8
        %s472 = scalar_lea.vmem %s1, %s471
      $region76: #{tpu_custom_call.1} parent=67 // pred_fallthru
        _
      // Predicated region
      $region77: #{tpu_custom_call.1} parent=67 // pred_check
        %p473 = pneg %p94
      $region78: #{tpu_custom_call.1} parent=67 // pred_check_branch
        %475 = sbr.rel (%p473) target = $region80
      $region79: #{tpu_custom_call.1} parent=67 // pred_region
        %p476 = scmp.lt.s32.totalorder %s22, 1
        %s477 = scalar_select %p476, %s22, 1
        %s478 = smul.addr %s477, 32
        %s479 = smul.addr %s478, 8
        %s480 = scalar_lea.vmem %s2, %s479
      $region80: #{tpu_custom_call.1} parent=67 // pred_fallthru
        _
    $region68: #{tpu_custom_call.1} parent=5 // pred_fallthru
      _
    %p481 = scmp.le.s32.totalorder 1, %s22
    %p482 = scmp.lt.s32.totalorder %s22, 3
    %p483 = pnand %p481, %p482
    %p484 = pneg %p483
    // Predicated region
    $region81: #{tpu_custom_call.1} parent=5 // pred_check
      _
    $region82: #{tpu_custom_call.1} parent=5 // pred_check_branch
      %486 = sbr.rel (%p483) target = $region84
    $region83: #{tpu_custom_call.1} parent=5 // pred_region
      %s487 = ssub.s32 %s22, 1
      %p488 = scmp.lt.s32.totalorder %s27, 1
      %s489 = scalar_select %p488, %s27, 1
      %s490 = smul.addr %s489, 8
      %s491 = smul.addr %s490, 8
      %s492 = scalar_lea.vmem %s0, %s491
      %p493 = pneg %p48
      %p494 = pneg %p45
      %p495 = scmp.lt.s32.totalorder %s27, 1
      %s496 = scalar_select %p495, %s27, 1
      %s497 = smul.addr %s496, 2
      %s498 = smul.addr %s497, 8
      %s499 = scalar_lea.vmem %s1, %s498
      %p500 = pneg %p74
      %p501 = pneg %p71
      %p502 = scmp.lt.s32.totalorder %s27, 1
      %s503 = scalar_select %p502, %s27, 1
      %s504 = smul.addr %s503, 32
      %s505 = smul.addr %s504, 8
      %s506 = scalar_lea.vmem %s2, %s505
      %p507 = pneg %p100
      %p508 = pneg %p97
      %p509 = pneg %p121
      %p510 = pneg %p118
      %p511 = pneg %p142
      %p512 = pneg %p139
      %p513 = pneg %p163
      %p514 = pneg %p160
      %p515 = pneg %p184
      %p516 = pneg %p181
      %p517 = pneg %p205
      %p518 = pneg %p202
      %p519 = pneg %p226
      %p520 = pneg %p223
      %p521 = pneg %p247
      %p522 = pneg %p244
      %p523 = pneg %p268
      %p524 = pneg %p265
      %p525 = pneg %p289
      %p526 = pneg %p286
      %p527 = pneg %p310
      %p528 = pneg %p307
      %p529 = pneg %p331
      %p530 = pneg %p328
      %p531 = pneg %p352
      %p532 = pneg %p349
      %p533 = pneg %p373
      %p534 = pneg %p370
      %p535 = pneg %p399
      %p536 = pneg %p396
      %p537 = scmp.lt.s32.totalorder %s27, 1
      %s538 = scalar_select %p537, %s27, 1
      %s539 = smul.addr %s538, 8
      %s540 = smul.addr %s539, 8
      %s541 = scalar_lea.vmem %s16, %s540
      %p542 = scmp.lt.s32.totalorder %s27, 1
      %s543 = scalar_select %p542, %s27, 1
      %s544 = smul.addr %s543, 8
      %s545 = smul.addr %s544, 8
      %s546 = scalar_lea.vmem %s0, %s545
      %p547 = scmp.lt.s32.totalorder %s27, 1
      %s548 = scalar_select %p547, %s27, 1
      %s549 = smul.addr %s548, 2
      %s550 = smul.addr %s549, 8
      %s551 = scalar_lea.vmem %s1, %s550
      %p552 = scmp.lt.s32.totalorder %s27, 1
      %s553 = scalar_select %p552, %s27, 1
      %s554 = smul.addr %s553, 32
      %s555 = smul.addr %s554, 8
      %s556 = scalar_lea.vmem %s2, %s555
      %p557 = scmp.lt.s32.totalorder %s27, 1
      %s558 = scalar_select %p557, %s27, 1
      %s559 = smul.addr %s558, 8
      %s560 = smul.addr %s559, 8
      %s561 = scalar_lea.vmem %s16, %s560
      %v562 = vld [vmem:[%s546] sm:$0xff]
      %v563 = vld [vmem:[%s546 + $0x8] sm:$0xff]
      %v564 = vld [vmem:[%s546 + $0x10] sm:$0xff]
      %v565 = vld [vmem:[%s546 + $0x18] sm:$0xff]
      %v566 = vld [vmem:[%s546 + $0x20] sm:$0xff]
      %v567 = vld [vmem:[%s546 + $0x28] sm:$0xff]
      %v568 = vld [vmem:[%s546 + $0x30] sm:$0xff]
      %v569 = vld [vmem:[%s546 + $0x38] sm:$0xff]
      %v570 = vld [vmem:[%s4] sm:$0xff]
      %v571 = vld [vmem:[%s4 + $0x8] sm:$0xff]
      %v572 = vld [vmem:[%s4 + $0x10] sm:$0xff]
      %v573 = vld [vmem:[%s4 + $0x18] sm:$0xff]
      %v574 = vld [vmem:[%s5] sm:$0x1]
      %v576 = vlaneseq
      %v577 = vshrl.u32 %v576, 7
      %v578 = vsub.s32 0, %v577
      %v579 = vrot.slane %v574, %v578
      %vm581 = vcmask 261120
      %v583 = vsel %vm581, %v562, 0
      %v586 = vsel %vm581, %v563, 0
      %v589 = vsel %vm581, %v564, 0
      %v592 = vsel %vm581, %v565, 0
      %v595 = vsel %vm581, %v566, 0
      %v598 = vsel %vm581, %v567, 0
      %v601 = vsel %vm581, %v568, 0
      %v604 = vsel %vm581, %v569, 0
      %606 = vmatprep.subr.mxu0 0.0
      %607 = vmatpush1.msra.mxu0 0.0
      %608 = vmatprep.subr.mxu0 0.0
      %609 = vmatpush1.msra.mxu0 0.0
      %610 = vmatprep.subr.mxu0 0.0
      %611 = vmatpush1.msra.mxu0 0.0
      %612 = vmatprep.subr.mxu0 0.0
      %613 = vmatpush1.msra.mxu0 0.0
      %614 = vmatprep.subr.mxu0 0.0
      %615 = vmatpush1.msra.mxu0 0.0
      %616 = vmatprep.subr.mxu0 0.0
      %617 = vmatpush1.msra.mxu0 0.0
      %618 = vmatprep.subr.mxu0 0.0
      %619 = vmatpush1.msra.mxu0 0.0
      %620 = vmatprep.subr.mxu0 0.0
      %621 = vmatpush1.msra.mxu0 0.0
      %622 = vmatprep.subr.mxu0 0.0
      %623 = vmatpush1.msra.mxu0 0.0
      %624 = vmatprep.subr.mxu0 0.0
      %625 = vmatpush1.msra.mxu0 0.0
      %626 = vmatprep.subr.mxu0 0.0
      %627 = vmatpush1.msra.mxu0 0.0
      %628 = vmatprep.subr.mxu0 0.0
      %629 = vmatpush1.msra.mxu0 0.0
      %630 = vmatprep.subr.mxu0 0.0
      %631 = vmatpush1.msra.mxu0 %v573
      %632 = vmatprep.subr.mxu0 0.0
      %633 = vmatpush1.msra.mxu0 %v572
      %634 = vmatprep.subr.mxu0 0.0
      %635 = vmatpush1.msra.mxu0 %v571
      %636 = vmatprep.subr.mxu0 0.0
      %637 = vmatpush1.msra.mxu0 %v570
      %638 = vmatprep.subr.mxu0 0.0
      %639 = vmatpush2.msra.mxu0 0.0
      %640 = vmatprep.subr.mxu0 0.0
      %641 = vmatpush2.msra.mxu0 0.0
      %642 = vmatprep.subr.mxu0 0.0
      %643 = vmatpush2.msra.mxu0 0.0
      %644 = vmatprep.subr.mxu0 0.0
      %645 = vmatpush2.msra.mxu0 0.0
      %646 = vmatprep.subr.mxu0 0.0
      %647 = vmatpush2.msra.mxu0 0.0
      %648 = vmatprep.subr.mxu0 0.0
      %649 = vmatpush2.msra.mxu0 0.0
      %650 = vmatprep.subr.mxu0 0.0
      %651 = vmatpush2.msra.mxu0 0.0
      %652 = vmatprep.subr.mxu0 0.0
      %653 = vmatpush2.msra.mxu0 0.0
      %654 = vmatprep.subr.mxu0 0.0
      %655 = vmatpush2.msra.mxu0 0.0
      %656 = vmatprep.subr.mxu0 0.0
      %657 = vmatpush2.msra.mxu0 0.0
      %658 = vmatprep.subr.mxu0 0.0
      %659 = vmatpush2.msra.mxu0 0.0
      %660 = vmatprep.subr.mxu0 0.0
      %661 = vmatpush2.msra.mxu0 0.0
      %662 = vmatprep.subr.mxu0 0.0
      %663 = vmatpush2.msra.mxu0 0.0
      %664 = vmatprep.subr.mxu0 0.0
      %665 = vmatpush2.msra.mxu0 0.0
      %666 = vmatprep.subr.mxu0 0.0
      %667 = vmatpush2.msra.mxu0 0.0
      %668 = vmatprep.subr.mxu0 0.0
      %669 = vmatpush2.msra.mxu0 0.0
      %670 = vmatprep.mubr.f32.mxu0 0.0
      %671 = vmatmul.mubr.f32.gmra.mxu0 %v583
      %v672 = vpop.f32.mrf.mxu0
      %v673 = vadd.f32 %v579, %v672
      %v674 = vpop.f32.mrf.mxu0
      %675 = vmatprep.mubr.f32.mxu0 0.0
      %676 = vmatmul.mubr.f32.gmra.mxu0 %v586
      %v677 = vpop.f32.mrf.mxu0
      %v678 = vadd.f32 %v579, %v677
      %v679 = vpop.f32.mrf.mxu0
      %680 = vmatprep.mubr.f32.mxu0 0.0
      %681 = vmatmul.mubr.f32.gmra.mxu0 %v589
      %v682 = vpop.f32.mrf.mxu0
      %v683 = vadd.f32 %v579, %v682
      %v684 = vpop.f32.mrf.mxu0
      %685 = vmatprep.mubr.f32.mxu0 0.0
      %686 = vmatmul.mubr.f32.gmra.mxu0 %v592
      %v687 = vpop.f32.mrf.mxu0
      %v688 = vadd.f32 %v579, %v687
      %v689 = vpop.f32.mrf.mxu0
      %690 = vmatprep.mubr.f32.mxu0 0.0
      %691 = vmatmul.mubr.f32.gmra.mxu0 %v595
      %v692 = vpop.f32.mrf.mxu0
      %v693 = vadd.f32 %v579, %v692
      %v694 = vpop.f32.mrf.mxu0
      %695 = vmatprep.mubr.f32.mxu0 0.0
      %696 = vmatmul.mubr.f32.gmra.mxu0 %v598
      %v697 = vpop.f32.mrf.mxu0
      %v698 = vadd.f32 %v579, %v697
      %v699 = vpop.f32.mrf.mxu0
      %700 = vmatprep.mubr.f32.mxu0 0.0
      %701 = vmatmul.mubr.f32.gmra.mxu0 %v601
      %v702 = vpop.f32.mrf.mxu0
      %v703 = vadd.f32 %v579, %v702
      %v704 = vpop.f32.mrf.mxu0
      %705 = vmatprep.mubr.f32.mxu0 0.0
      %706 = vmatmul.mubr.f32.gmra.mxu0 %v604
      %v707 = vpop.f32.mrf.mxu0
      %v708 = vadd.f32 %v579, %v707
      %v709 = vpop.f32.mrf.mxu0
      %710 = vdwg.mxu0
      %v711 = vld [vmem:[%s551] sm:$0xff]
      %v712 = vld [vmem:[%s551 + $0x8] sm:$0xff]
      %v713 = vld [vmem:[%s6] sm:$0xff]
      %v714 = vld [vmem:[%s6 + $0x8] sm:$0xff]
      %v715 = vld [vmem:[%s7] sm:$0x1]
      %v717 = vlaneseq
      %v718 = vshrl.u32 %v717, 7
      %v719 = vsub.s32 0, %v718
      %v720 = vrot.slane %v715, %v719
      %vm722 = vcmask 130048
      %v724 = vsel %vm722, %v711, 0
      %v727 = vsel %vm722, %v712, 0
      %729 = vmatprep.subr.mxu0 0.0
      %730 = vmatpush1.msra.mxu0 0.0
      %731 = vmatprep.subr.mxu0 0.0
      %732 = vmatpush1.msra.mxu0 0.0
      %733 = vmatprep.subr.mxu0 0.0
      %734 = vmatpush1.msra.mxu0 0.0
      %735 = vmatprep.subr.mxu0 0.0
      %736 = vmatpush1.msra.mxu0 0.0
      %737 = vmatprep.subr.mxu0 0.0
      %738 = vmatpush1.msra.mxu0 0.0
      %739 = vmatprep.subr.mxu0 0.0
      %740 = vmatpush1.msra.mxu0 0.0
      %741 = vmatprep.subr.mxu0 0.0
      %742 = vmatpush1.msra.mxu0 0.0
      %743 = vmatprep.subr.mxu0 0.0
      %744 = vmatpush1.msra.mxu0 0.0
      %745 = vmatprep.subr.mxu0 0.0
      %746 = vmatpush1.msra.mxu0 0.0
      %747 = vmatprep.subr.mxu0 0.0
      %748 = vmatpush1.msra.mxu0 0.0
      %749 = vmatprep.subr.mxu0 0.0
      %750 = vmatpush1.msra.mxu0 0.0
      %751 = vmatprep.subr.mxu0 0.0
      %752 = vmatpush1.msra.mxu0 0.0
      %753 = vmatprep.subr.mxu0 0.0
      %754 = vmatpush1.msra.mxu0 0.0
      %755 = vmatprep.subr.mxu0 0.0
      %756 = vmatpush1.msra.mxu0 0.0
      %757 = vmatprep.subr.mxu0 0.0
      %758 = vmatpush1.msra.mxu0 %v714
      %759 = vmatprep.subr.mxu0 0.0
      %760 = vmatpush1.msra.mxu0 %v713
      %761 = vmatprep.subr.mxu0 0.0
      %762 = vmatpush2.msra.mxu0 0.0
      %763 = vmatprep.subr.mxu0 0.0
      %764 = vmatpush2.msra.mxu0 0.0
      %765 = vmatprep.subr.mxu0 0.0
      %766 = vmatpush2.msra.mxu0 0.0
      %767 = vmatprep.subr.mxu0 0.0
      %768 = vmatpush2.msra.mxu0 0.0
      %769 = vmatprep.subr.mxu0 0.0
      %770 = vmatpush2.msra.mxu0 0.0
      %771 = vmatprep.subr.mxu0 0.0
      %772 = vmatpush2.msra.mxu0 0.0
      %773 = vmatprep.subr.mxu0 0.0
      %774 = vmatpush2.msra.mxu0 0.0
      %775 = vmatprep.subr.mxu0 0.0
      %776 = vmatpush2.msra.mxu0 0.0
      %777 = vmatprep.subr.mxu0 0.0
      %778 = vmatpush2.msra.mxu0 0.0
      %779 = vmatprep.subr.mxu0 0.0
      %780 = vmatpush2.msra.mxu0 0.0
      %781 = vmatprep.subr.mxu0 0.0
      %782 = vmatpush2.msra.mxu0 0.0
      %783 = vmatprep.subr.mxu0 0.0
      %784 = vmatpush2.msra.mxu0 0.0
      %785 = vmatprep.subr.mxu0 0.0
      %786 = vmatpush2.msra.mxu0 0.0
      %787 = vmatprep.subr.mxu0 0.0
      %788 = vmatpush2.msra.mxu0 0.0
      %789 = vmatprep.subr.mxu0 0.0
      %790 = vmatpush2.msra.mxu0 0.0
      %791 = vmatprep.subr.mxu0 0.0
      %792 = vmatpush2.msra.mxu0 0.0
      %793 = vmatprep.mubr.f32.mxu0 0.0
      %794 = vmatmul.mubr.f32.gmra.mxu0 %v724
      %v795 = vpop.f32.mrf.mxu0
      %v796 = vadd.f32 %v720, %v795
      %v797 = vpop.f32.mrf.mxu0
      %798 = vmatprep.mubr.f32.mxu0 0.0
      %799 = vmatmul.mubr.f32.gmra.mxu0 %v727
      %v800 = vpop.f32.mrf.mxu0
      %v801 = vadd.f32 %v720, %v800
      %v802 = vpop.f32.mrf.mxu0
      %803 = vdwg.mxu0
      %v804 = vld [vmem:[%s556] sm:$0xff]
      %v805 = vld [vmem:[%s556 + $0x8] sm:$0xff]
      %v806 = vld [vmem:[%s556 + $0x10] sm:$0xff]
      %v807 = vld [vmem:[%s556 + $0x18] sm:$0xff]
      %v808 = vld [vmem:[%s556 + $0x20] sm:$0xff]
      %v809 = vld [vmem:[%s556 + $0x28] sm:$0xff]
      %v810 = vld [vmem:[%s556 + $0x30] sm:$0xff]
      %v811 = vld [vmem:[%s556 + $0x38] sm:$0xff]
      %v812 = vld [vmem:[%s556 + $0x40] sm:$0xff]
      %v813 = vld [vmem:[%s556 + $0x48] sm:$0xff]
      %v814 = vld [vmem:[%s556 + $0x50] sm:$0xff]
      %v815 = vld [vmem:[%s556 + $0x58] sm:$0xff]
      %v816 = vld [vmem:[%s556 + $0x60] sm:$0xff]
      %v817 = vld [vmem:[%s556 + $0x68] sm:$0xff]
      %v818 = vld [vmem:[%s556 + $0x70] sm:$0xff]
      %v819 = vld [vmem:[%s556 + $0x78] sm:$0xff]
      %v820 = vld [vmem:[%s556 + $0x80] sm:$0xff]
      %v821 = vld [vmem:[%s556 + $0x88] sm:$0xff]
      %v822 = vld [vmem:[%s556 + $0x90] sm:$0xff]
      %v823 = vld [vmem:[%s556 + $0x98] sm:$0xff]
      %v824 = vld [vmem:[%s556 + $0xa0] sm:$0xff]
      %v825 = vld [vmem:[%s556 + $0xa8] sm:$0xff]
      %v826 = vld [vmem:[%s556 + $0xb0] sm:$0xff]
      %v827 = vld [vmem:[%s556 + $0xb8] sm:$0xff]
      %v828 = vld [vmem:[%s556 + $0xc0] sm:$0xff]
      %v829 = vld [vmem:[%s556 + $0xc8] sm:$0xff]
      %v830 = vld [vmem:[%s556 + $0xd0] sm:$0xff]
      %v831 = vld [vmem:[%s556 + $0xd8] sm:$0xff]
      %v832 = vld [vmem:[%s556 + $0xe0] sm:$0xff]
      %v833 = vld [vmem:[%s556 + $0xe8] sm:$0xff]
      %v834 = vld [vmem:[%s556 + $0xf0] sm:$0xff]
      %v835 = vld [vmem:[%s556 + $0xf8] sm:$0xff]
      %v836 = vld [vmem:[%s8] sm:$0xff]
      %v837 = vld [vmem:[%s8 + $0x8] sm:$0xff]
      %v838 = vld [vmem:[%s8 + $0x10] sm:$0xff]
      %v839 = vld [vmem:[%s9] sm:$0x1]
      %v841 = vlaneseq
      %v842 = vshrl.u32 %v841, 7
      %v843 = vsub.s32 0, %v842
      %v844 = vrot.slane %v839, %v843
      %vm846 = vcmask 195584
      %v848 = vsel %vm846, %v804, 0
      %v851 = vsel %vm846, %v805, 0
      %v854 = vsel %vm846, %v806, 0
      %v857 = vsel %vm846, %v807, 0
      %v860 = vsel %vm846, %v808, 0
      %v863 = vsel %vm846, %v809, 0
      %v866 = vsel %vm846, %v810, 0
      %v869 = vsel %vm846, %v811, 0
      %v872 = vsel %vm846, %v812, 0
      %v875 = vsel %vm846, %v813, 0
      %v878 = vsel %vm846, %v814, 0
      %v881 = vsel %vm846, %v815, 0
      %v884 = vsel %vm846, %v816, 0
      %v887 = vsel %vm846, %v817, 0
      %v890 = vsel %vm846, %v818, 0
      %v893 = vsel %vm846, %v819, 0
      %v896 = vsel %vm846, %v820, 0
      %v899 = vsel %vm846, %v821, 0
      %v902 = vsel %vm846, %v822, 0
      %v905 = vsel %vm846, %v823, 0
      %v908 = vsel %vm846, %v824, 0
      %v911 = vsel %vm846, %v825, 0
      %v914 = vsel %vm846, %v826, 0
      %v917 = vsel %vm846, %v827, 0
      %v920 = vsel %vm846, %v828, 0
      %v923 = vsel %vm846, %v829, 0
      %v926 = vsel %vm846, %v830, 0
      %v929 = vsel %vm846, %v831, 0
      %v932 = vsel %vm846, %v832, 0
      %v935 = vsel %vm846, %v833, 0
      %v938 = vsel %vm846, %v834, 0
      %v941 = vsel %vm846, %v835, 0
      %943 = vmatprep.subr.mxu0 0.0
      %944 = vmatpush1.msra.mxu0 0.0
      %945 = vmatprep.subr.mxu0 0.0
      %946 = vmatpush1.msra.mxu0 0.0
      %947 = vmatprep.subr.mxu0 0.0
      %948 = vmatpush1.msra.mxu0 0.0
      %949 = vmatprep.subr.mxu0 0.0
      %950 = vmatpush1.msra.mxu0 0.0
      %951 = vmatprep.subr.mxu0 0.0
      %952 = vmatpush1.msra.mxu0 0.0
      %953 = vmatprep.subr.mxu0 0.0
      %954 = vmatpush1.msra.mxu0 0.0
      %955 = vmatprep.subr.mxu0 0.0
      %956 = vmatpush1.msra.mxu0 0.0
      %957 = vmatprep.subr.mxu0 0.0
      %958 = vmatpush1.msra.mxu0 0.0
      %959 = vmatprep.subr.mxu0 0.0
      %960 = vmatpush1.msra.mxu0 0.0
      %961 = vmatprep.subr.mxu0 0.0
      %962 = vmatpush1.msra.mxu0 0.0
      %963 = vmatprep.subr.mxu0 0.0
      %964 = vmatpush1.msra.mxu0 0.0
      %965 = vmatprep.subr.mxu0 0.0
      %966 = vmatpush1.msra.mxu0 0.0
      %967 = vmatprep.subr.mxu0 0.0
      %968 = vmatpush1.msra.mxu0 0.0
      %969 = vmatprep.subr.mxu0 0.0
      %970 = vmatpush1.msra.mxu0 %v838
      %971 = vmatprep.subr.mxu0 0.0
      %972 = vmatpush1.msra.mxu0 %v837
      %973 = vmatprep.subr.mxu0 0.0
      %974 = vmatpush1.msra.mxu0 %v836
      %975 = vmatprep.subr.mxu0 0.0
      %976 = vmatpush2.msra.mxu0 0.0
      %977 = vmatprep.subr.mxu0 0.0
      %978 = vmatpush2.msra.mxu0 0.0
      %979 = vmatprep.subr.mxu0 0.0
      %980 = vmatpush2.msra.mxu0 0.0
      %981 = vmatprep.subr.mxu0 0.0
      %982 = vmatpush2.msra.mxu0 0.0
      %983 = vmatprep.subr.mxu0 0.0
      %984 = vmatpush2.msra.mxu0 0.0
      %985 = vmatprep.subr.mxu0 0.0
      %986 = vmatpush2.msra.mxu0 0.0
      %987 = vmatprep.subr.mxu0 0.0
      %988 = vmatpush2.msra.mxu0 0.0
      %989 = vmatprep.subr.mxu0 0.0
      %990 = vmatpush2.msra.mxu0 0.0
      %991 = vmatprep.subr.mxu0 0.0
      %992 = vmatpush2.msra.mxu0 0.0
      %993 = vmatprep.subr.mxu0 0.0
      %994 = vmatpush2.msra.mxu0 0.0
      %995 = vmatprep.subr.mxu0 0.0
      %996 = vmatpush2.msra.mxu0 0.0
      %997 = vmatprep.subr.mxu0 0.0
      %998 = vmatpush2.msra.mxu0 0.0
      %999 = vmatprep.subr.mxu0 0.0
      %1000 = vmatpush2.msra.mxu0 0.0
      %1001 = vmatprep.subr.mxu0 0.0
      %1002 = vmatpush2.msra.mxu0 0.0
      %1003 = vmatprep.subr.mxu0 0.0
      %1004 = vmatpush2.msra.mxu0 0.0
      %1005 = vmatprep.subr.mxu0 0.0
      %1006 = vmatpush2.msra.mxu0 0.0
      %1007 = vmatprep.mubr.f32.mxu0 0.0
      %1008 = vmatmul.mubr.f32.gmra.mxu0 %v848
      %v1009 = vpop.f32.mrf.mxu0
      %v1010 = vadd.f32 %v844, %v1009
      %v1011 = vpop.f32.mrf.mxu0
      %1012 = vmatprep.mubr.f32.mxu0 0.0
      %1013 = vmatmul.mubr.f32.gmra.mxu0 %v851
      %v1014 = vpop.f32.mrf.mxu0
      %v1015 = vadd.f32 %v844, %v1014
      %v1016 = vpop.f32.mrf.mxu0
      %1017 = vmatprep.mubr.f32.mxu0 0.0
      %1018 = vmatmul.mubr.f32.gmra.mxu0 %v854
      %v1019 = vpop.f32.mrf.mxu0
      %v1020 = vadd.f32 %v844, %v1019
      %v1021 = vpop.f32.mrf.mxu0
      %1022 = vmatprep.mubr.f32.mxu0 0.0
      %1023 = vmatmul.mubr.f32.gmra.mxu0 %v857
      %v1024 = vpop.f32.mrf.mxu0
      %v1025 = vadd.f32 %v844, %v1024
      %v1026 = vpop.f32.mrf.mxu0
      %1027 = vmatprep.mubr.f32.mxu0 0.0
      %1028 = vmatmul.mubr.f32.gmra.mxu0 %v860
      %v1029 = vpop.f32.mrf.mxu0
      %v1030 = vadd.f32 %v844, %v1029
      %v1031 = vpop.f32.mrf.mxu0
      %1032 = vmatprep.mubr.f32.mxu0 0.0
      %1033 = vmatmul.mubr.f32.gmra.mxu0 %v863
      %v1034 = vpop.f32.mrf.mxu0
      %v1035 = vadd.f32 %v844, %v1034
      %v1036 = vpop.f32.mrf.mxu0
      %1037 = vmatprep.mubr.f32.mxu0 0.0
      %1038 = vmatmul.mubr.f32.gmra.mxu0 %v866
      %v1039 = vpop.f32.mrf.mxu0
      %v1040 = vadd.f32 %v844, %v1039
      %v1041 = vpop.f32.mrf.mxu0
      %1042 = vmatprep.mubr.f32.mxu0 0.0
      %1043 = vmatmul.mubr.f32.gmra.mxu0 %v869
      %v1044 = vpop.f32.mrf.mxu0
      %v1045 = vadd.f32 %v844, %v1044
      %v1046 = vpop.f32.mrf.mxu0
      %1047 = vmatprep.mubr.f32.mxu0 0.0
      %1048 = vmatmul.mubr.f32.gmra.mxu0 %v872
      %v1049 = vpop.f32.mrf.mxu0
      %v1050 = vadd.f32 %v844, %v1049
      %v1051 = vpop.f32.mrf.mxu0
      %1052 = vmatprep.mubr.f32.mxu0 0.0
      %1053 = vmatmul.mubr.f32.gmra.mxu0 %v875
      %v1054 = vpop.f32.mrf.mxu0
      %v1055 = vadd.f32 %v844, %v1054
      %v1056 = vpop.f32.mrf.mxu0
      %1057 = vmatprep.mubr.f32.mxu0 0.0
      %1058 = vmatmul.mubr.f32.gmra.mxu0 %v878
      %v1059 = vpop.f32.mrf.mxu0
      %v1060 = vadd.f32 %v844, %v1059
      %v1061 = vpop.f32.mrf.mxu0
      %1062 = vmatprep.mubr.f32.mxu0 0.0
      %1063 = vmatmul.mubr.f32.gmra.mxu0 %v881
      %v1064 = vpop.f32.mrf.mxu0
      %v1065 = vadd.f32 %v844, %v1064
      %v1066 = vpop.f32.mrf.mxu0
      %1067 = vmatprep.mubr.f32.mxu0 0.0
      %1068 = vmatmul.mubr.f32.gmra.mxu0 %v884
      %v1069 = vpop.f32.mrf.mxu0
      %v1070 = vadd.f32 %v844, %v1069
      %v1071 = vpop.f32.mrf.mxu0
      %1072 = vmatprep.mubr.f32.mxu0 0.0
      %1073 = vmatmul.mubr.f32.gmra.mxu0 %v887
      %v1074 = vpop.f32.mrf.mxu0
      %v1075 = vadd.f32 %v844, %v1074
      %v1076 = vpop.f32.mrf.mxu0
      %1077 = vmatprep.mubr.f32.mxu0 0.0
      %1078 = vmatmul.mubr.f32.gmra.mxu0 %v890
      %v1079 = vpop.f32.mrf.mxu0
      %v1080 = vadd.f32 %v844, %v1079
      %v1081 = vpop.f32.mrf.mxu0
      %1082 = vmatprep.mubr.f32.mxu0 0.0
      %1083 = vmatmul.mubr.f32.gmra.mxu0 %v893
      %v1084 = vpop.f32.mrf.mxu0
      %v1085 = vadd.f32 %v844, %v1084
      %v1086 = vpop.f32.mrf.mxu0
      %1087 = vmatprep.mubr.f32.mxu0 0.0
      %1088 = vmatmul.mubr.f32.gmra.mxu0 %v896
      %v1089 = vpop.f32.mrf.mxu0
      %v1090 = vadd.f32 %v844, %v1089
      %v1091 = vpop.f32.mrf.mxu0
      %1092 = vmatprep.mubr.f32.mxu0 0.0
      %1093 = vmatmul.mubr.f32.gmra.mxu0 %v899
      %v1094 = vpop.f32.mrf.mxu0
      %v1095 = vadd.f32 %v844, %v1094
      %v1096 = vpop.f32.mrf.mxu0
      %1097 = vmatprep.mubr.f32.mxu0 0.0
      %1098 = vmatmul.mubr.f32.gmra.mxu0 %v902
      %v1099 = vpop.f32.mrf.mxu0
      %v1100 = vadd.f32 %v844, %v1099
      %v1101 = vpop.f32.mrf.mxu0
      %1102 = vmatprep.mubr.f32.mxu0 0.0
      %1103 = vmatmul.mubr.f32.gmra.mxu0 %v905
      %v1104 = vpop.f32.mrf.mxu0
      %v1105 = vadd.f32 %v844, %v1104
      %v1106 = vpop.f32.mrf.mxu0
      %1107 = vmatprep.mubr.f32.mxu0 0.0
      %1108 = vmatmul.mubr.f32.gmra.mxu0 %v908
      %v1109 = vpop.f32.mrf.mxu0
      %v1110 = vadd.f32 %v844, %v1109
      %v1111 = vpop.f32.mrf.mxu0
      %1112 = vmatprep.mubr.f32.mxu0 0.0
      %1113 = vmatmul.mubr.f32.gmra.mxu0 %v911
      %v1114 = vpop.f32.mrf.mxu0
      %v1115 = vadd.f32 %v844, %v1114
      %v1116 = vpop.f32.mrf.mxu0
      %1117 = vmatprep.mubr.f32.mxu0 0.0
      %1118 = vmatmul.mubr.f32.gmra.mxu0 %v914
      %v1119 = vpop.f32.mrf.mxu0
      %v1120 = vadd.f32 %v844, %v1119
      %v1121 = vpop.f32.mrf.mxu0
      %1122 = vmatprep.mubr.f32.mxu0 0.0
      %1123 = vmatmul.mubr.f32.gmra.mxu0 %v917
      %v1124 = vpop.f32.mrf.mxu0
      %v1125 = vadd.f32 %v844, %v1124
      %v1126 = vpop.f32.mrf.mxu0
      %1127 = vmatprep.mubr.f32.mxu0 0.0
      %1128 = vmatmul.mubr.f32.gmra.mxu0 %v920
      %v1129 = vpop.f32.mrf.mxu0
      %v1130 = vadd.f32 %v844, %v1129
      %v1131 = vpop.f32.mrf.mxu0
      %1132 = vmatprep.mubr.f32.mxu0 0.0
      %1133 = vmatmul.mubr.f32.gmra.mxu0 %v923
      %v1134 = vpop.f32.mrf.mxu0
      %v1135 = vadd.f32 %v844, %v1134
      %v1136 = vpop.f32.mrf.mxu0
      %1137 = vmatprep.mubr.f32.mxu0 0.0
      %1138 = vmatmul.mubr.f32.gmra.mxu0 %v926
      %v1139 = vpop.f32.mrf.mxu0
      %v1140 = vadd.f32 %v844, %v1139
      %v1141 = vpop.f32.mrf.mxu0
      %1142 = vmatprep.mubr.f32.mxu0 0.0
      %1143 = vmatmul.mubr.f32.gmra.mxu0 %v929
      %v1144 = vpop.f32.mrf.mxu0
      %v1145 = vadd.f32 %v844, %v1144
      %v1146 = vpop.f32.mrf.mxu0
      %1147 = vmatprep.mubr.f32.mxu0 0.0
      %1148 = vmatmul.mubr.f32.gmra.mxu0 %v932
      %v1149 = vpop.f32.mrf.mxu0
      %v1150 = vadd.f32 %v844, %v1149
      %v1151 = vpop.f32.mrf.mxu0
      %1152 = vmatprep.mubr.f32.mxu0 0.0
      %1153 = vmatmul.mubr.f32.gmra.mxu0 %v935
      %v1154 = vpop.f32.mrf.mxu0
      %v1155 = vadd.f32 %v844, %v1154
      %v1156 = vpop.f32.mrf.mxu0
      %1157 = vmatprep.mubr.f32.mxu0 0.0
      %1158 = vmatmul.mubr.f32.gmra.mxu0 %v938
      %v1159 = vpop.f32.mrf.mxu0
      %v1160 = vadd.f32 %v844, %v1159
      %v1161 = vpop.f32.mrf.mxu0
      %1162 = vmatprep.mubr.f32.mxu0 0.0
      %1163 = vmatmul.mubr.f32.gmra.mxu0 %v941
      %v1164 = vpop.f32.mrf.mxu0
      %v1165 = vadd.f32 %v844, %v1164
      %v1166 = vpop.f32.mrf.mxu0
      %1167 = vdwg.mxu0
      %v1168 = vld [vmem:[%s3] sm:$0xff]
      %v1169 = vld [vmem:[%s3 + $0x8] sm:$0xff]
      %v1170 = vld [vmem:[%s3 + $0x10] sm:$0xff]
      %v1171 = vld [vmem:[%s3 + $0x18] sm:$0xff]
      %v1172 = vld [vmem:[%s3 + $0x20] sm:$0xff]
      %v1173 = vld [vmem:[%s3 + $0x28] sm:$0xff]
      %v1174 = vld [vmem:[%s3 + $0x30] sm:$0xff]
      %v1175 = vld [vmem:[%s3 + $0x38] sm:$0xff]
      %v1176 = vld [vmem:[%s3 + $0x40] sm:$0xff]
      %v1177 = vld [vmem:[%s3 + $0x48] sm:$0xff]
      %v1178 = vld [vmem:[%s3 + $0x50] sm:$0xff]
      %v1179 = vld [vmem:[%s3 + $0x58] sm:$0xff]
      %v1180 = vld [vmem:[%s3 + $0x60] sm:$0xff]
      %v1181 = vld [vmem:[%s3 + $0x68] sm:$0xff]
      %v1182 = vld [vmem:[%s3 + $0x70] sm:$0xff]
      %v1183 = vld [vmem:[%s3 + $0x78] sm:$0xff]
      %v1184 = vld [vmem:[%s3 + $0x80] sm:$0xff]
      %v1185 = vld [vmem:[%s3 + $0x88] sm:$0xff]
      %v1186 = vld [vmem:[%s3 + $0x90] sm:$0xff]
      %v1187 = vld [vmem:[%s3 + $0x98] sm:$0xff]
      %v1188 = vld [vmem:[%s3 + $0xa0] sm:$0xff]
      %v1189 = vld [vmem:[%s3 + $0xa8] sm:$0xff]
      %v1190 = vld [vmem:[%s3 + $0xb0] sm:$0xff]
      %v1191 = vld [vmem:[%s3 + $0xb8] sm:$0xff]
      %vm1192 = vcmask 64512
      %v1194 = vsel %vm1192, %v673, 0
      %v1197 = vsel %vm1192, %v678, 0
      %v1200 = vsel %vm1192, %v683, 0
      %v1203 = vsel %vm1192, %v688, 0
      %v1206 = vsel %vm1192, %v693, 0
      %v1209 = vsel %vm1192, %v698, 0
      %v1212 = vsel %vm1192, %v703, 0
      %v1215 = vsel %vm1192, %v708, 0
      %v1218 = vsel %vm1192, %v796, 0
      %v1221 = vsel %vm1192, %v801, 0
      %v1224 = vsel %vm1192, %v1010, 0
      %v1227 = vsel %vm1192, %v1015, 0
      %v1230 = vsel %vm1192, %v1020, 0
      %v1233 = vsel %vm1192, %v1025, 0
      %v1236 = vsel %vm1192, %v1030, 0
      %v1239 = vsel %vm1192, %v1035, 0
      %v1242 = vsel %vm1192, %v1040, 0
      %v1245 = vsel %vm1192, %v1045, 0
      %v1248 = vsel %vm1192, %v1050, 0
      %v1251 = vsel %vm1192, %v1055, 0
      %v1254 = vsel %vm1192, %v1060, 0
      %v1257 = vsel %vm1192, %v1065, 0
      %v1260 = vsel %vm1192, %v1070, 0
      %v1263 = vsel %vm1192, %v1075, 0
      %v1266 = vsel %vm1192, %v1080, 0
      %v1269 = vsel %vm1192, %v1085, 0
      %v1272 = vsel %vm1192, %v1090, 0
      %v1275 = vsel %vm1192, %v1095, 0
      %v1278 = vsel %vm1192, %v1100, 0
      %v1281 = vsel %vm1192, %v1105, 0
      %v1284 = vsel %vm1192, %v1110, 0
      %v1287 = vsel %vm1192, %v1115, 0
      %v1290 = vsel %vm1192, %v1120, 0
      %v1293 = vsel %vm1192, %v1125, 0
      %v1296 = vsel %vm1192, %v1130, 0
      %v1299 = vsel %vm1192, %v1135, 0
      %v1302 = vsel %vm1192, %v1140, 0
      %v1305 = vsel %vm1192, %v1145, 0
      %v1308 = vsel %vm1192, %v1150, 0
      %v1311 = vsel %vm1192, %v1155, 0
      %v1314 = vsel %vm1192, %v1160, 0
      %v1317 = vsel %vm1192, %v1165, 0
      %1319 = vmatprep.subr.mxu0 0.0
      %1320 = vmatpush1.xpose.msra.mxu0 %v1263
      %1321 = vmatprep.subr.mxu0 0.0
      %1322 = vmatpush1.xpose.msra.mxu0 %v1260
      %1323 = vmatprep.subr.mxu0 0.0
      %1324 = vmatpush1.xpose.msra.mxu0 %v1257
      %1325 = vmatprep.subr.mxu0 0.0
      %1326 = vmatpush1.xpose.msra.mxu0 %v1254
      %1327 = vmatprep.subr.mxu0 0.0
      %1328 = vmatpush1.xpose.msra.mxu0 %v1251
      %1329 = vmatprep.subr.mxu0 0.0
      %1330 = vmatpush1.xpose.msra.mxu0 %v1248
      %1331 = vmatprep.subr.mxu0 0.0
      %1332 = vmatpush1.xpose.msra.mxu0 %v1245
      %1333 = vmatprep.subr.mxu0 0.0
      %1334 = vmatpush1.xpose.msra.mxu0 %v1242
      %1335 = vmatprep.subr.mxu0 0.0
      %1336 = vmatpush1.xpose.msra.mxu0 %v1239
      %1337 = vmatprep.subr.mxu0 0.0
      %1338 = vmatpush1.xpose.msra.mxu0 %v1236
      %1339 = vmatprep.subr.mxu0 0.0
      %1340 = vmatpush1.xpose.msra.mxu0 %v1233
      %1341 = vmatprep.subr.mxu0 0.0
      %1342 = vmatpush1.xpose.msra.mxu0 %v1230
      %1343 = vmatprep.subr.mxu0 0.0
      %1344 = vmatpush1.xpose.msra.mxu0 %v1227
      %1345 = vmatprep.subr.mxu0 0.0
      %1346 = vmatpush1.xpose.msra.mxu0 %v1224
      %1347 = vmatprep.subr.mxu0 0.0
      %1348 = vmatpush1.xpose.msra.mxu0 %v1221
      %1349 = vmatprep.subr.mxu0 0.0
      %1350 = vmatpush1.xpose.msra.mxu0 %v1218
      %1351 = vmatprep.subr.mxu0 0.0
      %1352 = vmatpush2.xpose.msra.mxu0 %v1311
      %1353 = vmatprep.subr.mxu0 0.0
      %1354 = vmatpush2.xpose.msra.mxu0 %v1308
      %1355 = vmatprep.subr.mxu0 0.0
      %1356 = vmatpush2.xpose.msra.mxu0 %v1305
      %1357 = vmatprep.subr.mxu0 0.0
      %1358 = vmatpush2.xpose.msra.mxu0 %v1302
      %1359 = vmatprep.subr.mxu0 0.0
      %1360 = vmatpush2.xpose.msra.mxu0 %v1299
      %1361 = vmatprep.subr.mxu0 0.0
      %1362 = vmatpush2.xpose.msra.mxu0 %v1296
      %1363 = vmatprep.subr.mxu0 0.0
      %1364 = vmatpush2.xpose.msra.mxu0 %v1293
      %1365 = vmatprep.subr.mxu0 0.0
      %1366 = vmatpush2.xpose.msra.mxu0 %v1290
      %1367 = vmatprep.subr.mxu0 0.0
      %1368 = vmatpush2.xpose.msra.mxu0 %v1287
      %1369 = vmatprep.subr.mxu0 0.0
      %1370 = vmatpush2.xpose.msra.mxu0 %v1284
      %1371 = vmatprep.subr.mxu0 0.0
      %1372 = vmatpush2.xpose.msra.mxu0 %v1281
      %1373 = vmatprep.subr.mxu0 0.0
      %1374 = vmatpush2.xpose.msra.mxu0 %v1278
      %1375 = vmatprep.subr.mxu0 0.0
      %1376 = vmatpush2.xpose.msra.mxu0 %v1275
      %1377 = vmatprep.subr.mxu0 0.0
      %1378 = vmatpush2.xpose.msra.mxu0 %v1272
      %1379 = vmatprep.subr.mxu0 0.0
      %1380 = vmatpush2.xpose.msra.mxu0 %v1269
      %1381 = vmatprep.subr.mxu0 0.0
      %1382 = vmatpush2.xpose.msra.mxu0 %v1266
      %1383 = vmatprep.mubr.f32.mxu0 0.0
      %1384 = vmatmul.mubr.f32.gmra.mxu0 %v1194
      %v1385 = vpop.f32.mrf.mxu0
      %v1386 = vadd.f32 0.0, %v1385
      %v1387 = vpop.f32.mrf.mxu0
      %v1388 = vadd.f32 0.0, %v1387
      %1389 = vmatprep.mubr.f32.mxu0 0.0
      %1390 = vmatmul.mubr.f32.gmra.mxu0 %v1197
      %v1391 = vpop.f32.mrf.mxu0
      %v1392 = vadd.f32 0.0, %v1391
      %v1393 = vpop.f32.mrf.mxu0
      %v1394 = vadd.f32 0.0, %v1393
      %1395 = vmatprep.mubr.f32.mxu0 0.0
      %1396 = vmatmul.mubr.f32.gmra.mxu0 %v1200
      %v1397 = vpop.f32.mrf.mxu0
      %v1398 = vadd.f32 0.0, %v1397
      %v1399 = vpop.f32.mrf.mxu0
      %v1400 = vadd.f32 0.0, %v1399
      %1401 = vmatprep.mubr.f32.mxu0 0.0
      %1402 = vmatmul.mubr.f32.gmra.mxu0 %v1203
      %v1403 = vpop.f32.mrf.mxu0
      %v1404 = vadd.f32 0.0, %v1403
      %v1405 = vpop.f32.mrf.mxu0
      %v1406 = vadd.f32 0.0, %v1405
      %1407 = vmatprep.mubr.f32.mxu0 0.0
      %1408 = vmatmul.mubr.f32.gmra.mxu0 %v1206
      %v1409 = vpop.f32.mrf.mxu0
      %v1410 = vadd.f32 0.0, %v1409
      %v1411 = vpop.f32.mrf.mxu0
      %v1412 = vadd.f32 0.0, %v1411
      %1413 = vmatprep.mubr.f32.mxu0 0.0
      %1414 = vmatmul.mubr.f32.gmra.mxu0 %v1209
      %v1415 = vpop.f32.mrf.mxu0
      %v1416 = vadd.f32 0.0, %v1415
      %v1417 = vpop.f32.mrf.mxu0
      %v1418 = vadd.f32 0.0, %v1417
      %1419 = vmatprep.mubr.f32.mxu0 0.0
      %1420 = vmatmul.mubr.f32.gmra.mxu0 %v1212
      %v1421 = vpop.f32.mrf.mxu0
      %v1422 = vadd.f32 0.0, %v1421
      %v1423 = vpop.f32.mrf.mxu0
      %v1424 = vadd.f32 0.0, %v1423
      %1425 = vmatprep.mubr.f32.mxu0 0.0
      %1426 = vmatmul.mubr.f32.gmra.mxu0 %v1215
      %v1427 = vpop.f32.mrf.mxu0
      %v1428 = vadd.f32 0.0, %v1427
      %v1429 = vpop.f32.mrf.mxu0
      %v1430 = vadd.f32 0.0, %v1429
      %1431 = vdwg.mxu0
      %1432 = vmatprep.subr.mxu0 0.0
      %1433 = vmatpush1.xpose.msra.mxu0 0.0
      %1434 = vmatprep.subr.mxu0 0.0
      %1435 = vmatpush1.xpose.msra.mxu0 0.0
      %1436 = vmatprep.subr.mxu0 0.0
      %1437 = vmatpush1.xpose.msra.mxu0 0.0
      %1438 = vmatprep.subr.mxu0 0.0
      %1439 = vmatpush1.xpose.msra.mxu0 0.0
      %1440 = vmatprep.subr.mxu0 0.0
      %1441 = vmatpush1.xpose.msra.mxu0 0.0
      %1442 = vmatprep.subr.mxu0 0.0
      %1443 = vmatpush1.xpose.msra.mxu0 0.0
      %1444 = vmatprep.subr.mxu0 0.0
      %1445 = vmatpush1.xpose.msra.mxu0 0.0
      %1446 = vmatprep.subr.mxu0 0.0
      %1447 = vmatpush1.xpose.msra.mxu0 0.0
      %1448 = vmatprep.subr.mxu0 0.0
      %1449 = vmatpush1.xpose.msra.mxu0 0.0
      %1450 = vmatprep.subr.mxu0 0.0
      %1451 = vmatpush1.xpose.msra.mxu0 0.0
      %1452 = vmatprep.subr.mxu0 0.0
      %1453 = vmatpush1.xpose.msra.mxu0 0.0
      %1454 = vmatprep.subr.mxu0 0.0
      %1455 = vmatpush1.xpose.msra.mxu0 0.0
      %1456 = vmatprep.subr.mxu0 0.0
      %1457 = vmatpush1.xpose.msra.mxu0 0.0
      %1458 = vmatprep.subr.mxu0 0.0
      %1459 = vmatpush1.xpose.msra.mxu0 0.0
      %1460 = vmatprep.subr.mxu0 0.0
      %1461 = vmatpush1.xpose.msra.mxu0 %v1317
      %1462 = vmatprep.subr.mxu0 0.0
      %1463 = vmatpush1.xpose.msra.mxu0 %v1314
      %1464 = vmatprep.subr.mxu0 0.0
      %1465 = vmatpush2.xpose.msra.mxu0 0.0
      %1466 = vmatprep.subr.mxu0 0.0
      %1467 = vmatpush2.xpose.msra.mxu0 0.0
      %1468 = vmatprep.subr.mxu0 0.0
      %1469 = vmatpush2.xpose.msra.mxu0 0.0
      %1470 = vmatprep.subr.mxu0 0.0
      %1471 = vmatpush2.xpose.msra.mxu0 0.0
      %1472 = vmatprep.subr.mxu0 0.0
      %1473 = vmatpush2.xpose.msra.mxu0 0.0
      %1474 = vmatprep.subr.mxu0 0.0
      %1475 = vmatpush2.xpose.msra.mxu0 0.0
      %1476 = vmatprep.subr.mxu0 0.0
      %1477 = vmatpush2.xpose.msra.mxu0 0.0
      %1478 = vmatprep.subr.mxu0 0.0
      %1479 = vmatpush2.xpose.msra.mxu0 0.0
      %1480 = vmatprep.subr.mxu0 0.0
      %1481 = vmatpush2.xpose.msra.mxu0 0.0
      %1482 = vmatprep.subr.mxu0 0.0
      %1483 = vmatpush2.xpose.msra.mxu0 0.0
      %1484 = vmatprep.subr.mxu0 0.0
      %1485 = vmatpush2.xpose.msra.mxu0 0.0
      %1486 = vmatprep.subr.mxu0 0.0
      %1487 = vmatpush2.xpose.msra.mxu0 0.0
      %1488 = vmatprep.subr.mxu0 0.0
      %1489 = vmatpush2.xpose.msra.mxu0 0.0
      %1490 = vmatprep.subr.mxu0 0.0
      %1491 = vmatpush2.xpose.msra.mxu0 0.0
      %1492 = vmatprep.subr.mxu0 0.0
      %1493 = vmatpush2.xpose.msra.mxu0 0.0
      %1494 = vmatprep.subr.mxu0 0.0
      %1495 = vmatpush2.xpose.msra.mxu0 0.0
      %1496 = vmatprep.mubr.f32.mxu0 0.0
      %1497 = vmatmul.mubr.f32.gmra.mxu0 %v1194
      %v1498 = vpop.f32.mrf.mxu0
      %v1499 = vadd.f32 0.0, %v1498
      %v1500 = vpop.f32.mrf.mxu0
      %1501 = vmatprep.mubr.f32.mxu0 0.0
      %1502 = vmatmul.mubr.f32.gmra.mxu0 %v1197
      %v1503 = vpop.f32.mrf.mxu0
      %v1504 = vadd.f32 0.0, %v1503
      %v1505 = vpop.f32.mrf.mxu0
      %1506 = vmatprep.mubr.f32.mxu0 0.0
      %1507 = vmatmul.mubr.f32.gmra.mxu0 %v1200
      %v1508 = vpop.f32.mrf.mxu0
      %v1509 = vadd.f32 0.0, %v1508
      %v1510 = vpop.f32.mrf.mxu0
      %1511 = vmatprep.mubr.f32.mxu0 0.0
      %1512 = vmatmul.mubr.f32.gmra.mxu0 %v1203
      %v1513 = vpop.f32.mrf.mxu0
      %v1514 = vadd.f32 0.0, %v1513
      %v1515 = vpop.f32.mrf.mxu0
      %1516 = vmatprep.mubr.f32.mxu0 0.0
      %1517 = vmatmul.mubr.f32.gmra.mxu0 %v1206
      %v1518 = vpop.f32.mrf.mxu0
      %v1519 = vadd.f32 0.0, %v1518
      %v1520 = vpop.f32.mrf.mxu0
      %1521 = vmatprep.mubr.f32.mxu0 0.0
      %1522 = vmatmul.mubr.f32.gmra.mxu0 %v1209
      %v1523 = vpop.f32.mrf.mxu0
      %v1524 = vadd.f32 0.0, %v1523
      %v1525 = vpop.f32.mrf.mxu0
      %1526 = vmatprep.mubr.f32.mxu0 0.0
      %1527 = vmatmul.mubr.f32.gmra.mxu0 %v1212
      %v1528 = vpop.f32.mrf.mxu0
      %v1529 = vadd.f32 0.0, %v1528
      %v1530 = vpop.f32.mrf.mxu0
      %1531 = vmatprep.mubr.f32.mxu0 0.0
      %1532 = vmatmul.mubr.f32.gmra.mxu0 %v1215
      %v1533 = vpop.f32.mrf.mxu0
      %v1534 = vadd.f32 0.0, %v1533
      %v1535 = vpop.f32.mrf.mxu0
      %1536 = vdwg.mxu0
      %v1537 = vmul.f32 %v1386, %v1168
      %v1538 = vmul.f32 %v1388, %v1169
      %v1539 = vmul.f32 %v1499, %v1170
      %v1540 = vmul.f32 %v1392, %v1171
      %v1541 = vmul.f32 %v1394, %v1172
      %v1542 = vmul.f32 %v1504, %v1173
      %v1543 = vmul.f32 %v1398, %v1174
      %v1544 = vmul.f32 %v1400, %v1175
      %v1545 = vmul.f32 %v1509, %v1176
      %v1546 = vmul.f32 %v1404, %v1177
      %v1547 = vmul.f32 %v1406, %v1178
      %v1548 = vmul.f32 %v1514, %v1179
      %v1549 = vmul.f32 %v1410, %v1180
      %v1550 = vmul.f32 %v1412, %v1181
      %v1551 = vmul.f32 %v1519, %v1182
      %v1552 = vmul.f32 %v1416, %v1183
      %v1553 = vmul.f32 %v1418, %v1184
      %v1554 = vmul.f32 %v1524, %v1185
      %v1555 = vmul.f32 %v1422, %v1186
      %v1556 = vmul.f32 %v1424, %v1187
      %v1557 = vmul.f32 %v1529, %v1188
      %v1558 = vmul.f32 %v1428, %v1189
      %v1559 = vmul.f32 %v1430, %v1190
      %v1560 = vmul.f32 %v1534, %v1191
      %1561 = vrot.lane.b32.xlu0 %v796, 96
      %v1562 = vpop.permute.xlu0 %1561
      %1563 = vrot.lane.b32.xlu0 %v801, 96
      %v1564 = vpop.permute.xlu0 %1563
      %1565 = vrot.lane.b32.xlu0 %v1010, 96
      %v1566 = vpop.permute.xlu0 %1565
      %1567 = vrot.lane.b32.xlu0 %v1015, 96
      %v1568 = vpop.permute.xlu0 %1567
      %1569 = vrot.lane.b32.xlu0 %v1020, 96
      %v1570 = vpop.permute.xlu0 %1569
      %1571 = vrot.lane.b32.xlu0 %v1025, 96
      %v1572 = vpop.permute.xlu0 %1571
      %1573 = vrot.lane.b32.xlu0 %v1030, 96
      %v1574 = vpop.permute.xlu0 %1573
      %1575 = vrot.lane.b32.xlu0 %v1035, 96
      %v1576 = vpop.permute.xlu0 %1575
      %1577 = vrot.lane.b32.xlu0 %v1040, 96
      %v1578 = vpop.permute.xlu0 %1577
      %1579 = vrot.lane.b32.xlu0 %v1045, 96
      %v1580 = vpop.permute.xlu0 %1579
      %1581 = vrot.lane.b32.xlu0 %v1050, 96
      %v1582 = vpop.permute.xlu0 %1581
      %1583 = vrot.lane.b32.xlu0 %v1055, 96
      %v1584 = vpop.permute.xlu0 %1583
      %1585 = vrot.lane.b32.xlu0 %v1060, 96
      %v1586 = vpop.permute.xlu0 %1585
      %1587 = vrot.lane.b32.xlu0 %v1065, 96
      %v1588 = vpop.permute.xlu0 %1587
      %1589 = vrot.lane.b32.xlu0 %v1070, 96
      %v1590 = vpop.permute.xlu0 %1589
      %1591 = vrot.lane.b32.xlu0 %v1075, 96
      %v1592 = vpop.permute.xlu0 %1591
      %1593 = vrot.lane.b32.xlu0 %v1080, 96
      %v1594 = vpop.permute.xlu0 %1593
      %1595 = vrot.lane.b32.xlu0 %v1085, 96
      %v1596 = vpop.permute.xlu0 %1595
      %1597 = vrot.lane.b32.xlu0 %v1090, 96
      %v1598 = vpop.permute.xlu0 %1597
      %1599 = vrot.lane.b32.xlu0 %v1095, 96
      %v1600 = vpop.permute.xlu0 %1599
      %1601 = vrot.lane.b32.xlu0 %v1100, 96
      %v1602 = vpop.permute.xlu0 %1601
      %1603 = vrot.lane.b32.xlu0 %v1105, 96
      %v1604 = vpop.permute.xlu0 %1603
      %1605 = vrot.lane.b32.xlu0 %v1110, 96
      %v1606 = vpop.permute.xlu0 %1605
      %1607 = vrot.lane.b32.xlu0 %v1115, 96
      %v1608 = vpop.permute.xlu0 %1607
      %1609 = vrot.lane.b32.xlu0 %v1120, 96
      %v1610 = vpop.permute.xlu0 %1609
      %1611 = vrot.lane.b32.xlu0 %v1125, 96
      %v1612 = vpop.permute.xlu0 %1611
      %1613 = vrot.lane.b32.xlu0 %v1130, 96
      %v1614 = vpop.permute.xlu0 %1613
      %1615 = vrot.lane.b32.xlu0 %v1135, 96
      %v1616 = vpop.permute.xlu0 %1615
      %1617 = vrot.lane.b32.xlu0 %v1140, 96
      %v1618 = vpop.permute.xlu0 %1617
      %1619 = vrot.lane.b32.xlu0 %v1145, 96
      %v1620 = vpop.permute.xlu0 %1619
      %1621 = vrot.lane.b32.xlu0 %v1150, 96
      %v1622 = vpop.permute.xlu0 %1621
      %1623 = vrot.lane.b32.xlu0 %v1155, 96
      %v1624 = vpop.permute.xlu0 %1623
      %1625 = vrot.lane.b32.xlu0 %v1160, 96
      %v1626 = vpop.permute.xlu0 %1625
      %1627 = vrot.lane.b32.xlu0 %v1165, 96
      %v1628 = vpop.permute.xlu0 %1627
      %v1664 = vsel %vm722, %v1539, 0
      %v1667 = vsel %vm722, %v1542, 0
      %v1670 = vsel %vm722, %v1545, 0
      %v1673 = vsel %vm722, %v1548, 0
      %v1676 = vsel %vm722, %v1551, 0
      %v1679 = vsel %vm722, %v1554, 0
      %v1682 = vsel %vm722, %v1557, 0
      %v1685 = vsel %vm722, %v1560, 0
      %1687 = vmatprep.subr.mxu0 0.0
      %1688 = vmatpush1.msra.mxu0 %v1592
      %1689 = vmatprep.subr.mxu0 0.0
      %1690 = vmatpush1.msra.mxu0 %v1590
      %1691 = vmatprep.subr.mxu0 0.0
      %1692 = vmatpush1.msra.mxu0 %v1588
      %1693 = vmatprep.subr.mxu0 0.0
      %1694 = vmatpush1.msra.mxu0 %v1586
      %1695 = vmatprep.subr.mxu0 0.0
      %1696 = vmatpush1.msra.mxu0 %v1584
      %1697 = vmatprep.subr.mxu0 0.0
      %1698 = vmatpush1.msra.mxu0 %v1582
      %1699 = vmatprep.subr.mxu0 0.0
      %1700 = vmatpush1.msra.mxu0 %v1580
      %1701 = vmatprep.subr.mxu0 0.0
      %1702 = vmatpush1.msra.mxu0 %v1578
      %1703 = vmatprep.subr.mxu0 0.0
      %1704 = vmatpush1.msra.mxu0 %v1576
      %1705 = vmatprep.subr.mxu0 0.0
      %1706 = vmatpush1.msra.mxu0 %v1574
      %1707 = vmatprep.subr.mxu0 0.0
      %1708 = vmatpush1.msra.mxu0 %v1572
      %1709 = vmatprep.subr.mxu0 0.0
      %1710 = vmatpush1.msra.mxu0 %v1570
      %1711 = vmatprep.subr.mxu0 0.0
      %1712 = vmatpush1.msra.mxu0 %v1568
      %1713 = vmatprep.subr.mxu0 0.0
      %1714 = vmatpush1.msra.mxu0 %v1566
      %1715 = vmatprep.subr.mxu0 0.0
      %1716 = vmatpush1.msra.mxu0 %v1564
      %1717 = vmatprep.subr.mxu0 0.0
      %1718 = vmatpush1.msra.mxu0 %v1562
      %1719 = vmatprep.subr.mxu0 0.0
      %1720 = vmatpush2.msra.mxu0 %v1624
      %1721 = vmatprep.subr.mxu0 0.0
      %1722 = vmatpush2.msra.mxu0 %v1622
      %1723 = vmatprep.subr.mxu0 0.0
      %1724 = vmatpush2.msra.mxu0 %v1620
      %1725 = vmatprep.subr.mxu0 0.0
      %1726 = vmatpush2.msra.mxu0 %v1618
      %1727 = vmatprep.subr.mxu0 0.0
      %1728 = vmatpush2.msra.mxu0 %v1616
      %1729 = vmatprep.subr.mxu0 0.0
      %1730 = vmatpush2.msra.mxu0 %v1614
      %1731 = vmatprep.subr.mxu0 0.0
      %1732 = vmatpush2.msra.mxu0 %v1612
      %1733 = vmatprep.subr.mxu0 0.0
      %1734 = vmatpush2.msra.mxu0 %v1610
      %1735 = vmatprep.subr.mxu0 0.0
      %1736 = vmatpush2.msra.mxu0 %v1608
      %1737 = vmatprep.subr.mxu0 0.0
      %1738 = vmatpush2.msra.mxu0 %v1606
      %1739 = vmatprep.subr.mxu0 0.0
      %1740 = vmatpush2.msra.mxu0 %v1604
      %1741 = vmatprep.subr.mxu0 0.0
      %1742 = vmatpush2.msra.mxu0 %v1602
      %1743 = vmatprep.subr.mxu0 0.0
      %1744 = vmatpush2.msra.mxu0 %v1600
      %1745 = vmatprep.subr.mxu0 0.0
      %1746 = vmatpush2.msra.mxu0 %v1598
      %1747 = vmatprep.subr.mxu0 0.0
      %1748 = vmatpush2.msra.mxu0 %v1596
      %1749 = vmatprep.subr.mxu0 0.0
      %1750 = vmatpush2.msra.mxu0 %v1594
      %1751 = vmatprep.mubr.f32.mxu0 %v1538
      %1752 = vmatmul.mubr.f32.gmra.mxu0 %v1537
      %v1753 = vpop.f32.mrf.mxu0
      %v1754 = vadd.f32 0.0, %v1753
      %v1755 = vpop.f32.mrf.mxu0
      %1756 = vmatprep.mubr.f32.mxu0 %v1541
      %1757 = vmatmul.mubr.f32.gmra.mxu0 %v1540
      %v1758 = vpop.f32.mrf.mxu0
      %v1759 = vadd.f32 0.0, %v1758
      %v1760 = vpop.f32.mrf.mxu0
      %1761 = vmatprep.mubr.f32.mxu0 %v1544
      %1762 = vmatmul.mubr.f32.gmra.mxu0 %v1543
      %v1763 = vpop.f32.mrf.mxu0
      %v1764 = vadd.f32 0.0, %v1763
      %v1765 = vpop.f32.mrf.mxu0
      %1766 = vmatprep.mubr.f32.mxu0 %v1547
      %1767 = vmatmul.mubr.f32.gmra.mxu0 %v1546
      %v1768 = vpop.f32.mrf.mxu0
      %v1769 = vadd.f32 0.0, %v1768
      %v1770 = vpop.f32.mrf.mxu0
      %1771 = vmatprep.mubr.f32.mxu0 %v1550
      %1772 = vmatmul.mubr.f32.gmra.mxu0 %v1549
      %v1773 = vpop.f32.mrf.mxu0
      %v1774 = vadd.f32 0.0, %v1773
      %v1775 = vpop.f32.mrf.mxu0
      %1776 = vmatprep.mubr.f32.mxu0 %v1553
      %1777 = vmatmul.mubr.f32.gmra.mxu0 %v1552
      %v1778 = vpop.f32.mrf.mxu0
      %v1779 = vadd.f32 0.0, %v1778
      %v1780 = vpop.f32.mrf.mxu0
      %1781 = vmatprep.mubr.f32.mxu0 %v1556
      %1782 = vmatmul.mubr.f32.gmra.mxu0 %v1555
      %v1783 = vpop.f32.mrf.mxu0
      %v1784 = vadd.f32 0.0, %v1783
      %v1785 = vpop.f32.mrf.mxu0
      %1786 = vmatprep.mubr.f32.mxu0 %v1559
      %1787 = vmatmul.mubr.f32.gmra.mxu0 %v1558
      %v1788 = vpop.f32.mrf.mxu0
      %v1789 = vadd.f32 0.0, %v1788
      %v1790 = vpop.f32.mrf.mxu0
      %1791 = vdwg.mxu0
      %1792 = vmatprep.subr.mxu0 0.0
      %1793 = vmatpush1.msra.mxu0 0.0
      %1794 = vmatprep.subr.mxu0 0.0
      %1795 = vmatpush1.msra.mxu0 0.0
      %1796 = vmatprep.subr.mxu0 0.0
      %1797 = vmatpush1.msra.mxu0 0.0
      %1798 = vmatprep.subr.mxu0 0.0
      %1799 = vmatpush1.msra.mxu0 0.0
      %1800 = vmatprep.subr.mxu0 0.0
      %1801 = vmatpush1.msra.mxu0 0.0
      %1802 = vmatprep.subr.mxu0 0.0
      %1803 = vmatpush1.msra.mxu0 0.0
      %1804 = vmatprep.subr.mxu0 0.0
      %1805 = vmatpush1.msra.mxu0 0.0
      %1806 = vmatprep.subr.mxu0 0.0
      %1807 = vmatpush1.msra.mxu0 0.0
      %1808 = vmatprep.subr.mxu0 0.0
      %1809 = vmatpush1.msra.mxu0 0.0
      %1810 = vmatprep.subr.mxu0 0.0
      %1811 = vmatpush1.msra.mxu0 0.0
      %1812 = vmatprep.subr.mxu0 0.0
      %1813 = vmatpush1.msra.mxu0 0.0
      %1814 = vmatprep.subr.mxu0 0.0
      %1815 = vmatpush1.msra.mxu0 0.0
      %1816 = vmatprep.subr.mxu0 0.0
      %1817 = vmatpush1.msra.mxu0 0.0
      %1818 = vmatprep.subr.mxu0 0.0
      %1819 = vmatpush1.msra.mxu0 0.0
      %1820 = vmatprep.subr.mxu0 0.0
      %1821 = vmatpush1.msra.mxu0 %v1628
      %1822 = vmatprep.subr.mxu0 0.0
      %1823 = vmatpush1.msra.mxu0 %v1626
      %1824 = vmatprep.subr.mxu0 0.0
      %1825 = vmatpush2.msra.mxu0 0.0
      %1826 = vmatprep.subr.mxu0 0.0
      %1827 = vmatpush2.msra.mxu0 0.0
      %1828 = vmatprep.subr.mxu0 0.0
      %1829 = vmatpush2.msra.mxu0 0.0
      %1830 = vmatprep.subr.mxu0 0.0
      %1831 = vmatpush2.msra.mxu0 0.0
      %1832 = vmatprep.subr.mxu0 0.0
      %1833 = vmatpush2.msra.mxu0 0.0
      %1834 = vmatprep.subr.mxu0 0.0
      %1835 = vmatpush2.msra.mxu0 0.0
      %1836 = vmatprep.subr.mxu0 0.0
      %1837 = vmatpush2.msra.mxu0 0.0
      %1838 = vmatprep.subr.mxu0 0.0
      %1839 = vmatpush2.msra.mxu0 0.0
      %1840 = vmatprep.subr.mxu0 0.0
      %1841 = vmatpush2.msra.mxu0 0.0
      %1842 = vmatprep.subr.mxu0 0.0
      %1843 = vmatpush2.msra.mxu0 0.0
      %1844 = vmatprep.subr.mxu0 0.0
      %1845 = vmatpush2.msra.mxu0 0.0
      %1846 = vmatprep.subr.mxu0 0.0
      %1847 = vmatpush2.msra.mxu0 0.0
      %1848 = vmatprep.subr.mxu0 0.0
      %1849 = vmatpush2.msra.mxu0 0.0
      %1850 = vmatprep.subr.mxu0 0.0
      %1851 = vmatpush2.msra.mxu0 0.0
      %1852 = vmatprep.subr.mxu0 0.0
      %1853 = vmatpush2.msra.mxu0 0.0
      %1854 = vmatprep.subr.mxu0 0.0
      %1855 = vmatpush2.msra.mxu0 0.0
      %1856 = vmatprep.mubr.f32.mxu0 0.0
      %1857 = vmatmul.mubr.f32.gmra.mxu0 %v1664
      %v1858 = vpop.f32.mrf.mxu0
      %v1859 = vadd.f32 %v1754, %v1858
      %v1860 = vpop.f32.mrf.mxu0
      %1861 = vmatprep.mubr.f32.mxu0 0.0
      %1862 = vmatmul.mubr.f32.gmra.mxu0 %v1667
      %v1863 = vpop.f32.mrf.mxu0
      %v1864 = vadd.f32 %v1759, %v1863
      %v1865 = vpop.f32.mrf.mxu0
      %1866 = vmatprep.mubr.f32.mxu0 0.0
      %1867 = vmatmul.mubr.f32.gmra.mxu0 %v1670
      %v1868 = vpop.f32.mrf.mxu0
      %v1869 = vadd.f32 %v1764, %v1868
      %v1870 = vpop.f32.mrf.mxu0
      %1871 = vmatprep.mubr.f32.mxu0 0.0
      %1872 = vmatmul.mubr.f32.gmra.mxu0 %v1673
      %v1873 = vpop.f32.mrf.mxu0
      %v1874 = vadd.f32 %v1769, %v1873
      %v1875 = vpop.f32.mrf.mxu0
      %1876 = vmatprep.mubr.f32.mxu0 0.0
      %1877 = vmatmul.mubr.f32.gmra.mxu0 %v1676
      %v1878 = vpop.f32.mrf.mxu0
      %v1879 = vadd.f32 %v1774, %v1878
      %v1880 = vpop.f32.mrf.mxu0
      %1881 = vmatprep.mubr.f32.mxu0 0.0
      %1882 = vmatmul.mubr.f32.gmra.mxu0 %v1679
      %v1883 = vpop.f32.mrf.mxu0
      %v1884 = vadd.f32 %v1779, %v1883
      %v1885 = vpop.f32.mrf.mxu0
      %1886 = vmatprep.mubr.f32.mxu0 0.0
      %1887 = vmatmul.mubr.f32.gmra.mxu0 %v1682
      %v1888 = vpop.f32.mrf.mxu0
      %v1889 = vadd.f32 %v1784, %v1888
      %v1890 = vpop.f32.mrf.mxu0
      %1891 = vmatprep.mubr.f32.mxu0 0.0
      %1892 = vmatmul.mubr.f32.gmra.mxu0 %v1685
      %v1893 = vpop.f32.mrf.mxu0
      %v1894 = vadd.f32 %v1789, %v1893
      %v1895 = vpop.f32.mrf.mxu0
      %1896 = vdwg.mxu0
      %1897 = vrot.lane.b32.xlu0 %v673, 120
      %v1898 = vpop.permute.xlu0 %1897
      %1899 = vrot.lane.b32.xlu0 %v678, 120
      %v1900 = vpop.permute.xlu0 %1899
      %1901 = vrot.lane.b32.xlu0 %v683, 120
      %v1902 = vpop.permute.xlu0 %1901
      %1903 = vrot.lane.b32.xlu0 %v688, 120
      %v1904 = vpop.permute.xlu0 %1903
      %1905 = vrot.lane.b32.xlu0 %v693, 120
      %v1906 = vpop.permute.xlu0 %1905
      %1907 = vrot.lane.b32.xlu0 %v698, 120
      %v1908 = vpop.permute.xlu0 %1907
      %1909 = vrot.lane.b32.xlu0 %v703, 120
      %v1910 = vpop.permute.xlu0 %1909
      %1911 = vrot.lane.b32.xlu0 %v708, 120
      %v1912 = vpop.permute.xlu0 %1911
      %1913 = vrot.lane.b32.xlu0 %v796, 120
      %v1914 = vpop.permute.xlu0 %1913
      %1915 = vrot.lane.b32.xlu0 %v801, 120
      %v1916 = vpop.permute.xlu0 %1915
      %1917 = vrot.lane.b32.xlu0 %v1010, 120
      %v1918 = vpop.permute.xlu0 %1917
      %1919 = vrot.lane.b32.xlu0 %v1015, 120
      %v1920 = vpop.permute.xlu0 %1919
      %1921 = vrot.lane.b32.xlu0 %v1020, 120
      %v1922 = vpop.permute.xlu0 %1921
      %1923 = vrot.lane.b32.xlu0 %v1025, 120
      %v1924 = vpop.permute.xlu0 %1923
      %1925 = vrot.lane.b32.xlu0 %v1030, 120
      %v1926 = vpop.permute.xlu0 %1925
      %1927 = vrot.lane.b32.xlu0 %v1035, 120
      %v1928 = vpop.permute.xlu0 %1927
      %1929 = vrot.lane.b32.xlu0 %v1040, 120
      %v1930 = vpop.permute.xlu0 %1929
      %1931 = vrot.lane.b32.xlu0 %v1045, 120
      %v1932 = vpop.permute.xlu0 %1931
      %1933 = vrot.lane.b32.xlu0 %v1050, 120
      %v1934 = vpop.permute.xlu0 %1933
      %1935 = vrot.lane.b32.xlu0 %v1055, 120
      %v1936 = vpop.permute.xlu0 %1935
      %1937 = vrot.lane.b32.xlu0 %v1060, 120
      %v1938 = vpop.permute.xlu0 %1937
      %1939 = vrot.lane.b32.xlu0 %v1065, 120
      %v1940 = vpop.permute.xlu0 %1939
      %1941 = vrot.lane.b32.xlu0 %v1070, 120
      %v1942 = vpop.permute.xlu0 %1941
      %1943 = vrot.lane.b32.xlu0 %v1075, 120
      %v1944 = vpop.permute.xlu0 %1943
      %1945 = vrot.lane.b32.xlu0 %v1080, 120
      %v1946 = vpop.permute.xlu0 %1945
      %1947 = vrot.lane.b32.xlu0 %v1085, 120
      %v1948 = vpop.permute.xlu0 %1947
      %1949 = vrot.lane.b32.xlu0 %v1090, 120
      %v1950 = vpop.permute.xlu0 %1949
      %1951 = vrot.lane.b32.xlu0 %v1095, 120
      %v1952 = vpop.permute.xlu0 %1951
      %1953 = vrot.lane.b32.xlu0 %v1100, 120
      %v1954 = vpop.permute.xlu0 %1953
      %1955 = vrot.lane.b32.xlu0 %v1105, 120
      %v1956 = vpop.permute.xlu0 %1955
      %1957 = vrot.lane.b32.xlu0 %v1110, 120
      %v1958 = vpop.permute.xlu0 %1957
      %1959 = vrot.lane.b32.xlu0 %v1115, 120
      %v1960 = vpop.permute.xlu0 %1959
      %1961 = vrot.lane.b32.xlu0 %v1120, 120
      %v1962 = vpop.permute.xlu0 %1961
      %1963 = vrot.lane.b32.xlu0 %v1125, 120
      %v1964 = vpop.permute.xlu0 %1963
      %1965 = vrot.lane.b32.xlu0 %v1130, 120
      %v1966 = vpop.permute.xlu0 %1965
      %1967 = vrot.lane.b32.xlu0 %v1135, 120
      %v1968 = vpop.permute.xlu0 %1967
      %1969 = vrot.lane.b32.xlu0 %v1140, 120
      %v1970 = vpop.permute.xlu0 %1969
      %1971 = vrot.lane.b32.xlu0 %v1145, 120
      %v1972 = vpop.permute.xlu0 %1971
      %1973 = vrot.lane.b32.xlu0 %v1150, 120
      %v1974 = vpop.permute.xlu0 %1973
      %1975 = vrot.lane.b32.xlu0 %v1155, 120
      %v1976 = vpop.permute.xlu0 %1975
      %1977 = vrot.lane.b32.xlu0 %v1160, 120
      %v1978 = vpop.permute.xlu0 %1977
      %1979 = vrot.lane.b32.xlu0 %v1165, 120
      %v1980 = vpop.permute.xlu0 %1979
      %v1981 = vsel %vm1192, %v1898, 0
      %v1983 = vsel %vm1192, %v1900, 0
      %v1985 = vsel %vm1192, %v1902, 0
      %v1987 = vsel %vm1192, %v1904, 0
      %v1989 = vsel %vm1192, %v1906, 0
      %v1991 = vsel %vm1192, %v1908, 0
      %v1993 = vsel %vm1192, %v1910, 0
      %v1995 = vsel %vm1192, %v1912, 0
      %v1997 = vsel %vm1192, %v1914, 0
      %v1999 = vsel %vm1192, %v1916, 0
      %v2001 = vsel %vm1192, %v1918, 0
      %v2003 = vsel %vm1192, %v1920, 0
      %v2005 = vsel %vm1192, %v1922, 0
      %v2007 = vsel %vm1192, %v1924, 0
      %v2009 = vsel %vm1192, %v1926, 0
      %v2011 = vsel %vm1192, %v1928, 0
      %v2013 = vsel %vm1192, %v1930, 0
      %v2015 = vsel %vm1192, %v1932, 0
      %v2017 = vsel %vm1192, %v1934, 0
      %v2019 = vsel %vm1192, %v1936, 0
      %v2021 = vsel %vm1192, %v1938, 0
      %v2023 = vsel %vm1192, %v1940, 0
      %v2025 = vsel %vm1192, %v1942, 0
      %v2027 = vsel %vm1192, %v1944, 0
      %v2029 = vsel %vm1192, %v1946, 0
      %v2031 = vsel %vm1192, %v1948, 0
      %v2033 = vsel %vm1192, %v1950, 0
      %v2035 = vsel %vm1192, %v1952, 0
      %v2037 = vsel %vm1192, %v1954, 0
      %v2039 = vsel %vm1192, %v1956, 0
      %v2041 = vsel %vm1192, %v1958, 0
      %v2043 = vsel %vm1192, %v1960, 0
      %v2045 = vsel %vm1192, %v1962, 0
      %v2047 = vsel %vm1192, %v1964, 0
      %v2049 = vsel %vm1192, %v1966, 0
      %v2051 = vsel %vm1192, %v1968, 0
      %v2053 = vsel %vm1192, %v1970, 0
      %v2055 = vsel %vm1192, %v1972, 0
      %v2057 = vsel %vm1192, %v1974, 0
      %v2059 = vsel %vm1192, %v1976, 0
      %v2061 = vsel %vm1192, %v1978, 0
      %v2063 = vsel %vm1192, %v1980, 0
      %2065 = vmatprep.subr.mxu0 0.0
      %2066 = vmatpush1.xpose.msra.mxu0 %v2027
      %2067 = vmatprep.subr.mxu0 0.0
      %2068 = vmatpush1.xpose.msra.mxu0 %v2025
      %2069 = vmatprep.subr.mxu0 0.0
      %2070 = vmatpush1.xpose.msra.mxu0 %v2023
      %2071 = vmatprep.subr.mxu0 0.0
      %2072 = vmatpush1.xpose.msra.mxu0 %v2021
      %2073 = vmatprep.subr.mxu0 0.0
      %2074 = vmatpush1.xpose.msra.mxu0 %v2019
      %2075 = vmatprep.subr.mxu0 0.0
      %2076 = vmatpush1.xpose.msra.mxu0 %v2017
      %2077 = vmatprep.subr.mxu0 0.0
      %2078 = vmatpush1.xpose.msra.mxu0 %v2015
      %2079 = vmatprep.subr.mxu0 0.0
      %2080 = vmatpush1.xpose.msra.mxu0 %v2013
      %2081 = vmatprep.subr.mxu0 0.0
      %2082 = vmatpush1.xpose.msra.mxu0 %v2011
      %2083 = vmatprep.subr.mxu0 0.0
      %2084 = vmatpush1.xpose.msra.mxu0 %v2009
      %2085 = vmatprep.subr.mxu0 0.0
      %2086 = vmatpush1.xpose.msra.mxu0 %v2007
      %2087 = vmatprep.subr.mxu0 0.0
      %2088 = vmatpush1.xpose.msra.mxu0 %v2005
      %2089 = vmatprep.subr.mxu0 0.0
      %2090 = vmatpush1.xpose.msra.mxu0 %v2003
      %2091 = vmatprep.subr.mxu0 0.0
      %2092 = vmatpush1.xpose.msra.mxu0 %v2001
      %2093 = vmatprep.subr.mxu0 0.0
      %2094 = vmatpush1.xpose.msra.mxu0 %v1999
      %2095 = vmatprep.subr.mxu0 0.0
      %2096 = vmatpush1.xpose.msra.mxu0 %v1997
      %2097 = vmatprep.subr.mxu0 0.0
      %2098 = vmatpush2.xpose.msra.mxu0 %v2059
      %2099 = vmatprep.subr.mxu0 0.0
      %2100 = vmatpush2.xpose.msra.mxu0 %v2057
      %2101 = vmatprep.subr.mxu0 0.0
      %2102 = vmatpush2.xpose.msra.mxu0 %v2055
      %2103 = vmatprep.subr.mxu0 0.0
      %2104 = vmatpush2.xpose.msra.mxu0 %v2053
      %2105 = vmatprep.subr.mxu0 0.0
      %2106 = vmatpush2.xpose.msra.mxu0 %v2051
      %2107 = vmatprep.subr.mxu0 0.0
      %2108 = vmatpush2.xpose.msra.mxu0 %v2049
      %2109 = vmatprep.subr.mxu0 0.0
      %2110 = vmatpush2.xpose.msra.mxu0 %v2047
      %2111 = vmatprep.subr.mxu0 0.0
      %2112 = vmatpush2.xpose.msra.mxu0 %v2045
      %2113 = vmatprep.subr.mxu0 0.0
      %2114 = vmatpush2.xpose.msra.mxu0 %v2043
      %2115 = vmatprep.subr.mxu0 0.0
      %2116 = vmatpush2.xpose.msra.mxu0 %v2041
      %2117 = vmatprep.subr.mxu0 0.0
      %2118 = vmatpush2.xpose.msra.mxu0 %v2039
      %2119 = vmatprep.subr.mxu0 0.0
      %2120 = vmatpush2.xpose.msra.mxu0 %v2037
      %2121 = vmatprep.subr.mxu0 0.0
      %2122 = vmatpush2.xpose.msra.mxu0 %v2035
      %2123 = vmatprep.subr.mxu0 0.0
      %2124 = vmatpush2.xpose.msra.mxu0 %v2033
      %2125 = vmatprep.subr.mxu0 0.0
      %2126 = vmatpush2.xpose.msra.mxu0 %v2031
      %2127 = vmatprep.subr.mxu0 0.0
      %2128 = vmatpush2.xpose.msra.mxu0 %v2029
      %2129 = vmatprep.mubr.f32.mxu0 0.0
      %2130 = vmatmul.mubr.f32.gmra.mxu0 %v1981
      %v2131 = vpop.f32.mrf.mxu0
      %v2132 = vadd.f32 0.0, %v2131
      %v2133 = vpop.f32.mrf.mxu0
      %v2134 = vadd.f32 0.0, %v2133
      %2135 = vmatprep.mubr.f32.mxu0 0.0
      %2136 = vmatmul.mubr.f32.gmra.mxu0 %v1983
      %v2137 = vpop.f32.mrf.mxu0
      %v2138 = vadd.f32 0.0, %v2137
      %v2139 = vpop.f32.mrf.mxu0
      %v2140 = vadd.f32 0.0, %v2139
      %2141 = vmatprep.mubr.f32.mxu0 0.0
      %2142 = vmatmul.mubr.f32.gmra.mxu0 %v1985
      %v2143 = vpop.f32.mrf.mxu0
      %v2144 = vadd.f32 0.0, %v2143
      %v2145 = vpop.f32.mrf.mxu0
      %v2146 = vadd.f32 0.0, %v2145
      %2147 = vmatprep.mubr.f32.mxu0 0.0
      %2148 = vmatmul.mubr.f32.gmra.mxu0 %v1987
      %v2149 = vpop.f32.mrf.mxu0
      %v2150 = vadd.f32 0.0, %v2149
      %v2151 = vpop.f32.mrf.mxu0
      %v2152 = vadd.f32 0.0, %v2151
      %2153 = vmatprep.mubr.f32.mxu0 0.0
      %2154 = vmatmul.mubr.f32.gmra.mxu0 %v1989
      %v2155 = vpop.f32.mrf.mxu0
      %v2156 = vadd.f32 0.0, %v2155
      %v2157 = vpop.f32.mrf.mxu0
      %v2158 = vadd.f32 0.0, %v2157
      %2159 = vmatprep.mubr.f32.mxu0 0.0
      %2160 = vmatmul.mubr.f32.gmra.mxu0 %v1991
      %v2161 = vpop.f32.mrf.mxu0
      %v2162 = vadd.f32 0.0, %v2161
      %v2163 = vpop.f32.mrf.mxu0
      %v2164 = vadd.f32 0.0, %v2163
      %2165 = vmatprep.mubr.f32.mxu0 0.0
      %2166 = vmatmul.mubr.f32.gmra.mxu0 %v1993
      %v2167 = vpop.f32.mrf.mxu0
      %v2168 = vadd.f32 0.0, %v2167
      %v2169 = vpop.f32.mrf.mxu0
      %v2170 = vadd.f32 0.0, %v2169
      %2171 = vmatprep.mubr.f32.mxu0 0.0
      %2172 = vmatmul.mubr.f32.gmra.mxu0 %v1995
      %v2173 = vpop.f32.mrf.mxu0
      %v2174 = vadd.f32 0.0, %v2173
      %v2175 = vpop.f32.mrf.mxu0
      %v2176 = vadd.f32 0.0, %v2175
      %2177 = vdwg.mxu0
      %2178 = vmatprep.subr.mxu0 0.0
      %2179 = vmatpush1.xpose.msra.mxu0 0.0
      %2180 = vmatprep.subr.mxu0 0.0
      %2181 = vmatpush1.xpose.msra.mxu0 0.0
      %2182 = vmatprep.subr.mxu0 0.0
      %2183 = vmatpush1.xpose.msra.mxu0 0.0
      %2184 = vmatprep.subr.mxu0 0.0
      %2185 = vmatpush1.xpose.msra.mxu0 0.0
      %2186 = vmatprep.subr.mxu0 0.0
      %2187 = vmatpush1.xpose.msra.mxu0 0.0
      %2188 = vmatprep.subr.mxu0 0.0
      %2189 = vmatpush1.xpose.msra.mxu0 0.0
      %2190 = vmatprep.subr.mxu0 0.0
      %2191 = vmatpush1.xpose.msra.mxu0 0.0
      %2192 = vmatprep.subr.mxu0 0.0
      %2193 = vmatpush1.xpose.msra.mxu0 0.0
      %2194 = vmatprep.subr.mxu0 0.0
      %2195 = vmatpush1.xpose.msra.mxu0 0.0
      %2196 = vmatprep.subr.mxu0 0.0
      %2197 = vmatpush1.xpose.msra.mxu0 0.0
      %2198 = vmatprep.subr.mxu0 0.0
      %2199 = vmatpush1.xpose.msra.mxu0 0.0
      %2200 = vmatprep.subr.mxu0 0.0
      %2201 = vmatpush1.xpose.msra.mxu0 0.0
      %2202 = vmatprep.subr.mxu0 0.0
      %2203 = vmatpush1.xpose.msra.mxu0 0.0
      %2204 = vmatprep.subr.mxu0 0.0
      %2205 = vmatpush1.xpose.msra.mxu0 0.0
      %2206 = vmatprep.subr.mxu0 0.0
      %2207 = vmatpush1.xpose.msra.mxu0 %v2063
      %2208 = vmatprep.subr.mxu0 0.0
      %2209 = vmatpush1.xpose.msra.mxu0 %v2061
      %2210 = vmatprep.subr.mxu0 0.0
      %2211 = vmatpush2.xpose.msra.mxu0 0.0
      %2212 = vmatprep.subr.mxu0 0.0
      %2213 = vmatpush2.xpose.msra.mxu0 0.0
      %2214 = vmatprep.subr.mxu0 0.0
      %2215 = vmatpush2.xpose.msra.mxu0 0.0
      %2216 = vmatprep.subr.mxu0 0.0
      %2217 = vmatpush2.xpose.msra.mxu0 0.0
      %2218 = vmatprep.subr.mxu0 0.0
      %2219 = vmatpush2.xpose.msra.mxu0 0.0
      %2220 = vmatprep.subr.mxu0 0.0
      %2221 = vmatpush2.xpose.msra.mxu0 0.0
      %2222 = vmatprep.subr.mxu0 0.0
      %2223 = vmatpush2.xpose.msra.mxu0 0.0
      %2224 = vmatprep.subr.mxu0 0.0
      %2225 = vmatpush2.xpose.msra.mxu0 0.0
      %2226 = vmatprep.subr.mxu0 0.0
      %2227 = vmatpush2.xpose.msra.mxu0 0.0
      %2228 = vmatprep.subr.mxu0 0.0
      %2229 = vmatpush2.xpose.msra.mxu0 0.0
      %2230 = vmatprep.subr.mxu0 0.0
      %2231 = vmatpush2.xpose.msra.mxu0 0.0
      %2232 = vmatprep.subr.mxu0 0.0
      %2233 = vmatpush2.xpose.msra.mxu0 0.0
      %2234 = vmatprep.subr.mxu0 0.0
      %2235 = vmatpush2.xpose.msra.mxu0 0.0
      %2236 = vmatprep.subr.mxu0 0.0
      %2237 = vmatpush2.xpose.msra.mxu0 0.0
      %2238 = vmatprep.subr.mxu0 0.0
      %2239 = vmatpush2.xpose.msra.mxu0 0.0
      %2240 = vmatprep.subr.mxu0 0.0
      %2241 = vmatpush2.xpose.msra.mxu0 0.0
      %2242 = vmatprep.mubr.f32.mxu0 0.0
      %2243 = vmatmul.mubr.f32.gmra.mxu0 %v1981
      %v2244 = vpop.f32.mrf.mxu0
      %v2245 = vadd.f32 0.0, %v2244
      %v2246 = vpop.f32.mrf.mxu0
      %2247 = vmatprep.mubr.f32.mxu0 0.0
      %2248 = vmatmul.mubr.f32.gmra.mxu0 %v1983
      %v2249 = vpop.f32.mrf.mxu0
      %v2250 = vadd.f32 0.0, %v2249
      %v2251 = vpop.f32.mrf.mxu0
      %2252 = vmatprep.mubr.f32.mxu0 0.0
      %2253 = vmatmul.mubr.f32.gmra.mxu0 %v1985
      %v2254 = vpop.f32.mrf.mxu0
      %v2255 = vadd.f32 0.0, %v2254
      %v2256 = vpop.f32.mrf.mxu0
      %2257 = vmatprep.mubr.f32.mxu0 0.0
      %2258 = vmatmul.mubr.f32.gmra.mxu0 %v1987
      %v2259 = vpop.f32.mrf.mxu0
      %v2260 = vadd.f32 0.0, %v2259
      %v2261 = vpop.f32.mrf.mxu0
      %2262 = vmatprep.mubr.f32.mxu0 0.0
      %2263 = vmatmul.mubr.f32.gmra.mxu0 %v1989
      %v2264 = vpop.f32.mrf.mxu0
      %v2265 = vadd.f32 0.0, %v2264
      %v2266 = vpop.f32.mrf.mxu0
      %2267 = vmatprep.mubr.f32.mxu0 0.0
      %2268 = vmatmul.mubr.f32.gmra.mxu0 %v1991
      %v2269 = vpop.f32.mrf.mxu0
      %v2270 = vadd.f32 0.0, %v2269
      %v2271 = vpop.f32.mrf.mxu0
      %2272 = vmatprep.mubr.f32.mxu0 0.0
      %2273 = vmatmul.mubr.f32.gmra.mxu0 %v1993
      %v2274 = vpop.f32.mrf.mxu0
      %v2275 = vadd.f32 0.0, %v2274
      %v2276 = vpop.f32.mrf.mxu0
      %2277 = vmatprep.mubr.f32.mxu0 0.0
      %2278 = vmatmul.mubr.f32.gmra.mxu0 %v1995
      %v2279 = vpop.f32.mrf.mxu0
      %v2280 = vadd.f32 0.0, %v2279
      %v2281 = vpop.f32.mrf.mxu0
      %2282 = vdwg.mxu0
      %v2283 = vmul.f32 %v2132, %v1168
      %v2284 = vmul.f32 %v2134, %v1169
      %v2285 = vmul.f32 %v2245, %v1170
      %v2286 = vmul.f32 %v2138, %v1171
      %v2287 = vmul.f32 %v2140, %v1172
      %v2288 = vmul.f32 %v2250, %v1173
      %v2289 = vmul.f32 %v2144, %v1174
      %v2290 = vmul.f32 %v2146, %v1175
      %v2291 = vmul.f32 %v2255, %v1176
      %v2292 = vmul.f32 %v2150, %v1177
      %v2293 = vmul.f32 %v2152, %v1178
      %v2294 = vmul.f32 %v2260, %v1179
      %v2295 = vmul.f32 %v2156, %v1180
      %v2296 = vmul.f32 %v2158, %v1181
      %v2297 = vmul.f32 %v2265, %v1182
      %v2298 = vmul.f32 %v2162, %v1183
      %v2299 = vmul.f32 %v2164, %v1184
      %v2300 = vmul.f32 %v2270, %v1185
      %v2301 = vmul.f32 %v2168, %v1186
      %v2302 = vmul.f32 %v2170, %v1187
      %v2303 = vmul.f32 %v2275, %v1188
      %v2304 = vmul.f32 %v2174, %v1189
      %v2305 = vmul.f32 %v2176, %v1190
      %v2306 = vmul.f32 %v2280, %v1191
      %2307 = vrot.lane.b32.xlu0 %v796, 88
      %v2308 = vpop.permute.xlu0 %2307
      %2309 = vrot.lane.b32.xlu0 %v801, 88
      %v2310 = vpop.permute.xlu0 %2309
      %2311 = vrot.lane.b32.xlu0 %v1010, 88
      %v2312 = vpop.permute.xlu0 %2311
      %2313 = vrot.lane.b32.xlu0 %v1015, 88
      %v2314 = vpop.permute.xlu0 %2313
      %2315 = vrot.lane.b32.xlu0 %v1020, 88
      %v2316 = vpop.permute.xlu0 %2315
      %2317 = vrot.lane.b32.xlu0 %v1025, 88
      %v2318 = vpop.permute.xlu0 %2317
      %2319 = vrot.lane.b32.xlu0 %v1030, 88
      %v2320 = vpop.permute.xlu0 %2319
      %2321 = vrot.lane.b32.xlu0 %v1035, 88
      %v2322 = vpop.permute.xlu0 %2321
      %2323 = vrot.lane.b32.xlu0 %v1040, 88
      %v2324 = vpop.permute.xlu0 %2323
      %2325 = vrot.lane.b32.xlu0 %v1045, 88
      %v2326 = vpop.permute.xlu0 %2325
      %2327 = vrot.lane.b32.xlu0 %v1050, 88
      %v2328 = vpop.permute.xlu0 %2327
      %2329 = vrot.lane.b32.xlu0 %v1055, 88
      %v2330 = vpop.permute.xlu0 %2329
      %2331 = vrot.lane.b32.xlu0 %v1060, 88
      %v2332 = vpop.permute.xlu0 %2331
      %2333 = vrot.lane.b32.xlu0 %v1065, 88
      %v2334 = vpop.permute.xlu0 %2333
      %2335 = vrot.lane.b32.xlu0 %v1070, 88
      %v2336 = vpop.permute.xlu0 %2335
      %2337 = vrot.lane.b32.xlu0 %v1075, 88
      %v2338 = vpop.permute.xlu0 %2337
      %2339 = vrot.lane.b32.xlu0 %v1080, 88
      %v2340 = vpop.permute.xlu0 %2339
      %2341 = vrot.lane.b32.xlu0 %v1085, 88
      %v2342 = vpop.permute.xlu0 %2341
      %2343 = vrot.lane.b32.xlu0 %v1090, 88
      %v2344 = vpop.permute.xlu0 %2343
      %2345 = vrot.lane.b32.xlu0 %v1095, 88
      %v2346 = vpop.permute.xlu0 %2345
      %2347 = vrot.lane.b32.xlu0 %v1100, 88
      %v2348 = vpop.permute.xlu0 %2347
      %2349 = vrot.lane.b32.xlu0 %v1105, 88
      %v2350 = vpop.permute.xlu0 %2349
      %2351 = vrot.lane.b32.xlu0 %v1110, 88
      %v2352 = vpop.permute.xlu0 %2351
      %2353 = vrot.lane.b32.xlu0 %v1115, 88
      %v2354 = vpop.permute.xlu0 %2353
      %2355 = vrot.lane.b32.xlu0 %v1120, 88
      %v2356 = vpop.permute.xlu0 %2355
      %2357 = vrot.lane.b32.xlu0 %v1125, 88
      %v2358 = vpop.permute.xlu0 %2357
      %2359 = vrot.lane.b32.xlu0 %v1130, 88
      %v2360 = vpop.permute.xlu0 %2359
      %2361 = vrot.lane.b32.xlu0 %v1135, 88
      %v2362 = vpop.permute.xlu0 %2361
      %2363 = vrot.lane.b32.xlu0 %v1140, 88
      %v2364 = vpop.permute.xlu0 %2363
      %2365 = vrot.lane.b32.xlu0 %v1145, 88
      %v2366 = vpop.permute.xlu0 %2365
      %2367 = vrot.lane.b32.xlu0 %v1150, 88
      %v2368 = vpop.permute.xlu0 %2367
      %2369 = vrot.lane.b32.xlu0 %v1155, 88
      %v2370 = vpop.permute.xlu0 %2369
      %2371 = vrot.lane.b32.xlu0 %v1160, 88
      %v2372 = vpop.permute.xlu0 %2371
      %2373 = vrot.lane.b32.xlu0 %v1165, 88
      %v2374 = vpop.permute.xlu0 %2373
      %v2410 = vsel %vm722, %v2285, 0
      %v2413 = vsel %vm722, %v2288, 0
      %v2416 = vsel %vm722, %v2291, 0
      %v2419 = vsel %vm722, %v2294, 0
      %v2422 = vsel %vm722, %v2297, 0
      %v2425 = vsel %vm722, %v2300, 0
      %v2428 = vsel %vm722, %v2303, 0
      %v2431 = vsel %vm722, %v2306, 0
      %2433 = vmatprep.subr.mxu0 0.0
      %2434 = vmatpush1.msra.mxu0 %v2338
      %2435 = vmatprep.subr.mxu0 0.0
      %2436 = vmatpush1.msra.mxu0 %v2336
      %2437 = vmatprep.subr.mxu0 0.0
      %2438 = vmatpush1.msra.mxu0 %v2334
      %2439 = vmatprep.subr.mxu0 0.0
      %2440 = vmatpush1.msra.mxu0 %v2332
      %2441 = vmatprep.subr.mxu0 0.0
      %2442 = vmatpush1.msra.mxu0 %v2330
      %2443 = vmatprep.subr.mxu0 0.0
      %2444 = vmatpush1.msra.mxu0 %v2328
      %2445 = vmatprep.subr.mxu0 0.0
      %2446 = vmatpush1.msra.mxu0 %v2326
      %2447 = vmatprep.subr.mxu0 0.0
      %2448 = vmatpush1.msra.mxu0 %v2324
      %2449 = vmatprep.subr.mxu0 0.0
      %2450 = vmatpush1.msra.mxu0 %v2322
      %2451 = vmatprep.subr.mxu0 0.0
      %2452 = vmatpush1.msra.mxu0 %v2320
      %2453 = vmatprep.subr.mxu0 0.0
      %2454 = vmatpush1.msra.mxu0 %v2318
      %2455 = vmatprep.subr.mxu0 0.0
      %2456 = vmatpush1.msra.mxu0 %v2316
      %2457 = vmatprep.subr.mxu0 0.0
      %2458 = vmatpush1.msra.mxu0 %v2314
      %2459 = vmatprep.subr.mxu0 0.0
      %2460 = vmatpush1.msra.mxu0 %v2312
      %2461 = vmatprep.subr.mxu0 0.0
      %2462 = vmatpush1.msra.mxu0 %v2310
      %2463 = vmatprep.subr.mxu0 0.0
      %2464 = vmatpush1.msra.mxu0 %v2308
      %2465 = vmatprep.subr.mxu0 0.0
      %2466 = vmatpush2.msra.mxu0 %v2370
      %2467 = vmatprep.subr.mxu0 0.0
      %2468 = vmatpush2.msra.mxu0 %v2368
      %2469 = vmatprep.subr.mxu0 0.0
      %2470 = vmatpush2.msra.mxu0 %v2366
      %2471 = vmatprep.subr.mxu0 0.0
      %2472 = vmatpush2.msra.mxu0 %v2364
      %2473 = vmatprep.subr.mxu0 0.0
      %2474 = vmatpush2.msra.mxu0 %v2362
      %2475 = vmatprep.subr.mxu0 0.0
      %2476 = vmatpush2.msra.mxu0 %v2360
      %2477 = vmatprep.subr.mxu0 0.0
      %2478 = vmatpush2.msra.mxu0 %v2358
      %2479 = vmatprep.subr.mxu0 0.0
      %2480 = vmatpush2.msra.mxu0 %v2356
      %2481 = vmatprep.subr.mxu0 0.0
      %2482 = vmatpush2.msra.mxu0 %v2354
      %2483 = vmatprep.subr.mxu0 0.0
      %2484 = vmatpush2.msra.mxu0 %v2352
      %2485 = vmatprep.subr.mxu0 0.0
      %2486 = vmatpush2.msra.mxu0 %v2350
      %2487 = vmatprep.subr.mxu0 0.0
      %2488 = vmatpush2.msra.mxu0 %v2348
      %2489 = vmatprep.subr.mxu0 0.0
      %2490 = vmatpush2.msra.mxu0 %v2346
      %2491 = vmatprep.subr.mxu0 0.0
      %2492 = vmatpush2.msra.mxu0 %v2344
      %2493 = vmatprep.subr.mxu0 0.0
      %2494 = vmatpush2.msra.mxu0 %v2342
      %2495 = vmatprep.subr.mxu0 0.0
      %2496 = vmatpush2.msra.mxu0 %v2340
      %2497 = vmatprep.mubr.f32.mxu0 %v2284
      %2498 = vmatmul.mubr.f32.gmra.mxu0 %v2283
      %v2499 = vpop.f32.mrf.mxu0
      %v2500 = vadd.f32 0.0, %v2499
      %v2501 = vpop.f32.mrf.mxu0
      %2502 = vmatprep.mubr.f32.mxu0 %v2287
      %2503 = vmatmul.mubr.f32.gmra.mxu0 %v2286
      %v2504 = vpop.f32.mrf.mxu0
      %v2505 = vadd.f32 0.0, %v2504
      %v2506 = vpop.f32.mrf.mxu0
      %2507 = vmatprep.mubr.f32.mxu0 %v2290
      %2508 = vmatmul.mubr.f32.gmra.mxu0 %v2289
      %v2509 = vpop.f32.mrf.mxu0
      %v2510 = vadd.f32 0.0, %v2509
      %v2511 = vpop.f32.mrf.mxu0
      %2512 = vmatprep.mubr.f32.mxu0 %v2293
      %2513 = vmatmul.mubr.f32.gmra.mxu0 %v2292
      %v2514 = vpop.f32.mrf.mxu0
      %v2515 = vadd.f32 0.0, %v2514
      %v2516 = vpop.f32.mrf.mxu0
      %2517 = vmatprep.mubr.f32.mxu0 %v2296
      %2518 = vmatmul.mubr.f32.gmra.mxu0 %v2295
      %v2519 = vpop.f32.mrf.mxu0
      %v2520 = vadd.f32 0.0, %v2519
      %v2521 = vpop.f32.mrf.mxu0
      %2522 = vmatprep.mubr.f32.mxu0 %v2299
      %2523 = vmatmul.mubr.f32.gmra.mxu0 %v2298
      %v2524 = vpop.f32.mrf.mxu0
      %v2525 = vadd.f32 0.0, %v2524
      %v2526 = vpop.f32.mrf.mxu0
      %2527 = vmatprep.mubr.f32.mxu0 %v2302
      %2528 = vmatmul.mubr.f32.gmra.mxu0 %v2301
      %v2529 = vpop.f32.mrf.mxu0
      %v2530 = vadd.f32 0.0, %v2529
      %v2531 = vpop.f32.mrf.mxu0
      %2532 = vmatprep.mubr.f32.mxu0 %v2305
      %2533 = vmatmul.mubr.f32.gmra.mxu0 %v2304
      %v2534 = vpop.f32.mrf.mxu0
      %v2535 = vadd.f32 0.0, %v2534
      %v2536 = vpop.f32.mrf.mxu0
      %2537 = vdwg.mxu0
      %2538 = vmatprep.subr.mxu0 0.0
      %2539 = vmatpush1.msra.mxu0 0.0
      %2540 = vmatprep.subr.mxu0 0.0
      %2541 = vmatpush1.msra.mxu0 0.0
      %2542 = vmatprep.subr.mxu0 0.0
      %2543 = vmatpush1.msra.mxu0 0.0
      %2544 = vmatprep.subr.mxu0 0.0
      %2545 = vmatpush1.msra.mxu0 0.0
      %2546 = vmatprep.subr.mxu0 0.0
      %2547 = vmatpush1.msra.mxu0 0.0
      %2548 = vmatprep.subr.mxu0 0.0
      %2549 = vmatpush1.msra.mxu0 0.0
      %2550 = vmatprep.subr.mxu0 0.0
      %2551 = vmatpush1.msra.mxu0 0.0
      %2552 = vmatprep.subr.mxu0 0.0
      %2553 = vmatpush1.msra.mxu0 0.0
      %2554 = vmatprep.subr.mxu0 0.0
      %2555 = vmatpush1.msra.mxu0 0.0
      %2556 = vmatprep.subr.mxu0 0.0
      %2557 = vmatpush1.msra.mxu0 0.0
      %2558 = vmatprep.subr.mxu0 0.0
      %2559 = vmatpush1.msra.mxu0 0.0
      %2560 = vmatprep.subr.mxu0 0.0
      %2561 = vmatpush1.msra.mxu0 0.0
      %2562 = vmatprep.subr.mxu0 0.0
      %2563 = vmatpush1.msra.mxu0 0.0
      %2564 = vmatprep.subr.mxu0 0.0
      %2565 = vmatpush1.msra.mxu0 0.0
      %2566 = vmatprep.subr.mxu0 0.0
      %2567 = vmatpush1.msra.mxu0 %v2374
      %2568 = vmatprep.subr.mxu0 0.0
      %2569 = vmatpush1.msra.mxu0 %v2372
      %2570 = vmatprep.subr.mxu0 0.0
      %2571 = vmatpush2.msra.mxu0 0.0
      %2572 = vmatprep.subr.mxu0 0.0
      %2573 = vmatpush2.msra.mxu0 0.0
      %2574 = vmatprep.subr.mxu0 0.0
      %2575 = vmatpush2.msra.mxu0 0.0
      %2576 = vmatprep.subr.mxu0 0.0
      %2577 = vmatpush2.msra.mxu0 0.0
      %2578 = vmatprep.subr.mxu0 0.0
      %2579 = vmatpush2.msra.mxu0 0.0
      %2580 = vmatprep.subr.mxu0 0.0
      %2581 = vmatpush2.msra.mxu0 0.0
      %2582 = vmatprep.subr.mxu0 0.0
      %2583 = vmatpush2.msra.mxu0 0.0
      %2584 = vmatprep.subr.mxu0 0.0
      %2585 = vmatpush2.msra.mxu0 0.0
      %2586 = vmatprep.subr.mxu0 0.0
      %2587 = vmatpush2.msra.mxu0 0.0
      %2588 = vmatprep.subr.mxu0 0.0
      %2589 = vmatpush2.msra.mxu0 0.0
      %2590 = vmatprep.subr.mxu0 0.0
      %2591 = vmatpush2.msra.mxu0 0.0
      %2592 = vmatprep.subr.mxu0 0.0
      %2593 = vmatpush2.msra.mxu0 0.0
      %2594 = vmatprep.subr.mxu0 0.0
      %2595 = vmatpush2.msra.mxu0 0.0
      %2596 = vmatprep.subr.mxu0 0.0
      %2597 = vmatpush2.msra.mxu0 0.0
      %2598 = vmatprep.subr.mxu0 0.0
      %2599 = vmatpush2.msra.mxu0 0.0
      %2600 = vmatprep.subr.mxu0 0.0
      %2601 = vmatpush2.msra.mxu0 0.0
      %2602 = vmatprep.mubr.f32.mxu0 0.0
      %2603 = vmatmul.mubr.f32.gmra.mxu0 %v2410
      %v2604 = vpop.f32.mrf.mxu0
      %v2605 = vadd.f32 %v2500, %v2604
      %v2606 = vpop.f32.mrf.mxu0
      %2607 = vmatprep.mubr.f32.mxu0 0.0
      %2608 = vmatmul.mubr.f32.gmra.mxu0 %v2413
      %v2609 = vpop.f32.mrf.mxu0
      %v2610 = vadd.f32 %v2505, %v2609
      %v2611 = vpop.f32.mrf.mxu0
      %2612 = vmatprep.mubr.f32.mxu0 0.0
      %2613 = vmatmul.mubr.f32.gmra.mxu0 %v2416
      %v2614 = vpop.f32.mrf.mxu0
      %v2615 = vadd.f32 %v2510, %v2614
      %v2616 = vpop.f32.mrf.mxu0
      %2617 = vmatprep.mubr.f32.mxu0 0.0
      %2618 = vmatmul.mubr.f32.gmra.mxu0 %v2419
      %v2619 = vpop.f32.mrf.mxu0
      %v2620 = vadd.f32 %v2515, %v2619
      %v2621 = vpop.f32.mrf.mxu0
      %2622 = vmatprep.mubr.f32.mxu0 0.0
      %2623 = vmatmul.mubr.f32.gmra.mxu0 %v2422
      %v2624 = vpop.f32.mrf.mxu0
      %v2625 = vadd.f32 %v2520, %v2624
      %v2626 = vpop.f32.mrf.mxu0
      %2627 = vmatprep.mubr.f32.mxu0 0.0
      %2628 = vmatmul.mubr.f32.gmra.mxu0 %v2425
      %v2629 = vpop.f32.mrf.mxu0
      %v2630 = vadd.f32 %v2525, %v2629
      %v2631 = vpop.f32.mrf.mxu0
      %2632 = vmatprep.mubr.f32.mxu0 0.0
      %2633 = vmatmul.mubr.f32.gmra.mxu0 %v2428
      %v2634 = vpop.f32.mrf.mxu0
      %v2635 = vadd.f32 %v2530, %v2634
      %v2636 = vpop.f32.mrf.mxu0
      %2637 = vmatprep.mubr.f32.mxu0 0.0
      %2638 = vmatmul.mubr.f32.gmra.mxu0 %v2431
      %v2639 = vpop.f32.mrf.mxu0
      %v2640 = vadd.f32 %v2535, %v2639
      %v2641 = vpop.f32.mrf.mxu0
      %2642 = vdwg.mxu0
      %2643 = vrot.lane.b32.xlu0 %v673, 112
      %v2644 = vpop.permute.xlu0 %2643
      %2645 = vrot.lane.b32.xlu0 %v678, 112
      %v2646 = vpop.permute.xlu0 %2645
      %2647 = vrot.lane.b32.xlu0 %v683, 112
      %v2648 = vpop.permute.xlu0 %2647
      %2649 = vrot.lane.b32.xlu0 %v688, 112
      %v2650 = vpop.permute.xlu0 %2649
      %2651 = vrot.lane.b32.xlu0 %v693, 112
      %v2652 = vpop.permute.xlu0 %2651
      %2653 = vrot.lane.b32.xlu0 %v698, 112
      %v2654 = vpop.permute.xlu0 %2653
      %2655 = vrot.lane.b32.xlu0 %v703, 112
      %v2656 = vpop.permute.xlu0 %2655
      %2657 = vrot.lane.b32.xlu0 %v708, 112
      %v2658 = vpop.permute.xlu0 %2657
      %2659 = vrot.lane.b32.xlu0 %v796, 112
      %v2660 = vpop.permute.xlu0 %2659
      %2661 = vrot.lane.b32.xlu0 %v801, 112
      %v2662 = vpop.permute.xlu0 %2661
      %2663 = vrot.lane.b32.xlu0 %v1010, 112
      %v2664 = vpop.permute.xlu0 %2663
      %2665 = vrot.lane.b32.xlu0 %v1015, 112
      %v2666 = vpop.permute.xlu0 %2665
      %2667 = vrot.lane.b32.xlu0 %v1020, 112
      %v2668 = vpop.permute.xlu0 %2667
      %2669 = vrot.lane.b32.xlu0 %v1025, 112
      %v2670 = vpop.permute.xlu0 %2669
      %2671 = vrot.lane.b32.xlu0 %v1030, 112
      %v2672 = vpop.permute.xlu0 %2671
      %2673 = vrot.lane.b32.xlu0 %v1035, 112
      %v2674 = vpop.permute.xlu0 %2673
      %2675 = vrot.lane.b32.xlu0 %v1040, 112
      %v2676 = vpop.permute.xlu0 %2675
      %2677 = vrot.lane.b32.xlu0 %v1045, 112
      %v2678 = vpop.permute.xlu0 %2677
      %2679 = vrot.lane.b32.xlu0 %v1050, 112
      %v2680 = vpop.permute.xlu0 %2679
      %2681 = vrot.lane.b32.xlu0 %v1055, 112
      %v2682 = vpop.permute.xlu0 %2681
      %2683 = vrot.lane.b32.xlu0 %v1060, 112
      %v2684 = vpop.permute.xlu0 %2683
      %2685 = vrot.lane.b32.xlu0 %v1065, 112
      %v2686 = vpop.permute.xlu0 %2685
      %2687 = vrot.lane.b32.xlu0 %v1070, 112
      %v2688 = vpop.permute.xlu0 %2687
      %2689 = vrot.lane.b32.xlu0 %v1075, 112
      %v2690 = vpop.permute.xlu0 %2689
      %2691 = vrot.lane.b32.xlu0 %v1080, 112
      %v2692 = vpop.permute.xlu0 %2691
      %2693 = vrot.lane.b32.xlu0 %v1085, 112
      %v2694 = vpop.permute.xlu0 %2693
      %2695 = vrot.lane.b32.xlu0 %v1090, 112
      %v2696 = vpop.permute.xlu0 %2695
      %2697 = vrot.lane.b32.xlu0 %v1095, 112
      %v2698 = vpop.permute.xlu0 %2697
      %2699 = vrot.lane.b32.xlu0 %v1100, 112
      %v2700 = vpop.permute.xlu0 %2699
      %2701 = vrot.lane.b32.xlu0 %v1105, 112
      %v2702 = vpop.permute.xlu0 %2701
      %2703 = vrot.lane.b32.xlu0 %v1110, 112
      %v2704 = vpop.permute.xlu0 %2703
      %2705 = vrot.lane.b32.xlu0 %v1115, 112
      %v2706 = vpop.permute.xlu0 %2705
      %2707 = vrot.lane.b32.xlu0 %v1120, 112
      %v2708 = vpop.permute.xlu0 %2707
      %2709 = vrot.lane.b32.xlu0 %v1125, 112
      %v2710 = vpop.permute.xlu0 %2709
      %2711 = vrot.lane.b32.xlu0 %v1130, 112
      %v2712 = vpop.permute.xlu0 %2711
      %2713 = vrot.lane.b32.xlu0 %v1135, 112
      %v2714 = vpop.permute.xlu0 %2713
      %2715 = vrot.lane.b32.xlu0 %v1140, 112
      %v2716 = vpop.permute.xlu0 %2715
      %2717 = vrot.lane.b32.xlu0 %v1145, 112
      %v2718 = vpop.permute.xlu0 %2717
      %2719 = vrot.lane.b32.xlu0 %v1150, 112
      %v2720 = vpop.permute.xlu0 %2719
      %2721 = vrot.lane.b32.xlu0 %v1155, 112
      %v2722 = vpop.permute.xlu0 %2721
      %2723 = vrot.lane.b32.xlu0 %v1160, 112
      %v2724 = vpop.permute.xlu0 %2723
      %2725 = vrot.lane.b32.xlu0 %v1165, 112
      %v2726 = vpop.permute.xlu0 %2725
      %v2727 = vsel %vm1192, %v2644, 0
      %v2729 = vsel %vm1192, %v2646, 0
      %v2731 = vsel %vm1192, %v2648, 0
      %v2733 = vsel %vm1192, %v2650, 0
      %v2735 = vsel %vm1192, %v2652, 0
      %v2737 = vsel %vm1192, %v2654, 0
      %v2739 = vsel %vm1192, %v2656, 0
      %v2741 = vsel %vm1192, %v2658, 0
      %v2743 = vsel %vm1192, %v2660, 0
      %v2745 = vsel %vm1192, %v2662, 0
      %v2747 = vsel %vm1192, %v2664, 0
      %v2749 = vsel %vm1192, %v2666, 0
      %v2751 = vsel %vm1192, %v2668, 0
      %v2753 = vsel %vm1192, %v2670, 0
      %v2755 = vsel %vm1192, %v2672, 0
      %v2757 = vsel %vm1192, %v2674, 0
      %v2759 = vsel %vm1192, %v2676, 0
      %v2761 = vsel %vm1192, %v2678, 0
      %v2763 = vsel %vm1192, %v2680, 0
      %v2765 = vsel %vm1192, %v2682, 0
      %v2767 = vsel %vm1192, %v2684, 0
      %v2769 = vsel %vm1192, %v2686, 0
      %v2771 = vsel %vm1192, %v2688, 0
      %v2773 = vsel %vm1192, %v2690, 0
      %v2775 = vsel %vm1192, %v2692, 0
      %v2777 = vsel %vm1192, %v2694, 0
      %v2779 = vsel %vm1192, %v2696, 0
      %v2781 = vsel %vm1192, %v2698, 0
      %v2783 = vsel %vm1192, %v2700, 0
      %v2785 = vsel %vm1192, %v2702, 0
      %v2787 = vsel %vm1192, %v2704, 0
      %v2789 = vsel %vm1192, %v2706, 0
      %v2791 = vsel %vm1192, %v2708, 0
      %v2793 = vsel %vm1192, %v2710, 0
      %v2795 = vsel %vm1192, %v2712, 0
      %v2797 = vsel %vm1192, %v2714, 0
      %v2799 = vsel %vm1192, %v2716, 0
      %v2801 = vsel %vm1192, %v2718, 0
      %v2803 = vsel %vm1192, %v2720, 0
      %v2805 = vsel %vm1192, %v2722, 0
      %v2807 = vsel %vm1192, %v2724, 0
      %v2809 = vsel %vm1192, %v2726, 0
      %2811 = vmatprep.subr.mxu0 0.0
      %2812 = vmatpush1.xpose.msra.mxu0 %v2773
      %2813 = vmatprep.subr.mxu0 0.0
      %2814 = vmatpush1.xpose.msra.mxu0 %v2771
      %2815 = vmatprep.subr.mxu0 0.0
      %2816 = vmatpush1.xpose.msra.mxu0 %v2769
      %2817 = vmatprep.subr.mxu0 0.0
      %2818 = vmatpush1.xpose.msra.mxu0 %v2767
      %2819 = vmatprep.subr.mxu0 0.0
      %2820 = vmatpush1.xpose.msra.mxu0 %v2765
      %2821 = vmatprep.subr.mxu0 0.0
      %2822 = vmatpush1.xpose.msra.mxu0 %v2763
      %2823 = vmatprep.subr.mxu0 0.0
      %2824 = vmatpush1.xpose.msra.mxu0 %v2761
      %2825 = vmatprep.subr.mxu0 0.0
      %2826 = vmatpush1.xpose.msra.mxu0 %v2759
      %2827 = vmatprep.subr.mxu0 0.0
      %2828 = vmatpush1.xpose.msra.mxu0 %v2757
      %2829 = vmatprep.subr.mxu0 0.0
      %2830 = vmatpush1.xpose.msra.mxu0 %v2755
      %2831 = vmatprep.subr.mxu0 0.0
      %2832 = vmatpush1.xpose.msra.mxu0 %v2753
      %2833 = vmatprep.subr.mxu0 0.0
      %2834 = vmatpush1.xpose.msra.mxu0 %v2751
      %2835 = vmatprep.subr.mxu0 0.0
      %2836 = vmatpush1.xpose.msra.mxu0 %v2749
      %2837 = vmatprep.subr.mxu0 0.0
      %2838 = vmatpush1.xpose.msra.mxu0 %v2747
      %2839 = vmatprep.subr.mxu0 0.0
      %2840 = vmatpush1.xpose.msra.mxu0 %v2745
      %2841 = vmatprep.subr.mxu0 0.0
      %2842 = vmatpush1.xpose.msra.mxu0 %v2743
      %2843 = vmatprep.subr.mxu0 0.0
      %2844 = vmatpush2.xpose.msra.mxu0 %v2805
      %2845 = vmatprep.subr.mxu0 0.0
      %2846 = vmatpush2.xpose.msra.mxu0 %v2803
      %2847 = vmatprep.subr.mxu0 0.0
      %2848 = vmatpush2.xpose.msra.mxu0 %v2801
      %2849 = vmatprep.subr.mxu0 0.0
      %2850 = vmatpush2.xpose.msra.mxu0 %v2799
      %2851 = vmatprep.subr.mxu0 0.0
      %2852 = vmatpush2.xpose.msra.mxu0 %v2797
      %2853 = vmatprep.subr.mxu0 0.0
      %2854 = vmatpush2.xpose.msra.mxu0 %v2795
      %2855 = vmatprep.subr.mxu0 0.0
      %2856 = vmatpush2.xpose.msra.mxu0 %v2793
      %2857 = vmatprep.subr.mxu0 0.0
      %2858 = vmatpush2.xpose.msra.mxu0 %v2791
      %2859 = vmatprep.subr.mxu0 0.0
      %2860 = vmatpush2.xpose.msra.mxu0 %v2789
      %2861 = vmatprep.subr.mxu0 0.0
      %2862 = vmatpush2.xpose.msra.mxu0 %v2787
      %2863 = vmatprep.subr.mxu0 0.0
      %2864 = vmatpush2.xpose.msra.mxu0 %v2785
      %2865 = vmatprep.subr.mxu0 0.0
      %2866 = vmatpush2.xpose.msra.mxu0 %v2783
      %2867 = vmatprep.subr.mxu0 0.0
      %2868 = vmatpush2.xpose.msra.mxu0 %v2781
      %2869 = vmatprep.subr.mxu0 0.0
      %2870 = vmatpush2.xpose.msra.mxu0 %v2779
      %2871 = vmatprep.subr.mxu0 0.0
      %2872 = vmatpush2.xpose.msra.mxu0 %v2777
      %2873 = vmatprep.subr.mxu0 0.0
      %2874 = vmatpush2.xpose.msra.mxu0 %v2775
      %2875 = vmatprep.mubr.f32.mxu0 0.0
      %2876 = vmatmul.mubr.f32.gmra.mxu0 %v2727
      %v2877 = vpop.f32.mrf.mxu0
      %v2878 = vadd.f32 0.0, %v2877
      %v2879 = vpop.f32.mrf.mxu0
      %v2880 = vadd.f32 0.0, %v2879
      %2881 = vmatprep.mubr.f32.mxu0 0.0
      %2882 = vmatmul.mubr.f32.gmra.mxu0 %v2729
      %v2883 = vpop.f32.mrf.mxu0
      %v2884 = vadd.f32 0.0, %v2883
      %v2885 = vpop.f32.mrf.mxu0
      %v2886 = vadd.f32 0.0, %v2885
      %2887 = vmatprep.mubr.f32.mxu0 0.0
      %2888 = vmatmul.mubr.f32.gmra.mxu0 %v2731
      %v2889 = vpop.f32.mrf.mxu0
      %v2890 = vadd.f32 0.0, %v2889
      %v2891 = vpop.f32.mrf.mxu0
      %v2892 = vadd.f32 0.0, %v2891
      %2893 = vmatprep.mubr.f32.mxu0 0.0
      %2894 = vmatmul.mubr.f32.gmra.mxu0 %v2733
      %v2895 = vpop.f32.mrf.mxu0
      %v2896 = vadd.f32 0.0, %v2895
      %v2897 = vpop.f32.mrf.mxu0
      %v2898 = vadd.f32 0.0, %v2897
      %2899 = vmatprep.mubr.f32.mxu0 0.0
      %2900 = vmatmul.mubr.f32.gmra.mxu0 %v2735
      %v2901 = vpop.f32.mrf.mxu0
      %v2902 = vadd.f32 0.0, %v2901
      %v2903 = vpop.f32.mrf.mxu0
      %v2904 = vadd.f32 0.0, %v2903
      %2905 = vmatprep.mubr.f32.mxu0 0.0
      %2906 = vmatmul.mubr.f32.gmra.mxu0 %v2737
      %v2907 = vpop.f32.mrf.mxu0
      %v2908 = vadd.f32 0.0, %v2907
      %v2909 = vpop.f32.mrf.mxu0
      %v2910 = vadd.f32 0.0, %v2909
      %2911 = vmatprep.mubr.f32.mxu0 0.0
      %2912 = vmatmul.mubr.f32.gmra.mxu0 %v2739
      %v2913 = vpop.f32.mrf.mxu0
      %v2914 = vadd.f32 0.0, %v2913
      %v2915 = vpop.f32.mrf.mxu0
      %v2916 = vadd.f32 0.0, %v2915
      %2917 = vmatprep.mubr.f32.mxu0 0.0
      %2918 = vmatmul.mubr.f32.gmra.mxu0 %v2741
      %v2919 = vpop.f32.mrf.mxu0
      %v2920 = vadd.f32 0.0, %v2919
      %v2921 = vpop.f32.mrf.mxu0
      %v2922 = vadd.f32 0.0, %v2921
      %2923 = vdwg.mxu0
      %2924 = vmatprep.subr.mxu0 0.0
      %2925 = vmatpush1.xpose.msra.mxu0 0.0
      %2926 = vmatprep.subr.mxu0 0.0
      %2927 = vmatpush1.xpose.msra.mxu0 0.0
      %2928 = vmatprep.subr.mxu0 0.0
      %2929 = vmatpush1.xpose.msra.mxu0 0.0
      %2930 = vmatprep.subr.mxu0 0.0
      %2931 = vmatpush1.xpose.msra.mxu0 0.0
      %2932 = vmatprep.subr.mxu0 0.0
      %2933 = vmatpush1.xpose.msra.mxu0 0.0
      %2934 = vmatprep.subr.mxu0 0.0
      %2935 = vmatpush1.xpose.msra.mxu0 0.0
      %2936 = vmatprep.subr.mxu0 0.0
      %2937 = vmatpush1.xpose.msra.mxu0 0.0
      %2938 = vmatprep.subr.mxu0 0.0
      %2939 = vmatpush1.xpose.msra.mxu0 0.0
      %2940 = vmatprep.subr.mxu0 0.0
      %2941 = vmatpush1.xpose.msra.mxu0 0.0
      %2942 = vmatprep.subr.mxu0 0.0
      %2943 = vmatpush1.xpose.msra.mxu0 0.0
      %2944 = vmatprep.subr.mxu0 0.0
      %2945 = vmatpush1.xpose.msra.mxu0 0.0
      %2946 = vmatprep.subr.mxu0 0.0
      %2947 = vmatpush1.xpose.msra.mxu0 0.0
      %2948 = vmatprep.subr.mxu0 0.0
      %2949 = vmatpush1.xpose.msra.mxu0 0.0
      %2950 = vmatprep.subr.mxu0 0.0
      %2951 = vmatpush1.xpose.msra.mxu0 0.0
      %2952 = vmatprep.subr.mxu0 0.0
      %2953 = vmatpush1.xpose.msra.mxu0 %v2809
      %2954 = vmatprep.subr.mxu0 0.0
      %2955 = vmatpush1.xpose.msra.mxu0 %v2807
      %2956 = vmatprep.subr.mxu0 0.0
      %2957 = vmatpush2.xpose.msra.mxu0 0.0
      %2958 = vmatprep.subr.mxu0 0.0
      %2959 = vmatpush2.xpose.msra.mxu0 0.0
      %2960 = vmatprep.subr.mxu0 0.0
      %2961 = vmatpush2.xpose.msra.mxu0 0.0
      %2962 = vmatprep.subr.mxu0 0.0
      %2963 = vmatpush2.xpose.msra.mxu0 0.0
      %2964 = vmatprep.subr.mxu0 0.0
      %2965 = vmatpush2.xpose.msra.mxu0 0.0
      %2966 = vmatprep.subr.mxu0 0.0
      %2967 = vmatpush2.xpose.msra.mxu0 0.0
      %2968 = vmatprep.subr.mxu0 0.0
      %2969 = vmatpush2.xpose.msra.mxu0 0.0
      %2970 = vmatprep.subr.mxu0 0.0
      %2971 = vmatpush2.xpose.msra.mxu0 0.0
      %2972 = vmatprep.subr.mxu0 0.0
      %2973 = vmatpush2.xpose.msra.mxu0 0.0
      %2974 = vmatprep.subr.mxu0 0.0
      %2975 = vmatpush2.xpose.msra.mxu0 0.0
      %2976 = vmatprep.subr.mxu0 0.0
      %2977 = vmatpush2.xpose.msra.mxu0 0.0
      %2978 = vmatprep.subr.mxu0 0.0
      %2979 = vmatpush2.xpose.msra.mxu0 0.0
      %2980 = vmatprep.subr.mxu0 0.0
      %2981 = vmatpush2.xpose.msra.mxu0 0.0
      %2982 = vmatprep.subr.mxu0 0.0
      %2983 = vmatpush2.xpose.msra.mxu0 0.0
      %2984 = vmatprep.subr.mxu0 0.0
      %2985 = vmatpush2.xpose.msra.mxu0 0.0
      %2986 = vmatprep.subr.mxu0 0.0
      %2987 = vmatpush2.xpose.msra.mxu0 0.0
      %2988 = vmatprep.mubr.f32.mxu0 0.0
      %2989 = vmatmul.mubr.f32.gmra.mxu0 %v2727
      %v2990 = vpop.f32.mrf.mxu0
      %v2991 = vadd.f32 0.0, %v2990
      %v2992 = vpop.f32.mrf.mxu0
      %2993 = vmatprep.mubr.f32.mxu0 0.0
      %2994 = vmatmul.mubr.f32.gmra.mxu0 %v2729
      %v2995 = vpop.f32.mrf.mxu0
      %v2996 = vadd.f32 0.0, %v2995
      %v2997 = vpop.f32.mrf.mxu0
      %2998 = vmatprep.mubr.f32.mxu0 0.0
      %2999 = vmatmul.mubr.f32.gmra.mxu0 %v2731
      %v3000 = vpop.f32.mrf.mxu0
      %v3001 = vadd.f32 0.0, %v3000
      %v3002 = vpop.f32.mrf.mxu0
      %3003 = vmatprep.mubr.f32.mxu0 0.0
      %3004 = vmatmul.mubr.f32.gmra.mxu0 %v2733
      %v3005 = vpop.f32.mrf.mxu0
      %v3006 = vadd.f32 0.0, %v3005
      %v3007 = vpop.f32.mrf.mxu0
      %3008 = vmatprep.mubr.f32.mxu0 0.0
      %3009 = vmatmul.mubr.f32.gmra.mxu0 %v2735
      %v3010 = vpop.f32.mrf.mxu0
      %v3011 = vadd.f32 0.0, %v3010
      %v3012 = vpop.f32.mrf.mxu0
      %3013 = vmatprep.mubr.f32.mxu0 0.0
      %3014 = vmatmul.mubr.f32.gmra.mxu0 %v2737
      %v3015 = vpop.f32.mrf.mxu0
      %v3016 = vadd.f32 0.0, %v3015
      %v3017 = vpop.f32.mrf.mxu0
      %3018 = vmatprep.mubr.f32.mxu0 0.0
      %3019 = vmatmul.mubr.f32.gmra.mxu0 %v2739
      %v3020 = vpop.f32.mrf.mxu0
      %v3021 = vadd.f32 0.0, %v3020
      %v3022 = vpop.f32.mrf.mxu0
      %3023 = vmatprep.mubr.f32.mxu0 0.0
      %3024 = vmatmul.mubr.f32.gmra.mxu0 %v2741
      %v3025 = vpop.f32.mrf.mxu0
      %v3026 = vadd.f32 0.0, %v3025
      %v3027 = vpop.f32.mrf.mxu0
      %3028 = vdwg.mxu0
      %v3029 = vmul.f32 %v2878, %v1168
      %v3030 = vmul.f32 %v2880, %v1169
      %v3031 = vmul.f32 %v2991, %v1170
      %v3032 = vmul.f32 %v2884, %v1171
      %v3033 = vmul.f32 %v2886, %v1172
      %v3034 = vmul.f32 %v2996, %v1173
      %v3035 = vmul.f32 %v2890, %v1174
      %v3036 = vmul.f32 %v2892, %v1175
      %v3037 = vmul.f32 %v3001, %v1176
      %v3038 = vmul.f32 %v2896, %v1177
      %v3039 = vmul.f32 %v2898, %v1178
      %v3040 = vmul.f32 %v3006, %v1179
      %v3041 = vmul.f32 %v2902, %v1180
      %v3042 = vmul.f32 %v2904, %v1181
      %v3043 = vmul.f32 %v3011, %v1182
      %v3044 = vmul.f32 %v2908, %v1183
      %v3045 = vmul.f32 %v2910, %v1184
      %v3046 = vmul.f32 %v3016, %v1185
      %v3047 = vmul.f32 %v2914, %v1186
      %v3048 = vmul.f32 %v2916, %v1187
      %v3049 = vmul.f32 %v3021, %v1188
      %v3050 = vmul.f32 %v2920, %v1189
      %v3051 = vmul.f32 %v2922, %v1190
      %v3052 = vmul.f32 %v3026, %v1191
      %3053 = vrot.lane.b32.xlu0 %v796, 80
      %v3054 = vpop.permute.xlu0 %3053
      %3055 = vrot.lane.b32.xlu0 %v801, 80
      %v3056 = vpop.permute.xlu0 %3055
      %3057 = vrot.lane.b32.xlu0 %v1010, 80
      %v3058 = vpop.permute.xlu0 %3057
      %3059 = vrot.lane.b32.xlu0 %v1015, 80
      %v3060 = vpop.permute.xlu0 %3059
      %3061 = vrot.lane.b32.xlu0 %v1020, 80
      %v3062 = vpop.permute.xlu0 %3061
      %3063 = vrot.lane.b32.xlu0 %v1025, 80
      %v3064 = vpop.permute.xlu0 %3063
      %3065 = vrot.lane.b32.xlu0 %v1030, 80
      %v3066 = vpop.permute.xlu0 %3065
      %3067 = vrot.lane.b32.xlu0 %v1035, 80
      %v3068 = vpop.permute.xlu0 %3067
      %3069 = vrot.lane.b32.xlu0 %v1040, 80
      %v3070 = vpop.permute.xlu0 %3069
      %3071 = vrot.lane.b32.xlu0 %v1045, 80
      %v3072 = vpop.permute.xlu0 %3071
      %3073 = vrot.lane.b32.xlu0 %v1050, 80
      %v3074 = vpop.permute.xlu0 %3073
      %3075 = vrot.lane.b32.xlu0 %v1055, 80
      %v3076 = vpop.permute.xlu0 %3075
      %3077 = vrot.lane.b32.xlu0 %v1060, 80
      %v3078 = vpop.permute.xlu0 %3077
      %3079 = vrot.lane.b32.xlu0 %v1065, 80
      %v3080 = vpop.permute.xlu0 %3079
      %3081 = vrot.lane.b32.xlu0 %v1070, 80
      %v3082 = vpop.permute.xlu0 %3081
      %3083 = vrot.lane.b32.xlu0 %v1075, 80
      %v3084 = vpop.permute.xlu0 %3083
      %3085 = vrot.lane.b32.xlu0 %v1080, 80
      %v3086 = vpop.permute.xlu0 %3085
      %3087 = vrot.lane.b32.xlu0 %v1085, 80
      %v3088 = vpop.permute.xlu0 %3087
      %3089 = vrot.lane.b32.xlu0 %v1090, 80
      %v3090 = vpop.permute.xlu0 %3089
      %3091 = vrot.lane.b32.xlu0 %v1095, 80
      %v3092 = vpop.permute.xlu0 %3091
      %3093 = vrot.lane.b32.xlu0 %v1100, 80
      %v3094 = vpop.permute.xlu0 %3093
      %3095 = vrot.lane.b32.xlu0 %v1105, 80
      %v3096 = vpop.permute.xlu0 %3095
      %3097 = vrot.lane.b32.xlu0 %v1110, 80
      %v3098 = vpop.permute.xlu0 %3097
      %3099 = vrot.lane.b32.xlu0 %v1115, 80
      %v3100 = vpop.permute.xlu0 %3099
      %3101 = vrot.lane.b32.xlu0 %v1120, 80
      %v3102 = vpop.permute.xlu0 %3101
      %3103 = vrot.lane.b32.xlu0 %v1125, 80
      %v3104 = vpop.permute.xlu0 %3103
      %3105 = vrot.lane.b32.xlu0 %v1130, 80
      %v3106 = vpop.permute.xlu0 %3105
      %3107 = vrot.lane.b32.xlu0 %v1135, 80
      %v3108 = vpop.permute.xlu0 %3107
      %3109 = vrot.lane.b32.xlu0 %v1140, 80
      %v3110 = vpop.permute.xlu0 %3109
      %3111 = vrot.lane.b32.xlu0 %v1145, 80
      %v3112 = vpop.permute.xlu0 %3111
      %3113 = vrot.lane.b32.xlu0 %v1150, 80
      %v3114 = vpop.permute.xlu0 %3113
      %3115 = vrot.lane.b32.xlu0 %v1155, 80
      %v3116 = vpop.permute.xlu0 %3115
      %3117 = vrot.lane.b32.xlu0 %v1160, 80
      %v3118 = vpop.permute.xlu0 %3117
      %3119 = vrot.lane.b32.xlu0 %v1165, 80
      %v3120 = vpop.permute.xlu0 %3119
      %v3156 = vsel %vm722, %v3031, 0
      %v3159 = vsel %vm722, %v3034, 0
      %v3162 = vsel %vm722, %v3037, 0
      %v3165 = vsel %vm722, %v3040, 0
      %v3168 = vsel %vm722, %v3043, 0
      %v3171 = vsel %vm722, %v3046, 0
      %v3174 = vsel %vm722, %v3049, 0
      %v3177 = vsel %vm722, %v3052, 0
      %3179 = vmatprep.subr.mxu0 0.0
      %3180 = vmatpush1.msra.mxu0 %v3084
      %3181 = vmatprep.subr.mxu0 0.0
      %3182 = vmatpush1.msra.mxu0 %v3082
      %3183 = vmatprep.subr.mxu0 0.0
      %3184 = vmatpush1.msra.mxu0 %v3080
      %3185 = vmatprep.subr.mxu0 0.0
      %3186 = vmatpush1.msra.mxu0 %v3078
      %3187 = vmatprep.subr.mxu0 0.0
      %3188 = vmatpush1.msra.mxu0 %v3076
      %3189 = vmatprep.subr.mxu0 0.0
      %3190 = vmatpush1.msra.mxu0 %v3074
      %3191 = vmatprep.subr.mxu0 0.0
      %3192 = vmatpush1.msra.mxu0 %v3072
      %3193 = vmatprep.subr.mxu0 0.0
      %3194 = vmatpush1.msra.mxu0 %v3070
      %3195 = vmatprep.subr.mxu0 0.0
      %3196 = vmatpush1.msra.mxu0 %v3068
      %3197 = vmatprep.subr.mxu0 0.0
      %3198 = vmatpush1.msra.mxu0 %v3066
      %3199 = vmatprep.subr.mxu0 0.0
      %3200 = vmatpush1.msra.mxu0 %v3064
      %3201 = vmatprep.subr.mxu0 0.0
      %3202 = vmatpush1.msra.mxu0 %v3062
      %3203 = vmatprep.subr.mxu0 0.0
      %3204 = vmatpush1.msra.mxu0 %v3060
      %3205 = vmatprep.subr.mxu0 0.0
      %3206 = vmatpush1.msra.mxu0 %v3058
      %3207 = vmatprep.subr.mxu0 0.0
      %3208 = vmatpush1.msra.mxu0 %v3056
      %3209 = vmatprep.subr.mxu0 0.0
      %3210 = vmatpush1.msra.mxu0 %v3054
      %3211 = vmatprep.subr.mxu0 0.0
      %3212 = vmatpush2.msra.mxu0 %v3116
      %3213 = vmatprep.subr.mxu0 0.0
      %3214 = vmatpush2.msra.mxu0 %v3114
      %3215 = vmatprep.subr.mxu0 0.0
      %3216 = vmatpush2.msra.mxu0 %v3112
      %3217 = vmatprep.subr.mxu0 0.0
      %3218 = vmatpush2.msra.mxu0 %v3110
      %3219 = vmatprep.subr.mxu0 0.0
      %3220 = vmatpush2.msra.mxu0 %v3108
      %3221 = vmatprep.subr.mxu0 0.0
      %3222 = vmatpush2.msra.mxu0 %v3106
      %3223 = vmatprep.subr.mxu0 0.0
      %3224 = vmatpush2.msra.mxu0 %v3104
      %3225 = vmatprep.subr.mxu0 0.0
      %3226 = vmatpush2.msra.mxu0 %v3102
      %3227 = vmatprep.subr.mxu0 0.0
      %3228 = vmatpush2.msra.mxu0 %v3100
      %3229 = vmatprep.subr.mxu0 0.0
      %3230 = vmatpush2.msra.mxu0 %v3098
      %3231 = vmatprep.subr.mxu0 0.0
      %3232 = vmatpush2.msra.mxu0 %v3096
      %3233 = vmatprep.subr.mxu0 0.0
      %3234 = vmatpush2.msra.mxu0 %v3094
      %3235 = vmatprep.subr.mxu0 0.0
      %3236 = vmatpush2.msra.mxu0 %v3092
      %3237 = vmatprep.subr.mxu0 0.0
      %3238 = vmatpush2.msra.mxu0 %v3090
      %3239 = vmatprep.subr.mxu0 0.0
      %3240 = vmatpush2.msra.mxu0 %v3088
      %3241 = vmatprep.subr.mxu0 0.0
      %3242 = vmatpush2.msra.mxu0 %v3086
      %3243 = vmatprep.mubr.f32.mxu0 %v3030
      %3244 = vmatmul.mubr.f32.gmra.mxu0 %v3029
      %v3245 = vpop.f32.mrf.mxu0
      %v3246 = vadd.f32 0.0, %v3245
      %v3247 = vpop.f32.mrf.mxu0
      %3248 = vmatprep.mubr.f32.mxu0 %v3033
      %3249 = vmatmul.mubr.f32.gmra.mxu0 %v3032
      %v3250 = vpop.f32.mrf.mxu0
      %v3251 = vadd.f32 0.0, %v3250
      %v3252 = vpop.f32.mrf.mxu0
      %3253 = vmatprep.mubr.f32.mxu0 %v3036
      %3254 = vmatmul.mubr.f32.gmra.mxu0 %v3035
      %v3255 = vpop.f32.mrf.mxu0
      %v3256 = vadd.f32 0.0, %v3255
      %v3257 = vpop.f32.mrf.mxu0
      %3258 = vmatprep.mubr.f32.mxu0 %v3039
      %3259 = vmatmul.mubr.f32.gmra.mxu0 %v3038
      %v3260 = vpop.f32.mrf.mxu0
      %v3261 = vadd.f32 0.0, %v3260
      %v3262 = vpop.f32.mrf.mxu0
      %3263 = vmatprep.mubr.f32.mxu0 %v3042
      %3264 = vmatmul.mubr.f32.gmra.mxu0 %v3041
      %v3265 = vpop.f32.mrf.mxu0
      %v3266 = vadd.f32 0.0, %v3265
      %v3267 = vpop.f32.mrf.mxu0
      %3268 = vmatprep.mubr.f32.mxu0 %v3045
      %3269 = vmatmul.mubr.f32.gmra.mxu0 %v3044
      %v3270 = vpop.f32.mrf.mxu0
      %v3271 = vadd.f32 0.0, %v3270
      %v3272 = vpop.f32.mrf.mxu0
      %3273 = vmatprep.mubr.f32.mxu0 %v3048
      %3274 = vmatmul.mubr.f32.gmra.mxu0 %v3047
      %v3275 = vpop.f32.mrf.mxu0
      %v3276 = vadd.f32 0.0, %v3275
      %v3277 = vpop.f32.mrf.mxu0
      %3278 = vmatprep.mubr.f32.mxu0 %v3051
      %3279 = vmatmul.mubr.f32.gmra.mxu0 %v3050
      %v3280 = vpop.f32.mrf.mxu0
      %v3281 = vadd.f32 0.0, %v3280
      %v3282 = vpop.f32.mrf.mxu0
      %3283 = vdwg.mxu0
      %3284 = vmatprep.subr.mxu0 0.0
      %3285 = vmatpush1.msra.mxu0 0.0
      %3286 = vmatprep.subr.mxu0 0.0
      %3287 = vmatpush1.msra.mxu0 0.0
      %3288 = vmatprep.subr.mxu0 0.0
      %3289 = vmatpush1.msra.mxu0 0.0
      %3290 = vmatprep.subr.mxu0 0.0
      %3291 = vmatpush1.msra.mxu0 0.0
      %3292 = vmatprep.subr.mxu0 0.0
      %3293 = vmatpush1.msra.mxu0 0.0
      %3294 = vmatprep.subr.mxu0 0.0
      %3295 = vmatpush1.msra.mxu0 0.0
      %3296 = vmatprep.subr.mxu0 0.0
      %3297 = vmatpush1.msra.mxu0 0.0
      %3298 = vmatprep.subr.mxu0 0.0
      %3299 = vmatpush1.msra.mxu0 0.0
      %3300 = vmatprep.subr.mxu0 0.0
      %3301 = vmatpush1.msra.mxu0 0.0
      %3302 = vmatprep.subr.mxu0 0.0
      %3303 = vmatpush1.msra.mxu0 0.0
      %3304 = vmatprep.subr.mxu0 0.0
      %3305 = vmatpush1.msra.mxu0 0.0
      %3306 = vmatprep.subr.mxu0 0.0
      %3307 = vmatpush1.msra.mxu0 0.0
      %3308 = vmatprep.subr.mxu0 0.0
      %3309 = vmatpush1.msra.mxu0 0.0
      %3310 = vmatprep.subr.mxu0 0.0
      %3311 = vmatpush1.msra.mxu0 0.0
      %3312 = vmatprep.subr.mxu0 0.0
      %3313 = vmatpush1.msra.mxu0 %v3120
      %3314 = vmatprep.subr.mxu0 0.0
      %3315 = vmatpush1.msra.mxu0 %v3118
      %3316 = vmatprep.subr.mxu0 0.0
      %3317 = vmatpush2.msra.mxu0 0.0
      %3318 = vmatprep.subr.mxu0 0.0
      %3319 = vmatpush2.msra.mxu0 0.0
      %3320 = vmatprep.subr.mxu0 0.0
      %3321 = vmatpush2.msra.mxu0 0.0
      %3322 = vmatprep.subr.mxu0 0.0
      %3323 = vmatpush2.msra.mxu0 0.0
      %3324 = vmatprep.subr.mxu0 0.0
      %3325 = vmatpush2.msra.mxu0 0.0
      %3326 = vmatprep.subr.mxu0 0.0
      %3327 = vmatpush2.msra.mxu0 0.0
      %3328 = vmatprep.subr.mxu0 0.0
      %3329 = vmatpush2.msra.mxu0 0.0
      %3330 = vmatprep.subr.mxu0 0.0
      %3331 = vmatpush2.msra.mxu0 0.0
      %3332 = vmatprep.subr.mxu0 0.0
      %3333 = vmatpush2.msra.mxu0 0.0
      %3334 = vmatprep.subr.mxu0 0.0
      %3335 = vmatpush2.msra.mxu0 0.0
      %3336 = vmatprep.subr.mxu0 0.0
      %3337 = vmatpush2.msra.mxu0 0.0
      %3338 = vmatprep.subr.mxu0 0.0
      %3339 = vmatpush2.msra.mxu0 0.0
      %3340 = vmatprep.subr.mxu0 0.0
      %3341 = vmatpush2.msra.mxu0 0.0
      %3342 = vmatprep.subr.mxu0 0.0
      %3343 = vmatpush2.msra.mxu0 0.0
      %3344 = vmatprep.subr.mxu0 0.0
      %3345 = vmatpush2.msra.mxu0 0.0
      %3346 = vmatprep.subr.mxu0 0.0
      %3347 = vmatpush2.msra.mxu0 0.0
      %3348 = vmatprep.mubr.f32.mxu0 0.0
      %3349 = vmatmul.mubr.f32.gmra.mxu0 %v3156
      %v3350 = vpop.f32.mrf.mxu0
      %v3351 = vadd.f32 %v3246, %v3350
      %v3352 = vpop.f32.mrf.mxu0
      %3353 = vmatprep.mubr.f32.mxu0 0.0
      %3354 = vmatmul.mubr.f32.gmra.mxu0 %v3159
      %v3355 = vpop.f32.mrf.mxu0
      %v3356 = vadd.f32 %v3251, %v3355
      %v3357 = vpop.f32.mrf.mxu0
      %3358 = vmatprep.mubr.f32.mxu0 0.0
      %3359 = vmatmul.mubr.f32.gmra.mxu0 %v3162
      %v3360 = vpop.f32.mrf.mxu0
      %v3361 = vadd.f32 %v3256, %v3360
      %v3362 = vpop.f32.mrf.mxu0
      %3363 = vmatprep.mubr.f32.mxu0 0.0
      %3364 = vmatmul.mubr.f32.gmra.mxu0 %v3165
      %v3365 = vpop.f32.mrf.mxu0
      %v3366 = vadd.f32 %v3261, %v3365
      %v3367 = vpop.f32.mrf.mxu0
      %3368 = vmatprep.mubr.f32.mxu0 0.0
      %3369 = vmatmul.mubr.f32.gmra.mxu0 %v3168
      %v3370 = vpop.f32.mrf.mxu0
      %v3371 = vadd.f32 %v3266, %v3370
      %v3372 = vpop.f32.mrf.mxu0
      %3373 = vmatprep.mubr.f32.mxu0 0.0
      %3374 = vmatmul.mubr.f32.gmra.mxu0 %v3171
      %v3375 = vpop.f32.mrf.mxu0
      %v3376 = vadd.f32 %v3271, %v3375
      %v3377 = vpop.f32.mrf.mxu0
      %3378 = vmatprep.mubr.f32.mxu0 0.0
      %3379 = vmatmul.mubr.f32.gmra.mxu0 %v3174
      %v3380 = vpop.f32.mrf.mxu0
      %v3381 = vadd.f32 %v3276, %v3380
      %v3382 = vpop.f32.mrf.mxu0
      %3383 = vmatprep.mubr.f32.mxu0 0.0
      %3384 = vmatmul.mubr.f32.gmra.mxu0 %v3177
      %v3385 = vpop.f32.mrf.mxu0
      %v3386 = vadd.f32 %v3281, %v3385
      %v3387 = vpop.f32.mrf.mxu0
      %3388 = vdwg.mxu0
      %3389 = vrot.lane.b32.xlu0 %v673, 104
      %v3390 = vpop.permute.xlu0 %3389
      %3391 = vrot.lane.b32.xlu0 %v678, 104
      %v3392 = vpop.permute.xlu0 %3391
      %3393 = vrot.lane.b32.xlu0 %v683, 104
      %v3394 = vpop.permute.xlu0 %3393
      %3395 = vrot.lane.b32.xlu0 %v688, 104
      %v3396 = vpop.permute.xlu0 %3395
      %3397 = vrot.lane.b32.xlu0 %v693, 104
      %v3398 = vpop.permute.xlu0 %3397
      %3399 = vrot.lane.b32.xlu0 %v698, 104
      %v3400 = vpop.permute.xlu0 %3399
      %3401 = vrot.lane.b32.xlu0 %v703, 104
      %v3402 = vpop.permute.xlu0 %3401
      %3403 = vrot.lane.b32.xlu0 %v708, 104
      %v3404 = vpop.permute.xlu0 %3403
      %3405 = vrot.lane.b32.xlu0 %v796, 104
      %v3406 = vpop.permute.xlu0 %3405
      %3407 = vrot.lane.b32.xlu0 %v801, 104
      %v3408 = vpop.permute.xlu0 %3407
      %3409 = vrot.lane.b32.xlu0 %v1010, 104
      %v3410 = vpop.permute.xlu0 %3409
      %3411 = vrot.lane.b32.xlu0 %v1015, 104
      %v3412 = vpop.permute.xlu0 %3411
      %3413 = vrot.lane.b32.xlu0 %v1020, 104
      %v3414 = vpop.permute.xlu0 %3413
      %3415 = vrot.lane.b32.xlu0 %v1025, 104
      %v3416 = vpop.permute.xlu0 %3415
      %3417 = vrot.lane.b32.xlu0 %v1030, 104
      %v3418 = vpop.permute.xlu0 %3417
      %3419 = vrot.lane.b32.xlu0 %v1035, 104
      %v3420 = vpop.permute.xlu0 %3419
      %3421 = vrot.lane.b32.xlu0 %v1040, 104
      %v3422 = vpop.permute.xlu0 %3421
      %3423 = vrot.lane.b32.xlu0 %v1045, 104
      %v3424 = vpop.permute.xlu0 %3423
      %3425 = vrot.lane.b32.xlu0 %v1050, 104
      %v3426 = vpop.permute.xlu0 %3425
      %3427 = vrot.lane.b32.xlu0 %v1055, 104
      %v3428 = vpop.permute.xlu0 %3427
      %3429 = vrot.lane.b32.xlu0 %v1060, 104
      %v3430 = vpop.permute.xlu0 %3429
      %3431 = vrot.lane.b32.xlu0 %v1065, 104
      %v3432 = vpop.permute.xlu0 %3431
      %3433 = vrot.lane.b32.xlu0 %v1070, 104
      %v3434 = vpop.permute.xlu0 %3433
      %3435 = vrot.lane.b32.xlu0 %v1075, 104
      %v3436 = vpop.permute.xlu0 %3435
      %3437 = vrot.lane.b32.xlu0 %v1080, 104
      %v3438 = vpop.permute.xlu0 %3437
      %3439 = vrot.lane.b32.xlu0 %v1085, 104
      %v3440 = vpop.permute.xlu0 %3439
      %3441 = vrot.lane.b32.xlu0 %v1090, 104
      %v3442 = vpop.permute.xlu0 %3441
      %3443 = vrot.lane.b32.xlu0 %v1095, 104
      %v3444 = vpop.permute.xlu0 %3443
      %3445 = vrot.lane.b32.xlu0 %v1100, 104
      %v3446 = vpop.permute.xlu0 %3445
      %3447 = vrot.lane.b32.xlu0 %v1105, 104
      %v3448 = vpop.permute.xlu0 %3447
      %3449 = vrot.lane.b32.xlu0 %v1110, 104
      %v3450 = vpop.permute.xlu0 %3449
      %3451 = vrot.lane.b32.xlu0 %v1115, 104
      %v3452 = vpop.permute.xlu0 %3451
      %3453 = vrot.lane.b32.xlu0 %v1120, 104
      %v3454 = vpop.permute.xlu0 %3453
      %3455 = vrot.lane.b32.xlu0 %v1125, 104
      %v3456 = vpop.permute.xlu0 %3455
      %3457 = vrot.lane.b32.xlu0 %v1130, 104
      %v3458 = vpop.permute.xlu0 %3457
      %3459 = vrot.lane.b32.xlu0 %v1135, 104
      %v3460 = vpop.permute.xlu0 %3459
      %3461 = vrot.lane.b32.xlu0 %v1140, 104
      %v3462 = vpop.permute.xlu0 %3461
      %3463 = vrot.lane.b32.xlu0 %v1145, 104
      %v3464 = vpop.permute.xlu0 %3463
      %3465 = vrot.lane.b32.xlu0 %v1150, 104
      %v3466 = vpop.permute.xlu0 %3465
      %3467 = vrot.lane.b32.xlu0 %v1155, 104
      %v3468 = vpop.permute.xlu0 %3467
      %3469 = vrot.lane.b32.xlu0 %v1160, 104
      %v3470 = vpop.permute.xlu0 %3469
      %3471 = vrot.lane.b32.xlu0 %v1165, 104
      %v3472 = vpop.permute.xlu0 %3471
      %v3473 = vsel %vm1192, %v3390, 0
      %v3475 = vsel %vm1192, %v3392, 0
      %v3477 = vsel %vm1192, %v3394, 0
      %v3479 = vsel %vm1192, %v3396, 0
      %v3481 = vsel %vm1192, %v3398, 0
      %v3483 = vsel %vm1192, %v3400, 0
      %v3485 = vsel %vm1192, %v3402, 0
      %v3487 = vsel %vm1192, %v3404, 0
      %v3489 = vsel %vm1192, %v3406, 0
      %v3491 = vsel %vm1192, %v3408, 0
      %v3493 = vsel %vm1192, %v3410, 0
      %v3495 = vsel %vm1192, %v3412, 0
      %v3497 = vsel %vm1192, %v3414, 0
      %v3499 = vsel %vm1192, %v3416, 0
      %v3501 = vsel %vm1192, %v3418, 0
      %v3503 = vsel %vm1192, %v3420, 0
      %v3505 = vsel %vm1192, %v3422, 0
      %v3507 = vsel %vm1192, %v3424, 0
      %v3509 = vsel %vm1192, %v3426, 0
      %v3511 = vsel %vm1192, %v3428, 0
      %v3513 = vsel %vm1192, %v3430, 0
      %v3515 = vsel %vm1192, %v3432, 0
      %v3517 = vsel %vm1192, %v3434, 0
      %v3519 = vsel %vm1192, %v3436, 0
      %v3521 = vsel %vm1192, %v3438, 0
      %v3523 = vsel %vm1192, %v3440, 0
      %v3525 = vsel %vm1192, %v3442, 0
      %v3527 = vsel %vm1192, %v3444, 0
      %v3529 = vsel %vm1192, %v3446, 0
      %v3531 = vsel %vm1192, %v3448, 0
      %v3533 = vsel %vm1192, %v3450, 0
      %v3535 = vsel %vm1192, %v3452, 0
      %v3537 = vsel %vm1192, %v3454, 0
      %v3539 = vsel %vm1192, %v3456, 0
      %v3541 = vsel %vm1192, %v3458, 0
      %v3543 = vsel %vm1192, %v3460, 0
      %v3545 = vsel %vm1192, %v3462, 0
      %v3547 = vsel %vm1192, %v3464, 0
      %v3549 = vsel %vm1192, %v3466, 0
      %v3551 = vsel %vm1192, %v3468, 0
      %v3553 = vsel %vm1192, %v3470, 0
      %v3555 = vsel %vm1192, %v3472, 0
      %3557 = vmatprep.subr.mxu0 0.0
      %3558 = vmatpush1.xpose.msra.mxu0 %v3519
      %3559 = vmatprep.subr.mxu0 0.0
      %3560 = vmatpush1.xpose.msra.mxu0 %v3517
      %3561 = vmatprep.subr.mxu0 0.0
      %3562 = vmatpush1.xpose.msra.mxu0 %v3515
      %3563 = vmatprep.subr.mxu0 0.0
      %3564 = vmatpush1.xpose.msra.mxu0 %v3513
      %3565 = vmatprep.subr.mxu0 0.0
      %3566 = vmatpush1.xpose.msra.mxu0 %v3511
      %3567 = vmatprep.subr.mxu0 0.0
      %3568 = vmatpush1.xpose.msra.mxu0 %v3509
      %3569 = vmatprep.subr.mxu0 0.0
      %3570 = vmatpush1.xpose.msra.mxu0 %v3507
      %3571 = vmatprep.subr.mxu0 0.0
      %3572 = vmatpush1.xpose.msra.mxu0 %v3505
      %3573 = vmatprep.subr.mxu0 0.0
      %3574 = vmatpush1.xpose.msra.mxu0 %v3503
      %3575 = vmatprep.subr.mxu0 0.0
      %3576 = vmatpush1.xpose.msra.mxu0 %v3501
      %3577 = vmatprep.subr.mxu0 0.0
      %3578 = vmatpush1.xpose.msra.mxu0 %v3499
      %3579 = vmatprep.subr.mxu0 0.0
      %3580 = vmatpush1.xpose.msra.mxu0 %v3497
      %3581 = vmatprep.subr.mxu0 0.0
      %3582 = vmatpush1.xpose.msra.mxu0 %v3495
      %3583 = vmatprep.subr.mxu0 0.0
      %3584 = vmatpush1.xpose.msra.mxu0 %v3493
      %3585 = vmatprep.subr.mxu0 0.0
      %3586 = vmatpush1.xpose.msra.mxu0 %v3491
      %3587 = vmatprep.subr.mxu0 0.0
      %3588 = vmatpush1.xpose.msra.mxu0 %v3489
      %3589 = vmatprep.subr.mxu0 0.0
      %3590 = vmatpush2.xpose.msra.mxu0 %v3551
      %3591 = vmatprep.subr.mxu0 0.0
      %3592 = vmatpush2.xpose.msra.mxu0 %v3549
      %3593 = vmatprep.subr.mxu0 0.0
      %3594 = vmatpush2.xpose.msra.mxu0 %v3547
      %3595 = vmatprep.subr.mxu0 0.0
      %3596 = vmatpush2.xpose.msra.mxu0 %v3545
      %3597 = vmatprep.subr.mxu0 0.0
      %3598 = vmatpush2.xpose.msra.mxu0 %v3543
      %3599 = vmatprep.subr.mxu0 0.0
      %3600 = vmatpush2.xpose.msra.mxu0 %v3541
      %3601 = vmatprep.subr.mxu0 0.0
      %3602 = vmatpush2.xpose.msra.mxu0 %v3539
      %3603 = vmatprep.subr.mxu0 0.0
      %3604 = vmatpush2.xpose.msra.mxu0 %v3537
      %3605 = vmatprep.subr.mxu0 0.0
      %3606 = vmatpush2.xpose.msra.mxu0 %v3535
      %3607 = vmatprep.subr.mxu0 0.0
      %3608 = vmatpush2.xpose.msra.mxu0 %v3533
      %3609 = vmatprep.subr.mxu0 0.0
      %3610 = vmatpush2.xpose.msra.mxu0 %v3531
      %3611 = vmatprep.subr.mxu0 0.0
      %3612 = vmatpush2.xpose.msra.mxu0 %v3529
      %3613 = vmatprep.subr.mxu0 0.0
      %3614 = vmatpush2.xpose.msra.mxu0 %v3527
      %3615 = vmatprep.subr.mxu0 0.0
      %3616 = vmatpush2.xpose.msra.mxu0 %v3525
      %3617 = vmatprep.subr.mxu0 0.0
      %3618 = vmatpush2.xpose.msra.mxu0 %v3523
      %3619 = vmatprep.subr.mxu0 0.0
      %3620 = vmatpush2.xpose.msra.mxu0 %v3521
      %3621 = vmatprep.mubr.f32.mxu0 0.0
      %3622 = vmatmul.mubr.f32.gmra.mxu0 %v3473
      %v3623 = vpop.f32.mrf.mxu0
      %v3624 = vadd.f32 0.0, %v3623
      %v3625 = vpop.f32.mrf.mxu0
      %v3626 = vadd.f32 0.0, %v3625
      %3627 = vmatprep.mubr.f32.mxu0 0.0
      %3628 = vmatmul.mubr.f32.gmra.mxu0 %v3475
      %v3629 = vpop.f32.mrf.mxu0
      %v3630 = vadd.f32 0.0, %v3629
      %v3631 = vpop.f32.mrf.mxu0
      %v3632 = vadd.f32 0.0, %v3631
      %3633 = vmatprep.mubr.f32.mxu0 0.0
      %3634 = vmatmul.mubr.f32.gmra.mxu0 %v3477
      %v3635 = vpop.f32.mrf.mxu0
      %v3636 = vadd.f32 0.0, %v3635
      %v3637 = vpop.f32.mrf.mxu0
      %v3638 = vadd.f32 0.0, %v3637
      %3639 = vmatprep.mubr.f32.mxu0 0.0
      %3640 = vmatmul.mubr.f32.gmra.mxu0 %v3479
      %v3641 = vpop.f32.mrf.mxu0
      %v3642 = vadd.f32 0.0, %v3641
      %v3643 = vpop.f32.mrf.mxu0
      %v3644 = vadd.f32 0.0, %v3643
      %3645 = vmatprep.mubr.f32.mxu0 0.0
      %3646 = vmatmul.mubr.f32.gmra.mxu0 %v3481
      %v3647 = vpop.f32.mrf.mxu0
      %v3648 = vadd.f32 0.0, %v3647
      %v3649 = vpop.f32.mrf.mxu0
      %v3650 = vadd.f32 0.0, %v3649
      %3651 = vmatprep.mubr.f32.mxu0 0.0
      %3652 = vmatmul.mubr.f32.gmra.mxu0 %v3483
      %v3653 = vpop.f32.mrf.mxu0
      %v3654 = vadd.f32 0.0, %v3653
      %v3655 = vpop.f32.mrf.mxu0
      %v3656 = vadd.f32 0.0, %v3655
      %3657 = vmatprep.mubr.f32.mxu0 0.0
      %3658 = vmatmul.mubr.f32.gmra.mxu0 %v3485
      %v3659 = vpop.f32.mrf.mxu0
      %v3660 = vadd.f32 0.0, %v3659
      %v3661 = vpop.f32.mrf.mxu0
      %v3662 = vadd.f32 0.0, %v3661
      %3663 = vmatprep.mubr.f32.mxu0 0.0
      %3664 = vmatmul.mubr.f32.gmra.mxu0 %v3487
      %v3665 = vpop.f32.mrf.mxu0
      %v3666 = vadd.f32 0.0, %v3665
      %v3667 = vpop.f32.mrf.mxu0
      %v3668 = vadd.f32 0.0, %v3667
      %3669 = vdwg.mxu0
      %3670 = vmatprep.subr.mxu0 0.0
      %3671 = vmatpush1.xpose.msra.mxu0 0.0
      %3672 = vmatprep.subr.mxu0 0.0
      %3673 = vmatpush1.xpose.msra.mxu0 0.0
      %3674 = vmatprep.subr.mxu0 0.0
      %3675 = vmatpush1.xpose.msra.mxu0 0.0
      %3676 = vmatprep.subr.mxu0 0.0
      %3677 = vmatpush1.xpose.msra.mxu0 0.0
      %3678 = vmatprep.subr.mxu0 0.0
      %3679 = vmatpush1.xpose.msra.mxu0 0.0
      %3680 = vmatprep.subr.mxu0 0.0
      %3681 = vmatpush1.xpose.msra.mxu0 0.0
      %3682 = vmatprep.subr.mxu0 0.0
      %3683 = vmatpush1.xpose.msra.mxu0 0.0
      %3684 = vmatprep.subr.mxu0 0.0
      %3685 = vmatpush1.xpose.msra.mxu0 0.0
      %3686 = vmatprep.subr.mxu0 0.0
      %3687 = vmatpush1.xpose.msra.mxu0 0.0
      %3688 = vmatprep.subr.mxu0 0.0
      %3689 = vmatpush1.xpose.msra.mxu0 0.0
      %3690 = vmatprep.subr.mxu0 0.0
      %3691 = vmatpush1.xpose.msra.mxu0 0.0
      %3692 = vmatprep.subr.mxu0 0.0
      %3693 = vmatpush1.xpose.msra.mxu0 0.0
      %3694 = vmatprep.subr.mxu0 0.0
      %3695 = vmatpush1.xpose.msra.mxu0 0.0
      %3696 = vmatprep.subr.mxu0 0.0
      %3697 = vmatpush1.xpose.msra.mxu0 0.0
      %3698 = vmatprep.subr.mxu0 0.0
      %3699 = vmatpush1.xpose.msra.mxu0 %v3555
      %3700 = vmatprep.subr.mxu0 0.0
      %3701 = vmatpush1.xpose.msra.mxu0 %v3553
      %3702 = vmatprep.subr.mxu0 0.0
      %3703 = vmatpush2.xpose.msra.mxu0 0.0
      %3704 = vmatprep.subr.mxu0 0.0
      %3705 = vmatpush2.xpose.msra.mxu0 0.0
      %3706 = vmatprep.subr.mxu0 0.0
      %3707 = vmatpush2.xpose.msra.mxu0 0.0
      %3708 = vmatprep.subr.mxu0 0.0
      %3709 = vmatpush2.xpose.msra.mxu0 0.0
      %3710 = vmatprep.subr.mxu0 0.0
      %3711 = vmatpush2.xpose.msra.mxu0 0.0
      %3712 = vmatprep.subr.mxu0 0.0
      %3713 = vmatpush2.xpose.msra.mxu0 0.0
      %3714 = vmatprep.subr.mxu0 0.0
      %3715 = vmatpush2.xpose.msra.mxu0 0.0
      %3716 = vmatprep.subr.mxu0 0.0
      %3717 = vmatpush2.xpose.msra.mxu0 0.0
      %3718 = vmatprep.subr.mxu0 0.0
      %3719 = vmatpush2.xpose.msra.mxu0 0.0
      %3720 = vmatprep.subr.mxu0 0.0
      %3721 = vmatpush2.xpose.msra.mxu0 0.0
      %3722 = vmatprep.subr.mxu0 0.0
      %3723 = vmatpush2.xpose.msra.mxu0 0.0
      %3724 = vmatprep.subr.mxu0 0.0
      %3725 = vmatpush2.xpose.msra.mxu0 0.0
      %3726 = vmatprep.subr.mxu0 0.0
      %3727 = vmatpush2.xpose.msra.mxu0 0.0
      %3728 = vmatprep.subr.mxu0 0.0
      %3729 = vmatpush2.xpose.msra.mxu0 0.0
      %3730 = vmatprep.subr.mxu0 0.0
      %3731 = vmatpush2.xpose.msra.mxu0 0.0
      %3732 = vmatprep.subr.mxu0 0.0
      %3733 = vmatpush2.xpose.msra.mxu0 0.0
      %3734 = vmatprep.mubr.f32.mxu0 0.0
      %3735 = vmatmul.mubr.f32.gmra.mxu0 %v3473
      %v3736 = vpop.f32.mrf.mxu0
      %v3737 = vadd.f32 0.0, %v3736
      %v3738 = vpop.f32.mrf.mxu0
      %3739 = vmatprep.mubr.f32.mxu0 0.0
      %3740 = vmatmul.mubr.f32.gmra.mxu0 %v3475
      %v3741 = vpop.f32.mrf.mxu0
      %v3742 = vadd.f32 0.0, %v3741
      %v3743 = vpop.f32.mrf.mxu0
      %3744 = vmatprep.mubr.f32.mxu0 0.0
      %3745 = vmatmul.mubr.f32.gmra.mxu0 %v3477
      %v3746 = vpop.f32.mrf.mxu0
      %v3747 = vadd.f32 0.0, %v3746
      %v3748 = vpop.f32.mrf.mxu0
      %3749 = vmatprep.mubr.f32.mxu0 0.0
      %3750 = vmatmul.mubr.f32.gmra.mxu0 %v3479
      %v3751 = vpop.f32.mrf.mxu0
      %v3752 = vadd.f32 0.0, %v3751
      %v3753 = vpop.f32.mrf.mxu0
      %3754 = vmatprep.mubr.f32.mxu0 0.0
      %3755 = vmatmul.mubr.f32.gmra.mxu0 %v3481
      %v3756 = vpop.f32.mrf.mxu0
      %v3757 = vadd.f32 0.0, %v3756
      %v3758 = vpop.f32.mrf.mxu0
      %3759 = vmatprep.mubr.f32.mxu0 0.0
      %3760 = vmatmul.mubr.f32.gmra.mxu0 %v3483
      %v3761 = vpop.f32.mrf.mxu0
      %v3762 = vadd.f32 0.0, %v3761
      %v3763 = vpop.f32.mrf.mxu0
      %3764 = vmatprep.mubr.f32.mxu0 0.0
      %3765 = vmatmul.mubr.f32.gmra.mxu0 %v3485
      %v3766 = vpop.f32.mrf.mxu0
      %v3767 = vadd.f32 0.0, %v3766
      %v3768 = vpop.f32.mrf.mxu0
      %3769 = vmatprep.mubr.f32.mxu0 0.0
      %3770 = vmatmul.mubr.f32.gmra.mxu0 %v3487
      %v3771 = vpop.f32.mrf.mxu0
      %v3772 = vadd.f32 0.0, %v3771
      %v3773 = vpop.f32.mrf.mxu0
      %3774 = vdwg.mxu0
      %v3775 = vmul.f32 %v3624, %v1168
      %v3776 = vmul.f32 %v3626, %v1169
      %v3777 = vmul.f32 %v3737, %v1170
      %v3778 = vmul.f32 %v3630, %v1171
      %v3779 = vmul.f32 %v3632, %v1172
      %v3780 = vmul.f32 %v3742, %v1173
      %v3781 = vmul.f32 %v3636, %v1174
      %v3782 = vmul.f32 %v3638, %v1175
      %v3783 = vmul.f32 %v3747, %v1176
      %v3784 = vmul.f32 %v3642, %v1177
      %v3785 = vmul.f32 %v3644, %v1178
      %v3786 = vmul.f32 %v3752, %v1179
      %v3787 = vmul.f32 %v3648, %v1180
      %v3788 = vmul.f32 %v3650, %v1181
      %v3789 = vmul.f32 %v3757, %v1182
      %v3790 = vmul.f32 %v3654, %v1183
      %v3791 = vmul.f32 %v3656, %v1184
      %v3792 = vmul.f32 %v3762, %v1185
      %v3793 = vmul.f32 %v3660, %v1186
      %v3794 = vmul.f32 %v3662, %v1187
      %v3795 = vmul.f32 %v3767, %v1188
      %v3796 = vmul.f32 %v3666, %v1189
      %v3797 = vmul.f32 %v3668, %v1190
      %v3798 = vmul.f32 %v3772, %v1191
      %3799 = vrot.lane.b32.xlu0 %v796, 72
      %v3800 = vpop.permute.xlu0 %3799
      %3801 = vrot.lane.b32.xlu0 %v801, 72
      %v3802 = vpop.permute.xlu0 %3801
      %3803 = vrot.lane.b32.xlu0 %v1010, 72
      %v3804 = vpop.permute.xlu0 %3803
      %3805 = vrot.lane.b32.xlu0 %v1015, 72
      %v3806 = vpop.permute.xlu0 %3805
      %3807 = vrot.lane.b32.xlu0 %v1020, 72
      %v3808 = vpop.permute.xlu0 %3807
      %3809 = vrot.lane.b32.xlu0 %v1025, 72
      %v3810 = vpop.permute.xlu0 %3809
      %3811 = vrot.lane.b32.xlu0 %v1030, 72
      %v3812 = vpop.permute.xlu0 %3811
      %3813 = vrot.lane.b32.xlu0 %v1035, 72
      %v3814 = vpop.permute.xlu0 %3813
      %3815 = vrot.lane.b32.xlu0 %v1040, 72
      %v3816 = vpop.permute.xlu0 %3815
      %3817 = vrot.lane.b32.xlu0 %v1045, 72
      %v3818 = vpop.permute.xlu0 %3817
      %3819 = vrot.lane.b32.xlu0 %v1050, 72
      %v3820 = vpop.permute.xlu0 %3819
      %3821 = vrot.lane.b32.xlu0 %v1055, 72
      %v3822 = vpop.permute.xlu0 %3821
      %3823 = vrot.lane.b32.xlu0 %v1060, 72
      %v3824 = vpop.permute.xlu0 %3823
      %3825 = vrot.lane.b32.xlu0 %v1065, 72
      %v3826 = vpop.permute.xlu0 %3825
      %3827 = vrot.lane.b32.xlu0 %v1070, 72
      %v3828 = vpop.permute.xlu0 %3827
      %3829 = vrot.lane.b32.xlu0 %v1075, 72
      %v3830 = vpop.permute.xlu0 %3829
      %3831 = vrot.lane.b32.xlu0 %v1080, 72
      %v3832 = vpop.permute.xlu0 %3831
      %3833 = vrot.lane.b32.xlu0 %v1085, 72
      %v3834 = vpop.permute.xlu0 %3833
      %3835 = vrot.lane.b32.xlu0 %v1090, 72
      %v3836 = vpop.permute.xlu0 %3835
      %3837 = vrot.lane.b32.xlu0 %v1095, 72
      %v3838 = vpop.permute.xlu0 %3837
      %3839 = vrot.lane.b32.xlu0 %v1100, 72
      %v3840 = vpop.permute.xlu0 %3839
      %3841 = vrot.lane.b32.xlu0 %v1105, 72
      %v3842 = vpop.permute.xlu0 %3841
      %3843 = vrot.lane.b32.xlu0 %v1110, 72
      %v3844 = vpop.permute.xlu0 %3843
      %3845 = vrot.lane.b32.xlu0 %v1115, 72
      %v3846 = vpop.permute.xlu0 %3845
      %3847 = vrot.lane.b32.xlu0 %v1120, 72
      %v3848 = vpop.permute.xlu0 %3847
      %3849 = vrot.lane.b32.xlu0 %v1125, 72
      %v3850 = vpop.permute.xlu0 %3849
      %3851 = vrot.lane.b32.xlu0 %v1130, 72
      %v3852 = vpop.permute.xlu0 %3851
      %3853 = vrot.lane.b32.xlu0 %v1135, 72
      %v3854 = vpop.permute.xlu0 %3853
      %3855 = vrot.lane.b32.xlu0 %v1140, 72
      %v3856 = vpop.permute.xlu0 %3855
      %3857 = vrot.lane.b32.xlu0 %v1145, 72
      %v3858 = vpop.permute.xlu0 %3857
      %3859 = vrot.lane.b32.xlu0 %v1150, 72
      %v3860 = vpop.permute.xlu0 %3859
      %3861 = vrot.lane.b32.xlu0 %v1155, 72
      %v3862 = vpop.permute.xlu0 %3861
      %3863 = vrot.lane.b32.xlu0 %v1160, 72
      %v3864 = vpop.permute.xlu0 %3863
      %3865 = vrot.lane.b32.xlu0 %v1165, 72
      %v3866 = vpop.permute.xlu0 %3865
      %v3902 = vsel %vm722, %v3777, 0
      %v3905 = vsel %vm722, %v3780, 0
      %v3908 = vsel %vm722, %v3783, 0
      %v3911 = vsel %vm722, %v3786, 0
      %v3914 = vsel %vm722, %v3789, 0
      %v3917 = vsel %vm722, %v3792, 0
      %v3920 = vsel %vm722, %v3795, 0
      %v3923 = vsel %vm722, %v3798, 0
      %3925 = vmatprep.subr.mxu0 0.0
      %3926 = vmatpush1.msra.mxu0 %v3830
      %3927 = vmatprep.subr.mxu0 0.0
      %3928 = vmatpush1.msra.mxu0 %v3828
      %3929 = vmatprep.subr.mxu0 0.0
      %3930 = vmatpush1.msra.mxu0 %v3826
      %3931 = vmatprep.subr.mxu0 0.0
      %3932 = vmatpush1.msra.mxu0 %v3824
      %3933 = vmatprep.subr.mxu0 0.0
      %3934 = vmatpush1.msra.mxu0 %v3822
      %3935 = vmatprep.subr.mxu0 0.0
      %3936 = vmatpush1.msra.mxu0 %v3820
      %3937 = vmatprep.subr.mxu0 0.0
      %3938 = vmatpush1.msra.mxu0 %v3818
      %3939 = vmatprep.subr.mxu0 0.0
      %3940 = vmatpush1.msra.mxu0 %v3816
      %3941 = vmatprep.subr.mxu0 0.0
      %3942 = vmatpush1.msra.mxu0 %v3814
      %3943 = vmatprep.subr.mxu0 0.0
      %3944 = vmatpush1.msra.mxu0 %v3812
      %3945 = vmatprep.subr.mxu0 0.0
      %3946 = vmatpush1.msra.mxu0 %v3810
      %3947 = vmatprep.subr.mxu0 0.0
      %3948 = vmatpush1.msra.mxu0 %v3808
      %3949 = vmatprep.subr.mxu0 0.0
      %3950 = vmatpush1.msra.mxu0 %v3806
      %3951 = vmatprep.subr.mxu0 0.0
      %3952 = vmatpush1.msra.mxu0 %v3804
      %3953 = vmatprep.subr.mxu0 0.0
      %3954 = vmatpush1.msra.mxu0 %v3802
      %3955 = vmatprep.subr.mxu0 0.0
      %3956 = vmatpush1.msra.mxu0 %v3800
      %3957 = vmatprep.subr.mxu0 0.0
      %3958 = vmatpush2.msra.mxu0 %v3862
      %3959 = vmatprep.subr.mxu0 0.0
      %3960 = vmatpush2.msra.mxu0 %v3860
      %3961 = vmatprep.subr.mxu0 0.0
      %3962 = vmatpush2.msra.mxu0 %v3858
      %3963 = vmatprep.subr.mxu0 0.0
      %3964 = vmatpush2.msra.mxu0 %v3856
      %3965 = vmatprep.subr.mxu0 0.0
      %3966 = vmatpush2.msra.mxu0 %v3854
      %3967 = vmatprep.subr.mxu0 0.0
      %3968 = vmatpush2.msra.mxu0 %v3852
      %3969 = vmatprep.subr.mxu0 0.0
      %3970 = vmatpush2.msra.mxu0 %v3850
      %3971 = vmatprep.subr.mxu0 0.0
      %3972 = vmatpush2.msra.mxu0 %v3848
      %3973 = vmatprep.subr.mxu0 0.0
      %3974 = vmatpush2.msra.mxu0 %v3846
      %3975 = vmatprep.subr.mxu0 0.0
      %3976 = vmatpush2.msra.mxu0 %v3844
      %3977 = vmatprep.subr.mxu0 0.0
      %3978 = vmatpush2.msra.mxu0 %v3842
      %3979 = vmatprep.subr.mxu0 0.0
      %3980 = vmatpush2.msra.mxu0 %v3840
      %3981 = vmatprep.subr.mxu0 0.0
      %3982 = vmatpush2.msra.mxu0 %v3838
      %3983 = vmatprep.subr.mxu0 0.0
      %3984 = vmatpush2.msra.mxu0 %v3836
      %3985 = vmatprep.subr.mxu0 0.0
      %3986 = vmatpush2.msra.mxu0 %v3834
      %3987 = vmatprep.subr.mxu0 0.0
      %3988 = vmatpush2.msra.mxu0 %v3832
      %3989 = vmatprep.mubr.f32.mxu0 %v3776
      %3990 = vmatmul.mubr.f32.gmra.mxu0 %v3775
      %v3991 = vpop.f32.mrf.mxu0
      %v3992 = vadd.f32 0.0, %v3991
      %v3993 = vpop.f32.mrf.mxu0
      %3994 = vmatprep.mubr.f32.mxu0 %v3779
      %3995 = vmatmul.mubr.f32.gmra.mxu0 %v3778
      %v3996 = vpop.f32.mrf.mxu0
      %v3997 = vadd.f32 0.0, %v3996
      %v3998 = vpop.f32.mrf.mxu0
      %3999 = vmatprep.mubr.f32.mxu0 %v3782
      %4000 = vmatmul.mubr.f32.gmra.mxu0 %v3781
      %v4001 = vpop.f32.mrf.mxu0
      %v4002 = vadd.f32 0.0, %v4001
      %v4003 = vpop.f32.mrf.mxu0
      %4004 = vmatprep.mubr.f32.mxu0 %v3785
      %4005 = vmatmul.mubr.f32.gmra.mxu0 %v3784
      %v4006 = vpop.f32.mrf.mxu0
      %v4007 = vadd.f32 0.0, %v4006
      %v4008 = vpop.f32.mrf.mxu0
      %4009 = vmatprep.mubr.f32.mxu0 %v3788
      %4010 = vmatmul.mubr.f32.gmra.mxu0 %v3787
      %v4011 = vpop.f32.mrf.mxu0
      %v4012 = vadd.f32 0.0, %v4011
      %v4013 = vpop.f32.mrf.mxu0
      %4014 = vmatprep.mubr.f32.mxu0 %v3791
      %4015 = vmatmul.mubr.f32.gmra.mxu0 %v3790
      %v4016 = vpop.f32.mrf.mxu0
      %v4017 = vadd.f32 0.0, %v4016
      %v4018 = vpop.f32.mrf.mxu0
      %4019 = vmatprep.mubr.f32.mxu0 %v3794
      %4020 = vmatmul.mubr.f32.gmra.mxu0 %v3793
      %v4021 = vpop.f32.mrf.mxu0
      %v4022 = vadd.f32 0.0, %v4021
      %v4023 = vpop.f32.mrf.mxu0
      %4024 = vmatprep.mubr.f32.mxu0 %v3797
      %4025 = vmatmul.mubr.f32.gmra.mxu0 %v3796
      %v4026 = vpop.f32.mrf.mxu0
      %v4027 = vadd.f32 0.0, %v4026
      %v4028 = vpop.f32.mrf.mxu0
      %4029 = vdwg.mxu0
      %4030 = vmatprep.subr.mxu0 0.0
      %4031 = vmatpush1.msra.mxu0 0.0
      %4032 = vmatprep.subr.mxu0 0.0
      %4033 = vmatpush1.msra.mxu0 0.0
      %4034 = vmatprep.subr.mxu0 0.0
      %4035 = vmatpush1.msra.mxu0 0.0
      %4036 = vmatprep.subr.mxu0 0.0
      %4037 = vmatpush1.msra.mxu0 0.0
      %4038 = vmatprep.subr.mxu0 0.0
      %4039 = vmatpush1.msra.mxu0 0.0
      %4040 = vmatprep.subr.mxu0 0.0
      %4041 = vmatpush1.msra.mxu0 0.0
      %4042 = vmatprep.subr.mxu0 0.0
      %4043 = vmatpush1.msra.mxu0 0.0
      %4044 = vmatprep.subr.mxu0 0.0
      %4045 = vmatpush1.msra.mxu0 0.0
      %4046 = vmatprep.subr.mxu0 0.0
      %4047 = vmatpush1.msra.mxu0 0.0
      %4048 = vmatprep.subr.mxu0 0.0
      %4049 = vmatpush1.msra.mxu0 0.0
      %4050 = vmatprep.subr.mxu0 0.0
      %4051 = vmatpush1.msra.mxu0 0.0
      %4052 = vmatprep.subr.mxu0 0.0
      %4053 = vmatpush1.msra.mxu0 0.0
      %4054 = vmatprep.subr.mxu0 0.0
      %4055 = vmatpush1.msra.mxu0 0.0
      %4056 = vmatprep.subr.mxu0 0.0
      %4057 = vmatpush1.msra.mxu0 0.0
      %4058 = vmatprep.subr.mxu0 0.0
      %4059 = vmatpush1.msra.mxu0 %v3866
      %4060 = vmatprep.subr.mxu0 0.0
      %4061 = vmatpush1.msra.mxu0 %v3864
      %4062 = vmatprep.subr.mxu0 0.0
      %4063 = vmatpush2.msra.mxu0 0.0
      %4064 = vmatprep.subr.mxu0 0.0
      %4065 = vmatpush2.msra.mxu0 0.0
      %4066 = vmatprep.subr.mxu0 0.0
      %4067 = vmatpush2.msra.mxu0 0.0
      %4068 = vmatprep.subr.mxu0 0.0
      %4069 = vmatpush2.msra.mxu0 0.0
      %4070 = vmatprep.subr.mxu0 0.0
      %4071 = vmatpush2.msra.mxu0 0.0
      %4072 = vmatprep.subr.mxu0 0.0
      %4073 = vmatpush2.msra.mxu0 0.0
      %4074 = vmatprep.subr.mxu0 0.0
      %4075 = vmatpush2.msra.mxu0 0.0
      %4076 = vmatprep.subr.mxu0 0.0
      %4077 = vmatpush2.msra.mxu0 0.0
      %4078 = vmatprep.subr.mxu0 0.0
      %4079 = vmatpush2.msra.mxu0 0.0
      %4080 = vmatprep.subr.mxu0 0.0
      %4081 = vmatpush2.msra.mxu0 0.0
      %4082 = vmatprep.subr.mxu0 0.0
      %4083 = vmatpush2.msra.mxu0 0.0
      %4084 = vmatprep.subr.mxu0 0.0
      %4085 = vmatpush2.msra.mxu0 0.0
      %4086 = vmatprep.subr.mxu0 0.0
      %4087 = vmatpush2.msra.mxu0 0.0
      %4088 = vmatprep.subr.mxu0 0.0
      %4089 = vmatpush2.msra.mxu0 0.0
      %4090 = vmatprep.subr.mxu0 0.0
      %4091 = vmatpush2.msra.mxu0 0.0
      %4092 = vmatprep.subr.mxu0 0.0
      %4093 = vmatpush2.msra.mxu0 0.0
      %4094 = vmatprep.mubr.f32.mxu0 0.0
      %4095 = vmatmul.mubr.f32.gmra.mxu0 %v3902
      %v4096 = vpop.f32.mrf.mxu0
      %v4097 = vadd.f32 %v3992, %v4096
      %v4098 = vpop.f32.mrf.mxu0
      %4099 = vmatprep.mubr.f32.mxu0 0.0
      %4100 = vmatmul.mubr.f32.gmra.mxu0 %v3905
      %v4101 = vpop.f32.mrf.mxu0
      %v4102 = vadd.f32 %v3997, %v4101
      %v4103 = vpop.f32.mrf.mxu0
      %4104 = vmatprep.mubr.f32.mxu0 0.0
      %4105 = vmatmul.mubr.f32.gmra.mxu0 %v3908
      %v4106 = vpop.f32.mrf.mxu0
      %v4107 = vadd.f32 %v4002, %v4106
      %v4108 = vpop.f32.mrf.mxu0
      %4109 = vmatprep.mubr.f32.mxu0 0.0
      %4110 = vmatmul.mubr.f32.gmra.mxu0 %v3911
      %v4111 = vpop.f32.mrf.mxu0
      %v4112 = vadd.f32 %v4007, %v4111
      %v4113 = vpop.f32.mrf.mxu0
      %4114 = vmatprep.mubr.f32.mxu0 0.0
      %4115 = vmatmul.mubr.f32.gmra.mxu0 %v3914
      %v4116 = vpop.f32.mrf.mxu0
      %v4117 = vadd.f32 %v4012, %v4116
      %v4118 = vpop.f32.mrf.mxu0
      %4119 = vmatprep.mubr.f32.mxu0 0.0
      %4120 = vmatmul.mubr.f32.gmra.mxu0 %v3917
      %v4121 = vpop.f32.mrf.mxu0
      %v4122 = vadd.f32 %v4017, %v4121
      %v4123 = vpop.f32.mrf.mxu0
      %4124 = vmatprep.mubr.f32.mxu0 0.0
      %4125 = vmatmul.mubr.f32.gmra.mxu0 %v3920
      %v4126 = vpop.f32.mrf.mxu0
      %v4127 = vadd.f32 %v4022, %v4126
      %v4128 = vpop.f32.mrf.mxu0
      %4129 = vmatprep.mubr.f32.mxu0 0.0
      %4130 = vmatmul.mubr.f32.gmra.mxu0 %v3923
      %v4131 = vpop.f32.mrf.mxu0
      %v4132 = vadd.f32 %v4027, %v4131
      %v4133 = vpop.f32.mrf.mxu0
      %4134 = vdwg.mxu0
      %4143 = vrot.lane.b32.xlu0 %v2605, 8
      %v4144 = vpop.permute.xlu0 %4143
      %4145 = vrot.lane.b32.xlu0 %v2610, 8
      %v4146 = vpop.permute.xlu0 %4145
      %4147 = vrot.lane.b32.xlu0 %v2615, 8
      %v4148 = vpop.permute.xlu0 %4147
      %4149 = vrot.lane.b32.xlu0 %v2620, 8
      %v4150 = vpop.permute.xlu0 %4149
      %4151 = vrot.lane.b32.xlu0 %v2625, 8
      %v4152 = vpop.permute.xlu0 %4151
      %4153 = vrot.lane.b32.xlu0 %v2630, 8
      %v4154 = vpop.permute.xlu0 %4153
      %4155 = vrot.lane.b32.xlu0 %v2635, 8
      %v4156 = vpop.permute.xlu0 %4155
      %4157 = vrot.lane.b32.xlu0 %v2640, 8
      %v4158 = vpop.permute.xlu0 %4157
      %4175 = vrot.lane.b32.xlu0 %v3351, 16
      %v4176 = vpop.permute.xlu0 %4175
      %4177 = vrot.lane.b32.xlu0 %v3356, 16
      %v4178 = vpop.permute.xlu0 %4177
      %4179 = vrot.lane.b32.xlu0 %v3361, 16
      %v4180 = vpop.permute.xlu0 %4179
      %4181 = vrot.lane.b32.xlu0 %v3366, 16
      %v4182 = vpop.permute.xlu0 %4181
      %4183 = vrot.lane.b32.xlu0 %v3371, 16
      %v4184 = vpop.permute.xlu0 %4183
      %4185 = vrot.lane.b32.xlu0 %v3376, 16
      %v4186 = vpop.permute.xlu0 %4185
      %4187 = vrot.lane.b32.xlu0 %v3381, 16
      %v4188 = vpop.permute.xlu0 %4187
      %4189 = vrot.lane.b32.xlu0 %v3386, 16
      %v4190 = vpop.permute.xlu0 %4189
      %4207 = vrot.lane.b32.xlu0 %v4097, 24
      %v4208 = vpop.permute.xlu0 %4207
      %4209 = vrot.lane.b32.xlu0 %v4102, 24
      %v4210 = vpop.permute.xlu0 %4209
      %4211 = vrot.lane.b32.xlu0 %v4107, 24
      %v4212 = vpop.permute.xlu0 %4211
      %4213 = vrot.lane.b32.xlu0 %v4112, 24
      %v4214 = vpop.permute.xlu0 %4213
      %4215 = vrot.lane.b32.xlu0 %v4117, 24
      %v4216 = vpop.permute.xlu0 %4215
      %4217 = vrot.lane.b32.xlu0 %v4122, 24
      %v4218 = vpop.permute.xlu0 %4217
      %4219 = vrot.lane.b32.xlu0 %v4127, 24
      %v4220 = vpop.permute.xlu0 %4219
      %4221 = vrot.lane.b32.xlu0 %v4132, 24
      %v4222 = vpop.permute.xlu0 %4221
      %v4231 = vsel %vm1192, %v1859, %v4144
      %v4232 = vsel %vm1192, %v1864, %v4146
      %v4233 = vsel %vm1192, %v1869, %v4148
      %v4234 = vsel %vm1192, %v1874, %v4150
      %v4235 = vsel %vm1192, %v1879, %v4152
      %v4236 = vsel %vm1192, %v1884, %v4154
      %v4237 = vsel %vm1192, %v1889, %v4156
      %v4238 = vsel %vm1192, %v1894, %v4158
      %v4239 = vsel %vm722, %v4231, %v4176
      %v4240 = vsel %vm722, %v4232, %v4178
      %v4241 = vsel %vm722, %v4233, %v4180
      %v4242 = vsel %vm722, %v4234, %v4182
      %v4243 = vsel %vm722, %v4235, %v4184
      %v4244 = vsel %vm722, %v4236, %v4186
      %v4245 = vsel %vm722, %v4237, %v4188
      %v4246 = vsel %vm722, %v4238, %v4190
      %v4247 = vsel %vm846, %v4239, %v4208
      %v4248 = vsel %vm846, %v4240, %v4210
      %v4249 = vsel %vm846, %v4241, %v4212
      %v4250 = vsel %vm846, %v4242, %v4214
      %v4251 = vsel %vm846, %v4243, %v4216
      %v4252 = vsel %vm846, %v4244, %v4218
      %v4253 = vsel %vm846, %v4245, %v4220
      %v4254 = vsel %vm846, %v4246, %v4222
      %v4255 = vmul.f32 %v4247, 0.9
      %v4256 = vmul.f32 %v4248, 0.9
      %v4257 = vmul.f32 %v4249, 0.9
      %v4258 = vmul.f32 %v4250, 0.9
      %v4259 = vmul.f32 %v4251, 0.9
      %v4260 = vmul.f32 %v4252, 0.9
      %v4261 = vmul.f32 %v4253, 0.9
      %v4262 = vmul.f32 %v4254, 0.9
      %v4263 = vld [vmem:[%s10] sm:$0xff]
      %v4264 = vld [vmem:[%s10 + $0x8] sm:$0xff]
      %v4265 = vld [vmem:[%s10 + $0x10] sm:$0xff]
      %v4266 = vld [vmem:[%s10 + $0x18] sm:$0xff]
      %v4268 = vsel %vm581, %v4255, 0
      %v4271 = vsel %vm581, %v4256, 0
      %v4274 = vsel %vm581, %v4257, 0
      %v4277 = vsel %vm581, %v4258, 0
      %v4280 = vsel %vm581, %v4259, 0
      %v4283 = vsel %vm581, %v4260, 0
      %v4286 = vsel %vm581, %v4261, 0
      %v4289 = vsel %vm581, %v4262, 0
      %4291 = vmatprep.subr.mxu0 0.0
      %4292 = vmatpush1.msra.mxu0 0.0
      %4293 = vmatprep.subr.mxu0 0.0
      %4294 = vmatpush1.msra.mxu0 0.0
      %4295 = vmatprep.subr.mxu0 0.0
      %4296 = vmatpush1.msra.mxu0 0.0
      %4297 = vmatprep.subr.mxu0 0.0
      %4298 = vmatpush1.msra.mxu0 0.0
      %4299 = vmatprep.subr.mxu0 0.0
      %4300 = vmatpush1.msra.mxu0 0.0
      %4301 = vmatprep.subr.mxu0 0.0
      %4302 = vmatpush1.msra.mxu0 0.0
      %4303 = vmatprep.subr.mxu0 0.0
      %4304 = vmatpush1.msra.mxu0 0.0
      %4305 = vmatprep.subr.mxu0 0.0
      %4306 = vmatpush1.msra.mxu0 0.0
      %4307 = vmatprep.subr.mxu0 0.0
      %4308 = vmatpush1.msra.mxu0 0.0
      %4309 = vmatprep.subr.mxu0 0.0
      %4310 = vmatpush1.msra.mxu0 0.0
      %4311 = vmatprep.subr.mxu0 0.0
      %4312 = vmatpush1.msra.mxu0 0.0
      %4313 = vmatprep.subr.mxu0 0.0
      %4314 = vmatpush1.msra.mxu0 0.0
      %4315 = vmatprep.subr.mxu0 0.0
      %4316 = vmatpush1.msra.mxu0 %v4266
      %4317 = vmatprep.subr.mxu0 0.0
      %4318 = vmatpush1.msra.mxu0 %v4265
      %4319 = vmatprep.subr.mxu0 0.0
      %4320 = vmatpush1.msra.mxu0 %v4264
      %4321 = vmatprep.subr.mxu0 0.0
      %4322 = vmatpush1.msra.mxu0 %v4263
      %4323 = vmatprep.subr.mxu0 0.0
      %4324 = vmatpush2.msra.mxu0 0.0
      %4325 = vmatprep.subr.mxu0 0.0
      %4326 = vmatpush2.msra.mxu0 0.0
      %4327 = vmatprep.subr.mxu0 0.0
      %4328 = vmatpush2.msra.mxu0 0.0
      %4329 = vmatprep.subr.mxu0 0.0
      %4330 = vmatpush2.msra.mxu0 0.0
      %4331 = vmatprep.subr.mxu0 0.0
      %4332 = vmatpush2.msra.mxu0 0.0
      %4333 = vmatprep.subr.mxu0 0.0
      %4334 = vmatpush2.msra.mxu0 0.0
      %4335 = vmatprep.subr.mxu0 0.0
      %4336 = vmatpush2.msra.mxu0 0.0
      %4337 = vmatprep.subr.mxu0 0.0
      %4338 = vmatpush2.msra.mxu0 0.0
      %4339 = vmatprep.subr.mxu0 0.0
      %4340 = vmatpush2.msra.mxu0 0.0
      %4341 = vmatprep.subr.mxu0 0.0
      %4342 = vmatpush2.msra.mxu0 0.0
      %4343 = vmatprep.subr.mxu0 0.0
      %4344 = vmatpush2.msra.mxu0 0.0
      %4345 = vmatprep.subr.mxu0 0.0
      %4346 = vmatpush2.msra.mxu0 0.0
      %4347 = vmatprep.subr.mxu0 0.0
      %4348 = vmatpush2.msra.mxu0 0.0
      %4349 = vmatprep.subr.mxu0 0.0
      %4350 = vmatpush2.msra.mxu0 0.0
      %4351 = vmatprep.subr.mxu0 0.0
      %4352 = vmatpush2.msra.mxu0 0.0
      %4353 = vmatprep.subr.mxu0 0.0
      %4354 = vmatpush2.msra.mxu0 0.0
      %4355 = vmatprep.mubr.f32.mxu0 0.0
      %4356 = vmatmul.mubr.f32.gmra.mxu0 %v4268
      %v4357 = vpop.f32.mrf.mxu0
      %v4358 = vadd.f32 0.0, %v4357
      %v4359 = vpop.f32.mrf.mxu0
      %4360 = vmatprep.mubr.f32.mxu0 0.0
      %4361 = vmatmul.mubr.f32.gmra.mxu0 %v4271
      %v4362 = vpop.f32.mrf.mxu0
      %v4363 = vadd.f32 0.0, %v4362
      %v4364 = vpop.f32.mrf.mxu0
      %4365 = vmatprep.mubr.f32.mxu0 0.0
      %4366 = vmatmul.mubr.f32.gmra.mxu0 %v4274
      %v4367 = vpop.f32.mrf.mxu0
      %v4368 = vadd.f32 0.0, %v4367
      %v4369 = vpop.f32.mrf.mxu0
      %4370 = vmatprep.mubr.f32.mxu0 0.0
      %4371 = vmatmul.mubr.f32.gmra.mxu0 %v4277
      %v4372 = vpop.f32.mrf.mxu0
      %v4373 = vadd.f32 0.0, %v4372
      %v4374 = vpop.f32.mrf.mxu0
      %4375 = vmatprep.mubr.f32.mxu0 0.0
      %4376 = vmatmul.mubr.f32.gmra.mxu0 %v4280
      %v4377 = vpop.f32.mrf.mxu0
      %v4378 = vadd.f32 0.0, %v4377
      %v4379 = vpop.f32.mrf.mxu0
      %4380 = vmatprep.mubr.f32.mxu0 0.0
      %4381 = vmatmul.mubr.f32.gmra.mxu0 %v4283
      %v4382 = vpop.f32.mrf.mxu0
      %v4383 = vadd.f32 0.0, %v4382
      %v4384 = vpop.f32.mrf.mxu0
      %4385 = vmatprep.mubr.f32.mxu0 0.0
      %4386 = vmatmul.mubr.f32.gmra.mxu0 %v4286
      %v4387 = vpop.f32.mrf.mxu0
      %v4388 = vadd.f32 0.0, %v4387
      %v4389 = vpop.f32.mrf.mxu0
      %4390 = vmatprep.mubr.f32.mxu0 0.0
      %4391 = vmatmul.mubr.f32.gmra.mxu0 %v4289
      %v4392 = vpop.f32.mrf.mxu0
      %v4393 = vadd.f32 0.0, %v4392
      %v4394 = vpop.f32.mrf.mxu0
      %4395 = vdwg.mxu0
      %v4396 = vadd.f32 %v562, %v4358
      %v4397 = vadd.f32 %v563, %v4363
      %v4398 = vadd.f32 %v564, %v4368
      %v4399 = vadd.f32 %v565, %v4373
      %v4400 = vadd.f32 %v566, %v4378
      %v4401 = vadd.f32 %v567, %v4383
      %v4402 = vadd.f32 %v568, %v4388
      %v4403 = vadd.f32 %v569, %v4393
      %v4404 = vld [vmem:[%s11] sm:$0x1]
      %v4406 = vlaneseq
      %v4407 = vshrl.u32 %v4406, 7
      %v4408 = vsub.s32 0, %v4407
      %v4409 = vrot.slane %v4404, %v4408
      %v4411 = vadd.f32 %v4396, %v4409
      %v4412 = vadd.f32 %v4397, %v4409
      %v4413 = vadd.f32 %v4398, %v4409
      %v4414 = vadd.f32 %v4399, %v4409
      %v4415 = vadd.f32 %v4400, %v4409
      %v4416 = vadd.f32 %v4401, %v4409
      %v4417 = vadd.f32 %v4402, %v4409
      %v4418 = vadd.f32 %v4403, %v4409
      %v4419 = vld [vmem:[%s12] sm:$0xff]
      %v4420 = vld [vmem:[%s12 + $0x8] sm:$0xff]
      %v4421 = vld [vmem:[%s12 + $0x10] sm:$0xff]
      %v4422 = vld [vmem:[%s12 + $0x18] sm:$0xff]
      %v4423 = vld [vmem:[%s13] sm:$0x1]
      %v4425 = vlaneseq
      %v4426 = vshrl.u32 %v4425, 7
      %v4427 = vsub.s32 0, %v4426
      %v4428 = vrot.slane %v4423, %v4427
      %v4431 = vsel %vm581, %v4411, 0
      %v4434 = vsel %vm581, %v4412, 0
      %v4437 = vsel %vm581, %v4413, 0
      %v4440 = vsel %vm581, %v4414, 0
      %v4443 = vsel %vm581, %v4415, 0
      %v4446 = vsel %vm581, %v4416, 0
      %v4449 = vsel %vm581, %v4417, 0
      %v4452 = vsel %vm581, %v4418, 0
      %4454 = vmatprep.subr.mxu0 0.0
      %4455 = vmatpush1.msra.mxu0 0.0
      %4456 = vmatprep.subr.mxu0 0.0
      %4457 = vmatpush1.msra.mxu0 0.0
      %4458 = vmatprep.subr.mxu0 0.0
      %4459 = vmatpush1.msra.mxu0 0.0
      %4460 = vmatprep.subr.mxu0 0.0
      %4461 = vmatpush1.msra.mxu0 0.0
      %4462 = vmatprep.subr.mxu0 0.0
      %4463 = vmatpush1.msra.mxu0 0.0
      %4464 = vmatprep.subr.mxu0 0.0
      %4465 = vmatpush1.msra.mxu0 0.0
      %4466 = vmatprep.subr.mxu0 0.0
      %4467 = vmatpush1.msra.mxu0 0.0
      %4468 = vmatprep.subr.mxu0 0.0
      %4469 = vmatpush1.msra.mxu0 0.0
      %4470 = vmatprep.subr.mxu0 0.0
      %4471 = vmatpush1.msra.mxu0 0.0
      %4472 = vmatprep.subr.mxu0 0.0
      %4473 = vmatpush1.msra.mxu0 0.0
      %4474 = vmatprep.subr.mxu0 0.0
      %4475 = vmatpush1.msra.mxu0 0.0
      %4476 = vmatprep.subr.mxu0 0.0
      %4477 = vmatpush1.msra.mxu0 0.0
      %4478 = vmatprep.subr.mxu0 0.0
      %4479 = vmatpush1.msra.mxu0 %v4422
      %4480 = vmatprep.subr.mxu0 0.0
      %4481 = vmatpush1.msra.mxu0 %v4421
      %4482 = vmatprep.subr.mxu0 0.0
      %4483 = vmatpush1.msra.mxu0 %v4420
      %4484 = vmatprep.subr.mxu0 0.0
      %4485 = vmatpush1.msra.mxu0 %v4419
      %4486 = vmatprep.subr.mxu0 0.0
      %4487 = vmatpush2.msra.mxu0 0.0
      %4488 = vmatprep.subr.mxu0 0.0
      %4489 = vmatpush2.msra.mxu0 0.0
      %4490 = vmatprep.subr.mxu0 0.0
      %4491 = vmatpush2.msra.mxu0 0.0
      %4492 = vmatprep.subr.mxu0 0.0
      %4493 = vmatpush2.msra.mxu0 0.0
      %4494 = vmatprep.subr.mxu0 0.0
      %4495 = vmatpush2.msra.mxu0 0.0
      %4496 = vmatprep.subr.mxu0 0.0
      %4497 = vmatpush2.msra.mxu0 0.0
      %4498 = vmatprep.subr.mxu0 0.0
      %4499 = vmatpush2.msra.mxu0 0.0
      %4500 = vmatprep.subr.mxu0 0.0
      %4501 = vmatpush2.msra.mxu0 0.0
      %4502 = vmatprep.subr.mxu0 0.0
      %4503 = vmatpush2.msra.mxu0 0.0
      %4504 = vmatprep.subr.mxu0 0.0
      %4505 = vmatpush2.msra.mxu0 0.0
      %4506 = vmatprep.subr.mxu0 0.0
      %4507 = vmatpush2.msra.mxu0 0.0
      %4508 = vmatprep.subr.mxu0 0.0
      %4509 = vmatpush2.msra.mxu0 0.0
      %4510 = vmatprep.subr.mxu0 0.0
      %4511 = vmatpush2.msra.mxu0 0.0
      %4512 = vmatprep.subr.mxu0 0.0
      %4513 = vmatpush2.msra.mxu0 0.0
      %4514 = vmatprep.subr.mxu0 0.0
      %4515 = vmatpush2.msra.mxu0 0.0
      %4516 = vmatprep.subr.mxu0 0.0
      %4517 = vmatpush2.msra.mxu0 0.0
      %4518 = vmatprep.mubr.f32.mxu0 0.0
      %4519 = vmatmul.mubr.f32.gmra.mxu0 %v4431
      %v4520 = vpop.f32.mrf.mxu0
      %v4521 = vadd.f32 %v4428, %v4520
      %v4522 = vpop.f32.mrf.mxu0
      %4523 = vmatprep.mubr.f32.mxu0 0.0
      %4524 = vmatmul.mubr.f32.gmra.mxu0 %v4434
      %v4525 = vpop.f32.mrf.mxu0
      %v4526 = vadd.f32 %v4428, %v4525
      %v4527 = vpop.f32.mrf.mxu0
      %4528 = vmatprep.mubr.f32.mxu0 0.0
      %4529 = vmatmul.mubr.f32.gmra.mxu0 %v4437
      %v4530 = vpop.f32.mrf.mxu0
      %v4531 = vadd.f32 %v4428, %v4530
      %v4532 = vpop.f32.mrf.mxu0
      %4533 = vmatprep.mubr.f32.mxu0 0.0
      %4534 = vmatmul.mubr.f32.gmra.mxu0 %v4440
      %v4535 = vpop.f32.mrf.mxu0
      %v4536 = vadd.f32 %v4428, %v4535
      %v4537 = vpop.f32.mrf.mxu0
      %4538 = vmatprep.mubr.f32.mxu0 0.0
      %4539 = vmatmul.mubr.f32.gmra.mxu0 %v4443
      %v4540 = vpop.f32.mrf.mxu0
      %v4541 = vadd.f32 %v4428, %v4540
      %v4542 = vpop.f32.mrf.mxu0
      %4543 = vmatprep.mubr.f32.mxu0 0.0
      %4544 = vmatmul.mubr.f32.gmra.mxu0 %v4446
      %v4545 = vpop.f32.mrf.mxu0
      %v4546 = vadd.f32 %v4428, %v4545
      %v4547 = vpop.f32.mrf.mxu0
      %4548 = vmatprep.mubr.f32.mxu0 0.0
      %4549 = vmatmul.mubr.f32.gmra.mxu0 %v4449
      %v4550 = vpop.f32.mrf.mxu0
      %v4551 = vadd.f32 %v4428, %v4550
      %v4552 = vpop.f32.mrf.mxu0
      %4553 = vmatprep.mubr.f32.mxu0 0.0
      %4554 = vmatmul.mubr.f32.gmra.mxu0 %v4452
      %v4555 = vpop.f32.mrf.mxu0
      %v4556 = vadd.f32 %v4428, %v4555
      %v4557 = vpop.f32.mrf.mxu0
      %4558 = vdwg.mxu0
      %v4559 = vmax.f32 %v4521, 0.0
      %v4560 = vmax.f32 %v4526, 0.0
      %v4561 = vmax.f32 %v4531, 0.0
      %v4562 = vmax.f32 %v4536, 0.0
      %v4563 = vmax.f32 %v4541, 0.0
      %v4564 = vmax.f32 %v4546, 0.0
      %v4565 = vmax.f32 %v4551, 0.0
      %v4566 = vmax.f32 %v4556, 0.0
      %v4567 = vld [vmem:[%s14] sm:$0xff]
      %v4568 = vld [vmem:[%s14 + $0x8] sm:$0xff]
      %v4569 = vld [vmem:[%s14 + $0x10] sm:$0xff]
      %v4570 = vld [vmem:[%s14 + $0x18] sm:$0xff]
      %v4571 = vld [vmem:[%s14 + $0x20] sm:$0xff]
      %v4572 = vld [vmem:[%s14 + $0x28] sm:$0xff]
      %v4573 = vld [vmem:[%s14 + $0x30] sm:$0xff]
      %v4574 = vld [vmem:[%s14 + $0x38] sm:$0xff]
      %v4575 = vld [vmem:[%s15] sm:$0x1]
      %v4577 = vlaneseq
      %v4578 = vshrl.u32 %v4577, 7
      %v4579 = vsub.s32 0, %v4578
      %v4580 = vrot.slane %v4575, %v4579
      %vm4582 = vcmask 523264
      %v4584 = vsel %vm4582, %v4559, 0
      %v4587 = vsel %vm4582, %v4560, 0
      %v4590 = vsel %vm4582, %v4561, 0
      %v4593 = vsel %vm4582, %v4562, 0
      %v4596 = vsel %vm4582, %v4563, 0
      %v4599 = vsel %vm4582, %v4564, 0
      %v4602 = vsel %vm4582, %v4565, 0
      %v4605 = vsel %vm4582, %v4566, 0
      %4607 = vmatprep.subr.mxu0 0.0
      %4608 = vmatpush1.msra.mxu0 0.0
      %4609 = vmatprep.subr.mxu0 0.0
      %4610 = vmatpush1.msra.mxu0 0.0
      %4611 = vmatprep.subr.mxu0 0.0
      %4612 = vmatpush1.msra.mxu0 0.0
      %4613 = vmatprep.subr.mxu0 0.0
      %4614 = vmatpush1.msra.mxu0 0.0
      %4615 = vmatprep.subr.mxu0 0.0
      %4616 = vmatpush1.msra.mxu0 0.0
      %4617 = vmatprep.subr.mxu0 0.0
      %4618 = vmatpush1.msra.mxu0 0.0
      %4619 = vmatprep.subr.mxu0 0.0
      %4620 = vmatpush1.msra.mxu0 0.0
      %4621 = vmatprep.subr.mxu0 0.0
      %4622 = vmatpush1.msra.mxu0 0.0
      %4623 = vmatprep.subr.mxu0 0.0
      %4624 = vmatpush1.msra.mxu0 %v4574
      %4625 = vmatprep.subr.mxu0 0.0
      %4626 = vmatpush1.msra.mxu0 %v4573
      %4627 = vmatprep.subr.mxu0 0.0
      %4628 = vmatpush1.msra.mxu0 %v4572
      %4629 = vmatprep.subr.mxu0 0.0
      %4630 = vmatpush1.msra.mxu0 %v4571
      %4631 = vmatprep.subr.mxu0 0.0
      %4632 = vmatpush1.msra.mxu0 %v4570
      %4633 = vmatprep.subr.mxu0 0.0
      %4634 = vmatpush1.msra.mxu0 %v4569
      %4635 = vmatprep.subr.mxu0 0.0
      %4636 = vmatpush1.msra.mxu0 %v4568
      %4637 = vmatprep.subr.mxu0 0.0
      %4638 = vmatpush1.msra.mxu0 %v4567
      %4639 = vmatprep.subr.mxu0 0.0
      %4640 = vmatpush2.msra.mxu0 0.0
      %4641 = vmatprep.subr.mxu0 0.0
      %4642 = vmatpush2.msra.mxu0 0.0
      %4643 = vmatprep.subr.mxu0 0.0
      %4644 = vmatpush2.msra.mxu0 0.0
      %4645 = vmatprep.subr.mxu0 0.0
      %4646 = vmatpush2.msra.mxu0 0.0
      %4647 = vmatprep.subr.mxu0 0.0
      %4648 = vmatpush2.msra.mxu0 0.0
      %4649 = vmatprep.subr.mxu0 0.0
      %4650 = vmatpush2.msra.mxu0 0.0
      %4651 = vmatprep.subr.mxu0 0.0
      %4652 = vmatpush2.msra.mxu0 0.0
      %4653 = vmatprep.subr.mxu0 0.0
      %4654 = vmatpush2.msra.mxu0 0.0
      %4655 = vmatprep.subr.mxu0 0.0
      %4656 = vmatpush2.msra.mxu0 0.0
      %4657 = vmatprep.subr.mxu0 0.0
      %4658 = vmatpush2.msra.mxu0 0.0
      %4659 = vmatprep.subr.mxu0 0.0
      %4660 = vmatpush2.msra.mxu0 0.0
      %4661 = vmatprep.subr.mxu0 0.0
      %4662 = vmatpush2.msra.mxu0 0.0
      %4663 = vmatprep.subr.mxu0 0.0
      %4664 = vmatpush2.msra.mxu0 0.0
      %4665 = vmatprep.subr.mxu0 0.0
      %4666 = vmatpush2.msra.mxu0 0.0
      %4667 = vmatprep.subr.mxu0 0.0
      %4668 = vmatpush2.msra.mxu0 0.0
      %4669 = vmatprep.subr.mxu0 0.0
      %4670 = vmatpush2.msra.mxu0 0.0
      %4671 = vmatprep.mubr.f32.mxu0 0.0
      %4672 = vmatmul.mubr.f32.gmra.mxu0 %v4584
      %v4673 = vpop.f32.mrf.mxu0
      %v4674 = vadd.f32 %v4580, %v4673
      %v4675 = vpop.f32.mrf.mxu0
      %4676 = vmatprep.mubr.f32.mxu0 0.0
      %4677 = vmatmul.mubr.f32.gmra.mxu0 %v4587
      %v4678 = vpop.f32.mrf.mxu0
      %v4679 = vadd.f32 %v4580, %v4678
      %v4680 = vpop.f32.mrf.mxu0
      %4681 = vmatprep.mubr.f32.mxu0 0.0
      %4682 = vmatmul.mubr.f32.gmra.mxu0 %v4590
      %v4683 = vpop.f32.mrf.mxu0
      %v4684 = vadd.f32 %v4580, %v4683
      %v4685 = vpop.f32.mrf.mxu0
      %4686 = vmatprep.mubr.f32.mxu0 0.0
      %4687 = vmatmul.mubr.f32.gmra.mxu0 %v4593
      %v4688 = vpop.f32.mrf.mxu0
      %v4689 = vadd.f32 %v4580, %v4688
      %v4690 = vpop.f32.mrf.mxu0
      %4691 = vmatprep.mubr.f32.mxu0 0.0
      %4692 = vmatmul.mubr.f32.gmra.mxu0 %v4596
      %v4693 = vpop.f32.mrf.mxu0
      %v4694 = vadd.f32 %v4580, %v4693
      %v4695 = vpop.f32.mrf.mxu0
      %4696 = vmatprep.mubr.f32.mxu0 0.0
      %4697 = vmatmul.mubr.f32.gmra.mxu0 %v4599
      %v4698 = vpop.f32.mrf.mxu0
      %v4699 = vadd.f32 %v4580, %v4698
      %v4700 = vpop.f32.mrf.mxu0
      %4701 = vmatprep.mubr.f32.mxu0 0.0
      %4702 = vmatmul.mubr.f32.gmra.mxu0 %v4602
      %v4703 = vpop.f32.mrf.mxu0
      %v4704 = vadd.f32 %v4580, %v4703
      %v4705 = vpop.f32.mrf.mxu0
      %4706 = vmatprep.mubr.f32.mxu0 0.0
      %4707 = vmatmul.mubr.f32.gmra.mxu0 %v4605
      %v4708 = vpop.f32.mrf.mxu0
      %v4709 = vadd.f32 %v4580, %v4708
      %v4710 = vpop.f32.mrf.mxu0
      %4711 = vdwg.mxu0
      %v4712 = vmul.f32 %v4674, 1.1
      %v4713 = vmul.f32 %v4679, 1.1
      %v4714 = vmul.f32 %v4684, 1.1
      %v4715 = vmul.f32 %v4689, 1.1
      %v4716 = vmul.f32 %v4694, 1.1
      %v4717 = vmul.f32 %v4699, 1.1
      %v4718 = vmul.f32 %v4704, 1.1
      %v4719 = vmul.f32 %v4709, 1.1
      %v4720 = vadd.f32 %v4411, %v4712
      %v4721 = vadd.f32 %v4412, %v4713
      %v4722 = vadd.f32 %v4413, %v4714
      %v4723 = vadd.f32 %v4414, %v4715
      %v4724 = vadd.f32 %v4415, %v4716
      %v4725 = vadd.f32 %v4416, %v4717
      %v4726 = vadd.f32 %v4417, %v4718
      %v4727 = vadd.f32 %v4418, %v4719
      %4728 = vst.msk [vmem:[%s561] sm:$0xff] %vm581, %v4720
      %4729 = vst.msk [vmem:[%s561 + $0x8] sm:$0xff] %vm581, %v4721
      %4730 = vst.msk [vmem:[%s561 + $0x10] sm:$0xff] %vm581, %v4722
      %4731 = vst.msk [vmem:[%s561 + $0x18] sm:$0xff] %vm581, %v4723
      %4732 = vst.msk [vmem:[%s561 + $0x20] sm:$0xff] %vm581, %v4724
      %4733 = vst.msk [vmem:[%s561 + $0x28] sm:$0xff] %vm581, %v4725
      %4734 = vst.msk [vmem:[%s561 + $0x30] sm:$0xff] %vm581, %v4726
      %4735 = vst.msk [vmem:[%s561 + $0x38] sm:$0xff] %vm581, %v4727
      %p4736 = scmp.lt.s32.totalorder %s27, 1
      %s4737 = scalar_select %p4736, %s27, 1
      %s4738 = smul.addr %s4737, 8
      %s4739 = smul.addr %s4738, 8
      %s4740 = scalar_lea.vmem %s16, %s4739
      // Predicated region
      $region85: #{tpu_custom_call.1} parent=83 // pred_check
        %p4741 = pneg %p396
      $region86: #{tpu_custom_call.1} parent=83 // pred_check_branch
        %4743 = sbr.rel (%p4741) target = $region88
      $region87: #{tpu_custom_call.1} parent=83 // pred_region
        _
      $region88: #{tpu_custom_call.1} parent=83 // pred_fallthru
        _
    $region84: #{tpu_custom_call.1} parent=5 // pred_fallthru
      _
    %p4744 = scmp.le.s32.totalorder 2, %s22
    // Predicated region
    $region89: #{tpu_custom_call.1} parent=5 // pred_check
      %p4745 = pneg %p4744
    $region90: #{tpu_custom_call.1} parent=5 // pred_check_branch
      %4747 = sbr.rel (%p4745) target = $region92
    $region91: #{tpu_custom_call.1} parent=5 // pred_region
      %s4748 = ssub.s32 %s22, 2
      // Predicated region
      $region93: #{tpu_custom_call.1} parent=91 // pred_check
        %p4749 = pneg %p402
      $region94: #{tpu_custom_call.1} parent=91 // pred_check_branch
        %4751 = sbr.rel (%p4749) target = $region96
      $region95: #{tpu_custom_call.1} parent=91 // pred_region
        %p4752 = scmp.lt.s32.totalorder %s28, 1
        %s4753 = scalar_select %p4752, %s28, 1
        %s4754 = smul.addr %s4753, 8
        %s4755 = smul.addr %s4754, 8
        %s4756 = scalar_lea.vmem %s16, %s4755
      $region96: #{tpu_custom_call.1} parent=91 // pred_fallthru
        _
    $region92: #{tpu_custom_call.1} parent=5 // pred_fallthru
      _
  $region6: #{tpu_custom_call.1} parent=0 // loop_footer
    %s26 = sadd.s32 1, %s22
  $region7: #{tpu_custom_call.1} parent=0 // loop_footer_branch
    %21 = sbr.rel target = $region3
  $region8: #{tpu_custom_call.1} parent=0 // loop_exit
    _

</llo_original>
